<compile_context>
chip_gen: v6e
topology: v6e:2x2x1
jax: 0.10.0
libtpu: 0.0.40
codegen_flags: <defaults>
</compile_context>

<pallas_src>
import functools
import math

import jax
import jax.numpy as jnp
import numpy as np
from jax import lax
from jax.experimental import pallas as pl
from jax.experimental.pallas import tpu as pltpu


def _padded_head_dim(head_dim):
    return ((head_dim + 127) // 128) * 128


# ------------------------------- fused kernel ------------------------------- #

def _flash_qtatt_kernel(x_ref, t_ref, wq_ref, wkv_ref, wp_ref, bp_ref, o_ref,
                        q_scr, m_scr, l_scr, acc_scr, *, num_heads, dp):
    # x_ref:   (1, tq, C)  bf16
    # t_ref:   (1, tk, C)  bf16
    # wq_ref:  (H, C, Dp)  bf16  (pre-scaled by 1/sqrt(head_dim), zero-padded)
    # wkv_ref: (H, C, 2Dp) bf16  (K and V projection fused, zero-padded)
    # wp_ref:  (H, Dp, C)  bf16  (output proj, zero-padded rows)
    # bp_ref:  (1, C)      f32
    # o_ref:   (1, tq, C)  f32
    # q_scr:   (H, tq, Dp) bf16   m_scr/l_scr: (H, tq, 1) f32   acc_scr: (H, tq, Dp) f32
    ki = pl.program_id(2)

    @pl.when(ki == 0)
    def _init():
        x = x_ref[0]                                               # (tq, C)
        for h in range(num_heads):                                 # static; writes go to scratch
            q_scr[h] = jnp.dot(x, wq_ref[h],
                               preferred_element_type=jnp.float32
                               ).astype(jnp.bfloat16)
        m_scr[...] = jnp.full(m_scr.shape, -jnp.inf, dtype=jnp.float32)
        l_scr[...] = jnp.zeros(l_scr.shape, dtype=jnp.float32)
        acc_scr[...] = jnp.zeros(acc_scr.shape, dtype=jnp.float32)

    t = t_ref[0]                                                   # (tk, C) bf16
    for h in range(num_heads):
        # fused K/V projection for this head: (tk, C) @ (C, 2Dp) -> (tk, 2Dp)
        kv = jnp.dot(t, wkv_ref[h], preferred_element_type=jnp.float32)
        k = kv[:, :dp].astype(jnp.bfloat16)                        # lane-aligned slice
        v = kv[:, dp:].astype(jnp.bfloat16)

        # scores (tq, tk); q already carries 1/sqrt(head_dim); padded lanes add 0
        s = lax.dot_general(q_scr[h], k, (((1,), (1,)), ((), ())),
                            preferred_element_type=jnp.float32)

        m_prev = m_scr[h]                                          # (tq, 1)
        m_new = jnp.maximum(m_prev, jnp.max(s, axis=-1, keepdims=True))
        alpha = jnp.exp(m_prev - m_new)
        p = jnp.exp(s - m_new)                                     # f32 (v5e-safe)
        l_scr[h] = alpha * l_scr[h] + jnp.sum(p, axis=-1, keepdims=True)
        acc_scr[h] = alpha * acc_scr[h] + jnp.dot(
            p.astype(jnp.bfloat16), v, preferred_element_type=jnp.float32)
        m_scr[h] = m_new

    @pl.when(ki == pl.num_programs(2) - 1)
    def _finalize():
        tq = o_ref.shape[1]
        c = o_ref.shape[2]
        out = jnp.zeros((tq, c), jnp.float32)
        for h in range(num_heads):
            inv_l = pl.reciprocal(l_scr[h], approx=True)           # EUP slot
            msg_h = (acc_scr[h] * inv_l).astype(jnp.bfloat16)      # (tq, Dp)
            # per-head output projection accumulate == .view(B,-1,C) @ proj
            out = out + jnp.dot(msg_h, wp_ref[h],
                                preferred_element_type=jnp.float32)
        o_ref[0] = out + bp_ref[...]                               # + proj bias


# ------------------------- one-time parameter prep -------------------------- #

def prepare_params(params, num_heads):
    """Hoisted out of the per-call path: head-major, padded, scaled, bf16 weights."""
    C = params["wq"].shape[0]
    head_dim = C // num_heads
    dp = _padded_head_dim(head_dim)
    scale = 1.0 / math.sqrt(head_dim)

    def per_head_in(w, s=1.0):
        # (Cout, Cin) -> (H, Cin, Dp): [h, c, d] = w[h*Dh + d, c] * s, zero-padded d
        w_h = w.astype(jnp.float32).reshape(num_heads, head_dim, C)
        w_h = jnp.transpose(w_h, (0, 2, 1)) * jnp.float32(s)
        w_h = jnp.pad(w_h, ((0, 0), (0, 0), (0, dp - head_dim)))
        return w_h.astype(jnp.bfloat16)

    wq_h = per_head_in(params["wq"], scale)          # scale folded in, pre-bf16
    wk_h = per_head_in(params["wk"])
    wv_h = per_head_in(params["wv"])
    wkv_h = jnp.concatenate([wk_h, wv_h], axis=-1)   # (H, C, 2Dp)

    # proj: (Cout, Cin=C) -> (H, Dp, C): [h, d, o] = wproj[o, h*Dh + d], zero-padded d
    wp_h = params["wproj"].astype(jnp.float32).reshape(C, num_heads, head_dim)
    wp_h = jnp.transpose(wp_h, (1, 2, 0))
    wp_h = jnp.pad(wp_h, ((0, 0), (0, dp - head_dim), (0, 0))).astype(jnp.bfloat16)

    bp = params["bproj"].reshape(1, C).astype(jnp.float32)
    return {"wq": wq_h, "wkv": wkv_h, "wp": wp_h, "bp": bp,
            "dp": dp, "head_dim": head_dim}


# --------------------------------- wrapper ---------------------------------- #

def quadtree_attention_forward(x, target, H, W, prepped, num_heads,
                               H1=None, W1=None, *, block_q=128, block_k=128):
    """QuadtreeAttention.forward with attn_type='B', scale=1, qkv_bias=False.

    block_q / block_k: default 128; halve on v7x if VMEM-pressured (64 MiB VMEM).
    """
    del H, W, H1, W1     # spatial dims only matter for the scale>1 pyramid path
    B, N, C = x.shape
    M = target.shape[1]
    dp = prepped["dp"]
    assert C == num_heads * prepped["head_dim"]

    tq = min(block_q, N)
    tk = min(block_k, M)
    assert N % tq == 0 and M % tk == 0, "TODO(synk): pad ragged N/M tiles"
    assert (tq % 8 == 0 or tq == N) and (tk % 8 == 0 or tk == M)

    # halve input DMA bytes; MXU runs at bf16 rate
    x = x.astype(jnp.bfloat16)
    target = target.astype(jnp.bfloat16)

    nq, nk = N // tq, M // tk
    kernel = functools.partial(_flash_qtatt_kernel, num_heads=num_heads, dp=dp)

    return pl.pallas_call(
        kernel,
        out_shape=jax.ShapeDtypeStruct((B, N, C), jnp.float32),
        grid=(B, nq, nk),
        in_specs=[
            pl.BlockSpec((1, tq, C), lambda b, qi, ki: (b, qi, 0)),          # x
            pl.BlockSpec((1, tk, C), lambda b, qi, ki: (b, ki, 0)),          # target
            pl.BlockSpec((num_heads, C, dp), lambda b, qi, ki: (0, 0, 0)),   # wq (scaled)
            pl.BlockSpec((num_heads, C, 2 * dp), lambda b, qi, ki: (0, 0, 0)),  # wkv
            pl.BlockSpec((num_heads, dp, C), lambda b, qi, ki: (0, 0, 0)),   # wproj
            pl.BlockSpec((1, C), lambda b, qi, ki: (0, 0)),                  # bproj
        ],
        out_specs=pl.BlockSpec((1, tq, C), lambda b, qi, ki: (b, qi, 0)),
        scratch_shapes=[
            pltpu.VMEM((num_heads, tq, dp), jnp.bfloat16),   # q (head-major)
            pltpu.VMEM((num_heads, tq, 1), jnp.float32),     # running max
            pltpu.VMEM((num_heads, tq, 1), jnp.float32),     # running sum
            pltpu.VMEM((num_heads, tq, dp), jnp.float32),    # output accumulator
        ],
        compiler_params=pltpu.CompilerParams(
            dimension_semantics=("parallel", "parallel", "arbitrary"),
            vmem_limit_bytes=32 * 1024 * 1024,
        ),
    )(x, target, prepped["wq"], prepped["wkv"], prepped["wp"], prepped["bp"])


# --------------------------------- reference -------------------------------- #

def reference_forward(x, target, params, num_heads):
    B, N, C = x.shape
    Dh = C // num_heads
    q = jnp.einsum("bnc,oc->bno", x, params["wq"])
    k = jnp.einsum("bnc,oc->bno", target, params["wk"])
    v = jnp.einsum("bnc,oc->bno", target, params["wv"])
    qh = q.reshape(B, N, num_heads, Dh)
    kh = k.reshape(B, -1, num_heads, Dh)
    vh = v.reshape(B, -1, num_heads, Dh)
    s = jnp.einsum("blhd,bshd->blsh", qh, kh) / jnp.sqrt(jnp.float32(Dh))
    a = jax.nn.softmax(s, axis=2)
    msg = jnp.einsum("blsh,bshd->blhd", a, vh).reshape(B, N, C)
    return jnp.einsum("bnc,oc->bno", msg, params["wproj"]) + params["bproj"]


# ----------------------------------- main ------------------------------------ #

def _trunc_normal(key, shape, std=0.02):
    return jax.random.truncated_normal(key, -2.0, 2.0, shape, jnp.float32) * std


if __name__ == "__main__":
    # small shapes consistent with the module (dim=32, 8x8 tokens, 4 heads)
    B, C, H, W = 2, 32, 8, 8
    num_heads = 4
    N = H * W

    key = jax.random.PRNGKey(0)
    k_x, k_t, k_wq, k_wk, k_wv, k_wp = jax.random.split(key, 6)

    x = jax.random.normal(k_x, (B, N, C), jnp.float32)
    target = jax.random.normal(k_t, (B, N, C), jnp.float32)

    # trunc_normal(std=0.02) weights, zero bias; conv weights (C,C,1,1) stored
    # squeezed as (Cout, Cin)
    params = {
        "wq": _trunc_normal(k_wq, (C, C)),
        "wk": _trunc_normal(k_wk, (C, C)),
        "wv": _trunc_normal(k_wv, (C, C)),
        "wproj": _trunc_normal(k_wp, (C, C)),
        "bproj": jnp.zeros((C,), jnp.float32),
    }

    # one-time weight re-layout (head-major, padded, scaled, bf16)
    prepped = prepare_params(params, num_heads)

    # small tiles here so the multi-step flash (online-softmax) path is exercised:
    # grid = (B=2, nq=2, nk=2)
    out = quadtree_attention_forward(x, target, H, W, prepped, num_heads,
                                     block_q=32, block_k=32)
    out = jax.block_until_ready(out)

    ref = reference_forward(x, target, params, num_heads)
    # tolerance relaxed: bf16 MXU operands everywhere + approx softmax reciprocal
    np.testing.assert_allclose(np.asarray(out), np.asarray(ref),
                               rtol=5e-2, atol=2e-3)

    assert out.shape == (B, N, C)
    print("KERNEL_OK")
</pallas_src>

<mosaic_0001>
module attributes {stable_mosaic.version = 11 : i64} {
  func.func @_flash_qtatt_kernel(%arg0: i32, %arg1: i32, %arg2: i32, %arg3: memref<1x32x32xbf16, #tpu.memory_space<vmem>>, %arg4: memref<1x32x32xbf16, #tpu.memory_space<vmem>>, %arg5: memref<4x32x128xbf16, #tpu.memory_space<vmem>>, %arg6: memref<4x32x256xbf16, #tpu.memory_space<vmem>>, %arg7: memref<4x128x32xbf16, #tpu.memory_space<vmem>>, %arg8: memref<1x32xf32, #tpu.memory_space<vmem>>, %arg9: memref<1x32x32xf32, #tpu.memory_space<vmem>>, %arg10: memref<4x32x128xbf16, #tpu.memory_space<vmem>>, %arg11: memref<4x32x1xf32, #tpu.memory_space<vmem>>, %arg12: memref<4x32x1xf32, #tpu.memory_space<vmem>>, %arg13: memref<4x32x128xf32, #tpu.memory_space<vmem>>) attributes {dimension_semantics = [#tpu.dimension_semantics<parallel>, #tpu.dimension_semantics<parallel>, #tpu.dimension_semantics<arbitrary>], iteration_bounds = array<i64: 2, 2, 2>, scalar_prefetch = 0 : i64, scratch_operands = 4 : i64, tpu.core_type = #tpu.core_type<tc>, window_params = [{transform_indices = @transform_0, window_bounds = array<i64: 1, 32, 32>}, {transform_indices = @transform_1, window_bounds = array<i64: 1, 32, 32>}, {pipeline_mode = #tpu.pipeline_mode<synchronous>, transform_indices = @transform_2, window_bounds = array<i64: 4, 32, 128>}, {pipeline_mode = #tpu.pipeline_mode<synchronous>, transform_indices = @transform_3, window_bounds = array<i64: 4, 32, 256>}, {pipeline_mode = #tpu.pipeline_mode<synchronous>, transform_indices = @transform_4, window_bounds = array<i64: 4, 128, 32>}, {pipeline_mode = #tpu.pipeline_mode<synchronous>, transform_indices = @transform_5, window_bounds = array<i64: 1, 32>}, {transform_indices = @transform_6, window_bounds = array<i64: 1, 32, 32>}]} {
    %c0_i32 = arith.constant 0 : i32
    %0 = arith.cmpi eq, %arg2, %c0_i32 : i32
    %1 = arith.extui %0 : i1 to i32
    %c0_i32_0 = arith.constant 0 : i32
    %2 = arith.cmpi ne, %1, %c0_i32_0 : i32
    scf.if %2 {
      %c0_116 = arith.constant 0 : index
      %c0_117 = arith.constant 0 : index
      %c0_118 = arith.constant 0 : index
      %176 = vector.load %arg3[%c0_116, %c0_117, %c0_118] : memref<1x32x32xbf16, #tpu.memory_space<vmem>>, vector<1x32x32xbf16>
      %177 = vector.shape_cast %176 : vector<1x32x32xbf16> to vector<32x32xbf16>
      %c0_119 = arith.constant 0 : index
      %c0_120 = arith.constant 0 : index
      %c0_121 = arith.constant 0 : index
      %178 = vector.load %arg5[%c0_119, %c0_120, %c0_121] : memref<4x32x128xbf16, #tpu.memory_space<vmem>>, vector<1x32x128xbf16>
      %179 = vector.shape_cast %178 : vector<1x32x128xbf16> to vector<32x128xbf16>
      %cst_122 = arith.constant dense<0.000000e+00> : vector<32x128xf32>
      %180 = tpu.matmul %177, %179, %cst_122 {dimension_numbers = #tpu.dot_dimension_numbers<[1], [0], [0], [1], [0, 0, 1, 1], [], []>} : vector<32x32xbf16>, vector<32x128xbf16>, vector<32x128xf32> -> vector<32x128xf32>
      %181 = arith.truncf %180 : vector<32x128xf32> to vector<32x128xbf16>
      %c0_123 = arith.constant 0 : index
      %c0_124 = arith.constant 0 : index
      %c0_125 = arith.constant 0 : index
      %182 = vector.load %arg10[%c0_123, %c0_124, %c0_125] : memref<4x32x128xbf16, #tpu.memory_space<vmem>>, vector<1x32x128xbf16>
      %183 = vector.shape_cast %182 : vector<1x32x128xbf16> to vector<32x128xbf16>
      %184 = vector.shape_cast %181 : vector<32x128xbf16> to vector<1x32x128xbf16>
      tpu.vector_store %arg10[%c0_123, %c0_124, %c0_125], %184 {strides = array<i32>} : memref<4x32x128xbf16, #tpu.memory_space<vmem>>, vector<1x32x128xbf16>,
      %c1_126 = arith.constant 1 : index
      %c0_127 = arith.constant 0 : index
      %c0_128 = arith.constant 0 : index
      %185 = vector.load %arg5[%c1_126, %c0_127, %c0_128] : memref<4x32x128xbf16, #tpu.memory_space<vmem>>, vector<1x32x128xbf16>
      %186 = vector.shape_cast %185 : vector<1x32x128xbf16> to vector<32x128xbf16>
      %cst_129 = arith.constant dense<0.000000e+00> : vector<32x128xf32>
      %187 = tpu.matmul %177, %186, %cst_129 {dimension_numbers = #tpu.dot_dimension_numbers<[1], [0], [0], [1], [0, 0, 1, 1], [], []>} : vector<32x32xbf16>, vector<32x128xbf16>, vector<32x128xf32> -> vector<32x128xf32>
      %188 = arith.truncf %187 : vector<32x128xf32> to vector<32x128xbf16>
      %c1_130 = arith.constant 1 : index
      %c0_131 = arith.constant 0 : index
      %c0_132 = arith.constant 0 : index
      %189 = vector.load %arg10[%c1_130, %c0_131, %c0_132] : memref<4x32x128xbf16, #tpu.memory_space<vmem>>, vector<1x32x128xbf16>
      %190 = vector.shape_cast %189 : vector<1x32x128xbf16> to vector<32x128xbf16>
      %191 = vector.shape_cast %188 : vector<32x128xbf16> to vector<1x32x128xbf16>
      tpu.vector_store %arg10[%c1_130, %c0_131, %c0_132], %191 {strides = array<i32>} : memref<4x32x128xbf16, #tpu.memory_space<vmem>>, vector<1x32x128xbf16>,
      %c2_133 = arith.constant 2 : index
      %c0_134 = arith.constant 0 : index
      %c0_135 = arith.constant 0 : index
      %192 = vector.load %arg5[%c2_133, %c0_134, %c0_135] : memref<4x32x128xbf16, #tpu.memory_space<vmem>>, vector<1x32x128xbf16>
      %193 = vector.shape_cast %192 : vector<1x32x128xbf16> to vector<32x128xbf16>
      %cst_136 = arith.constant dense<0.000000e+00> : vector<32x128xf32>
      %194 = tpu.matmul %177, %193, %cst_136 {dimension_numbers = #tpu.dot_dimension_numbers<[1], [0], [0], [1], [0, 0, 1, 1], [], []>} : vector<32x32xbf16>, vector<32x128xbf16>, vector<32x128xf32> -> vector<32x128xf32>
      %195 = arith.truncf %194 : vector<32x128xf32> to vector<32x128xbf16>
      %c2_137 = arith.constant 2 : index
      %c0_138 = arith.constant 0 : index
      %c0_139 = arith.constant 0 : index
      %196 = vector.load %arg10[%c2_137, %c0_138, %c0_139] : memref<4x32x128xbf16, #tpu.memory_space<vmem>>, vector<1x32x128xbf16>
      %197 = vector.shape_cast %196 : vector<1x32x128xbf16> to vector<32x128xbf16>
      %198 = vector.shape_cast %195 : vector<32x128xbf16> to vector<1x32x128xbf16>
      tpu.vector_store %arg10[%c2_137, %c0_138, %c0_139], %198 {strides = array<i32>} : memref<4x32x128xbf16, #tpu.memory_space<vmem>>, vector<1x32x128xbf16>,
      %c3_140 = arith.constant 3 : index
      %c0_141 = arith.constant 0 : index
      %c0_142 = arith.constant 0 : index
      %199 = vector.load %arg5[%c3_140, %c0_141, %c0_142] : memref<4x32x128xbf16, #tpu.memory_space<vmem>>, vector<1x32x128xbf16>
      %200 = vector.shape_cast %199 : vector<1x32x128xbf16> to vector<32x128xbf16>
      %cst_143 = arith.constant dense<0.000000e+00> : vector<32x128xf32>
      %201 = tpu.matmul %177, %200, %cst_143 {dimension_numbers = #tpu.dot_dimension_numbers<[1], [0], [0], [1], [0, 0, 1, 1], [], []>} : vector<32x32xbf16>, vector<32x128xbf16>, vector<32x128xf32> -> vector<32x128xf32>
      %202 = arith.truncf %201 : vector<32x128xf32> to vector<32x128xbf16>
      %c3_144 = arith.constant 3 : index
      %c0_145 = arith.constant 0 : index
      %c0_146 = arith.constant 0 : index
      %203 = vector.load %arg10[%c3_144, %c0_145, %c0_146] : memref<4x32x128xbf16, #tpu.memory_space<vmem>>, vector<1x32x128xbf16>
      %204 = vector.shape_cast %203 : vector<1x32x128xbf16> to vector<32x128xbf16>
      %205 = vector.shape_cast %202 : vector<32x128xbf16> to vector<1x32x128xbf16>
      tpu.vector_store %arg10[%c3_144, %c0_145, %c0_146], %205 {strides = array<i32>} : memref<4x32x128xbf16, #tpu.memory_space<vmem>>, vector<1x32x128xbf16>,
      %cst_147 = arith.constant 0xFF800000 : f32
      %206 = vector.broadcast %cst_147 : f32 to vector<4x32x1xf32>
      %c0_148 = arith.constant 0 : index
      %c0_149 = arith.constant 0 : index
      %c0_150 = arith.constant 0 : index
      %207 = vector.load %arg11[%c0_148, %c0_149, %c0_150] : memref<4x32x1xf32, #tpu.memory_space<vmem>>, vector<4x32x1xf32>
      tpu.vector_store %arg11[%c0_148, %c0_149, %c0_150], %206 {strides = array<i32>} : memref<4x32x1xf32, #tpu.memory_space<vmem>>, vector<4x32x1xf32>,
      %cst_151 = arith.constant 0.000000e+00 : f32
      %208 = vector.broadcast %cst_151 : f32 to vector<4x32x1xf32>
      %c0_152 = arith.constant 0 : index
      %c0_153 = arith.constant 0 : index
      %c0_154 = arith.constant 0 : index
      %209 = vector.load %arg12[%c0_152, %c0_153, %c0_154] : memref<4x32x1xf32, #tpu.memory_space<vmem>>, vector<4x32x1xf32>
      tpu.vector_store %arg12[%c0_152, %c0_153, %c0_154], %208 {strides = array<i32>} : memref<4x32x1xf32, #tpu.memory_space<vmem>>, vector<4x32x1xf32>,
      %cst_155 = arith.constant 0.000000e+00 : f32
      %210 = vector.broadcast %cst_155 : f32 to vector<4x32x128xf32>
      %c0_156 = arith.constant 0 : index
      %c0_157 = arith.constant 0 : index
      %c0_158 = arith.constant 0 : index
      %211 = vector.load %arg13[%c0_156, %c0_157, %c0_158] : memref<4x32x128xf32, #tpu.memory_space<vmem>>, vector<4x32x128xf32>
      tpu.vector_store %arg13[%c0_156, %c0_157, %c0_158], %210 {strides = array<i32>} : memref<4x32x128xf32, #tpu.memory_space<vmem>>, vector<4x32x128xf32>,
    } else {
    }
    %c0 = arith.constant 0 : index
    %c0_1 = arith.constant 0 : index
    %c0_2 = arith.constant 0 : index
    %3 = vector.load %arg4[%c0, %c0_1, %c0_2] : memref<1x32x32xbf16, #tpu.memory_space<vmem>>, vector<1x32x32xbf16>
    %4 = vector.shape_cast %3 : vector<1x32x32xbf16> to vector<32x32xbf16>
    %c0_3 = arith.constant 0 : index
    %c0_4 = arith.constant 0 : index
    %c0_5 = arith.constant 0 : index
    %5 = vector.load %arg6[%c0_3, %c0_4, %c0_5] : memref<4x32x256xbf16, #tpu.memory_space<vmem>>, vector<1x32x256xbf16>
    %6 = vector.shape_cast %5 : vector<1x32x256xbf16> to vector<32x256xbf16>
    %cst = arith.constant dense<0.000000e+00> : vector<32x256xf32>
    %7 = tpu.matmul %4, %6, %cst {dimension_numbers = #tpu.dot_dimension_numbers<[1], [0], [0], [1], [0, 0, 1, 1], [], []>} : vector<32x32xbf16>, vector<32x256xbf16>, vector<32x256xf32> -> vector<32x256xf32>
    %8 = vector.extract_strided_slice %7 {offsets = [0, 0], sizes = [32, 128], strides = [1, 1]} : vector<32x256xf32> to vector<32x128xf32>
    %9 = arith.truncf %8 : vector<32x128xf32> to vector<32x128xbf16>
    %10 = vector.extract_strided_slice %7 {offsets = [0, 128], sizes = [32, 128], strides = [1, 1]} : vector<32x256xf32> to vector<32x128xf32>
    %11 = arith.truncf %10 : vector<32x128xf32> to vector<32x128xbf16>
    %c0_6 = arith.constant 0 : index
    %c0_7 = arith.constant 0 : index
    %c0_8 = arith.constant 0 : index
    %12 = vector.load %arg10[%c0_6, %c0_7, %c0_8] : memref<4x32x128xbf16, #tpu.memory_space<vmem>>, vector<1x32x128xbf16>
    %13 = vector.shape_cast %12 : vector<1x32x128xbf16> to vector<32x128xbf16>
    %cst_9 = arith.constant dense<0.000000e+00> : vector<32x32xf32>
    %14 = tpu.matmul %13, %9, %cst_9 {dimension_numbers = #tpu.dot_dimension_numbers<[1], [1], [0], [0], [0, 0, 1, 0], [], []>} : vector<32x128xbf16>, vector<32x128xbf16>, vector<32x32xf32> -> vector<32x32xf32>
    %c0_10 = arith.constant 0 : index
    %c0_11 = arith.constant 0 : index
    %c0_12 = arith.constant 0 : index
    %15 = vector.load %arg11[%c0_10, %c0_11, %c0_12] : memref<4x32x1xf32, #tpu.memory_space<vmem>>, vector<1x32x1xf32>
    %16 = vector.shape_cast %15 : vector<1x32x1xf32> to vector<32x1xf32>
    %cst_13 = arith.constant dense<0xFF800000> : vector<32xf32>
    %17 = vector.multi_reduction <maximumf>, %14, %cst_13 [1] : vector<32x32xf32> to vector<32xf32>
    %18 = vector.shape_cast %17 : vector<32xf32> to vector<32x1xf32>
    %19 = arith.maximumf %16, %18 : vector<32x1xf32>
    %20 = arith.subf %16, %19 : vector<32x1xf32>
    %21 = math.exp %20 : vector<32x1xf32>
    %22 = vector.broadcast %19 : vector<32x1xf32> to vector<32x32xf32>
    %23 = arith.subf %14, %22 : vector<32x32xf32>
    %24 = math.exp %23 : vector<32x32xf32>
    %c0_14 = arith.constant 0 : index
    %c0_15 = arith.constant 0 : index
    %c0_16 = arith.constant 0 : index
    %25 = vector.load %arg12[%c0_14, %c0_15, %c0_16] : memref<4x32x1xf32, #tpu.memory_space<vmem>>, vector<1x32x1xf32>
    %26 = vector.shape_cast %25 : vector<1x32x1xf32> to vector<32x1xf32>
    %27 = arith.mulf %21, %26 : vector<32x1xf32>
    %cst_17 = arith.constant dense<0.000000e+00> : vector<32xf32>
    %28 = vector.multi_reduction <add>, %24, %cst_17 [1] : vector<32x32xf32> to vector<32xf32>
    %29 = vector.shape_cast %28 : vector<32xf32> to vector<32x1xf32>
    %30 = arith.addf %27, %29 : vector<32x1xf32>
    %c0_18 = arith.constant 0 : index
    %c0_19 = arith.constant 0 : index
    %c0_20 = arith.constant 0 : index
    %31 = vector.load %arg12[%c0_18, %c0_19, %c0_20] : memref<4x32x1xf32, #tpu.memory_space<vmem>>, vector<1x32x1xf32>
    %32 = vector.shape_cast %31 : vector<1x32x1xf32> to vector<32x1xf32>
    %33 = vector.shape_cast %30 : vector<32x1xf32> to vector<1x32x1xf32>
    tpu.vector_store %arg12[%c0_18, %c0_19, %c0_20], %33 {strides = array<i32>} : memref<4x32x1xf32, #tpu.memory_space<vmem>>, vector<1x32x1xf32>,
    %c0_21 = arith.constant 0 : index
    %c0_22 = arith.constant 0 : index
    %c0_23 = arith.constant 0 : index
    %34 = vector.load %arg13[%c0_21, %c0_22, %c0_23] : memref<4x32x128xf32, #tpu.memory_space<vmem>>, vector<1x32x128xf32>
    %35 = vector.shape_cast %34 : vector<1x32x128xf32> to vector<32x128xf32>
    %36 = vector.broadcast %21 : vector<32x1xf32> to vector<32x128xf32>
    %37 = arith.mulf %36, %35 : vector<32x128xf32>
    %38 = arith.truncf %24 : vector<32x32xf32> to vector<32x32xbf16>
    %cst_24 = arith.constant dense<0.000000e+00> : vector<32x128xf32>
    %39 = tpu.matmul %38, %11, %cst_24 {dimension_numbers = #tpu.dot_dimension_numbers<[1], [0], [0], [1], [0, 0, 1, 1], [], []>} : vector<32x32xbf16>, vector<32x128xbf16>, vector<32x128xf32> -> vector<32x128xf32>
    %40 = arith.addf %37, %39 : vector<32x128xf32>
    %c0_25 = arith.constant 0 : index
    %c0_26 = arith.constant 0 : index
    %c0_27 = arith.constant 0 : index
    %41 = vector.load %arg13[%c0_25, %c0_26, %c0_27] : memref<4x32x128xf32, #tpu.memory_space<vmem>>, vector<1x32x128xf32>
    %42 = vector.shape_cast %41 : vector<1x32x128xf32> to vector<32x128xf32>
    %43 = vector.shape_cast %40 : vector<32x128xf32> to vector<1x32x128xf32>
    tpu.vector_store %arg13[%c0_25, %c0_26, %c0_27], %43 {strides = array<i32>} : memref<4x32x128xf32, #tpu.memory_space<vmem>>, vector<1x32x128xf32>,
    %c0_28 = arith.constant 0 : index
    %c0_29 = arith.constant 0 : index
    %c0_30 = arith.constant 0 : index
    %44 = vector.load %arg11[%c0_28, %c0_29, %c0_30] : memref<4x32x1xf32, #tpu.memory_space<vmem>>, vector<1x32x1xf32>
    %45 = vector.shape_cast %44 : vector<1x32x1xf32> to vector<32x1xf32>
    %46 = vector.shape_cast %19 : vector<32x1xf32> to vector<1x32x1xf32>
    tpu.vector_store %arg11[%c0_28, %c0_29, %c0_30], %46 {strides = array<i32>} : memref<4x32x1xf32, #tpu.memory_space<vmem>>, vector<1x32x1xf32>,
    %c1 = arith.constant 1 : index
    %c0_31 = arith.constant 0 : index
    %c0_32 = arith.constant 0 : index
    %47 = vector.load %arg6[%c1, %c0_31, %c0_32] : memref<4x32x256xbf16, #tpu.memory_space<vmem>>, vector<1x32x256xbf16>
    %48 = vector.shape_cast %47 : vector<1x32x256xbf16> to vector<32x256xbf16>
    %cst_33 = arith.constant dense<0.000000e+00> : vector<32x256xf32>
    %49 = tpu.matmul %4, %48, %cst_33 {dimension_numbers = #tpu.dot_dimension_numbers<[1], [0], [0], [1], [0, 0, 1, 1], [], []>} : vector<32x32xbf16>, vector<32x256xbf16>, vector<32x256xf32> -> vector<32x256xf32>
    %50 = vector.extract_strided_slice %49 {offsets = [0, 0], sizes = [32, 128], strides = [1, 1]} : vector<32x256xf32> to vector<32x128xf32>
    %51 = arith.truncf %50 : vector<32x128xf32> to vector<32x128xbf16>
    %52 = vector.extract_strided_slice %49 {offsets = [0, 128], sizes = [32, 128], strides = [1, 1]} : vector<32x256xf32> to vector<32x128xf32>
    %53 = arith.truncf %52 : vector<32x128xf32> to vector<32x128xbf16>
    %c1_34 = arith.constant 1 : index
    %c0_35 = arith.constant 0 : index
    %c0_36 = arith.constant 0 : index
    %54 = vector.load %arg10[%c1_34, %c0_35, %c0_36] : memref<4x32x128xbf16, #tpu.memory_space<vmem>>, vector<1x32x128xbf16>
    %55 = vector.shape_cast %54 : vector<1x32x128xbf16> to vector<32x128xbf16>
    %cst_37 = arith.constant dense<0.000000e+00> : vector<32x32xf32>
    %56 = tpu.matmul %55, %51, %cst_37 {dimension_numbers = #tpu.dot_dimension_numbers<[1], [1], [0], [0], [0, 0, 1, 0], [], []>} : vector<32x128xbf16>, vector<32x128xbf16>, vector<32x32xf32> -> vector<32x32xf32>
    %c1_38 = arith.constant 1 : index
    %c0_39 = arith.constant 0 : index
    %c0_40 = arith.constant 0 : index
    %57 = vector.load %arg11[%c1_38, %c0_39, %c0_40] : memref<4x32x1xf32, #tpu.memory_space<vmem>>, vector<1x32x1xf32>
    %58 = vector.shape_cast %57 : vector<1x32x1xf32> to vector<32x1xf32>
    %cst_41 = arith.constant dense<0xFF800000> : vector<32xf32>
    %59 = vector.multi_reduction <maximumf>, %56, %cst_41 [1] : vector<32x32xf32> to vector<32xf32>
    %60 = vector.shape_cast %59 : vector<32xf32> to vector<32x1xf32>
    %61 = arith.maximumf %58, %60 : vector<32x1xf32>
    %62 = arith.subf %58, %61 : vector<32x1xf32>
    %63 = math.exp %62 : vector<32x1xf32>
    %64 = vector.broadcast %61 : vector<32x1xf32> to vector<32x32xf32>
    %65 = arith.subf %56, %64 : vector<32x32xf32>
    %66 = math.exp %65 : vector<32x32xf32>
    %c1_42 = arith.constant 1 : index
    %c0_43 = arith.constant 0 : index
    %c0_44 = arith.constant 0 : index
    %67 = vector.load %arg12[%c1_42, %c0_43, %c0_44] : memref<4x32x1xf32, #tpu.memory_space<vmem>>, vector<1x32x1xf32>
    %68 = vector.shape_cast %67 : vector<1x32x1xf32> to vector<32x1xf32>
    %69 = arith.mulf %63, %68 : vector<32x1xf32>
    %cst_45 = arith.constant dense<0.000000e+00> : vector<32xf32>
    %70 = vector.multi_reduction <add>, %66, %cst_45 [1] : vector<32x32xf32> to vector<32xf32>
    %71 = vector.shape_cast %70 : vector<32xf32> to vector<32x1xf32>
    %72 = arith.addf %69, %71 : vector<32x1xf32>
    %c1_46 = arith.constant 1 : index
    %c0_47 = arith.constant 0 : index
    %c0_48 = arith.constant 0 : index
    %73 = vector.load %arg12[%c1_46, %c0_47, %c0_48] : memref<4x32x1xf32, #tpu.memory_space<vmem>>, vector<1x32x1xf32>
    %74 = vector.shape_cast %73 : vector<1x32x1xf32> to vector<32x1xf32>
    %75 = vector.shape_cast %72 : vector<32x1xf32> to vector<1x32x1xf32>
    tpu.vector_store %arg12[%c1_46, %c0_47, %c0_48], %75 {strides = array<i32>} : memref<4x32x1xf32, #tpu.memory_space<vmem>>, vector<1x32x1xf32>,
    %c1_49 = arith.constant 1 : index
    %c0_50 = arith.constant 0 : index
    %c0_51 = arith.constant 0 : index
    %76 = vector.load %arg13[%c1_49, %c0_50, %c0_51] : memref<4x32x128xf32, #tpu.memory_space<vmem>>, vector<1x32x128xf32>
    %77 = vector.shape_cast %76 : vector<1x32x128xf32> to vector<32x128xf32>
    %78 = vector.broadcast %63 : vector<32x1xf32> to vector<32x128xf32>
    %79 = arith.mulf %78, %77 : vector<32x128xf32>
    %80 = arith.truncf %66 : vector<32x32xf32> to vector<32x32xbf16>
    %cst_52 = arith.constant dense<0.000000e+00> : vector<32x128xf32>
    %81 = tpu.matmul %80, %53, %cst_52 {dimension_numbers = #tpu.dot_dimension_numbers<[1], [0], [0], [1], [0, 0, 1, 1], [], []>} : vector<32x32xbf16>, vector<32x128xbf16>, vector<32x128xf32> -> vector<32x128xf32>
    %82 = arith.addf %79, %81 : vector<32x128xf32>
    %c1_53 = arith.constant 1 : index
    %c0_54 = arith.constant 0 : index
    %c0_55 = arith.constant 0 : index
    %83 = vector.load %arg13[%c1_53, %c0_54, %c0_55] : memref<4x32x128xf32, #tpu.memory_space<vmem>>, vector<1x32x128xf32>
    %84 = vector.shape_cast %83 : vector<1x32x128xf32> to vector<32x128xf32>
    %85 = vector.shape_cast %82 : vector<32x128xf32> to vector<1x32x128xf32>
    tpu.vector_store %arg13[%c1_53, %c0_54, %c0_55], %85 {strides = array<i32>} : memref<4x32x128xf32, #tpu.memory_space<vmem>>, vector<1x32x128xf32>,
    %c1_56 = arith.constant 1 : index
    %c0_57 = arith.constant 0 : index
    %c0_58 = arith.constant 0 : index
    %86 = vector.load %arg11[%c1_56, %c0_57, %c0_58] : memref<4x32x1xf32, #tpu.memory_space<vmem>>, vector<1x32x1xf32>
    %87 = vector.shape_cast %86 : vector<1x32x1xf32> to vector<32x1xf32>
    %88 = vector.shape_cast %61 : vector<32x1xf32> to vector<1x32x1xf32>
    tpu.vector_store %arg11[%c1_56, %c0_57, %c0_58], %88 {strides = array<i32>} : memref<4x32x1xf32, #tpu.memory_space<vmem>>, vector<1x32x1xf32>,
    %c2 = arith.constant 2 : index
    %c0_59 = arith.constant 0 : index
    %c0_60 = arith.constant 0 : index
    %89 = vector.load %arg6[%c2, %c0_59, %c0_60] : memref<4x32x256xbf16, #tpu.memory_space<vmem>>, vector<1x32x256xbf16>
    %90 = vector.shape_cast %89 : vector<1x32x256xbf16> to vector<32x256xbf16>
    %cst_61 = arith.constant dense<0.000000e+00> : vector<32x256xf32>
    %91 = tpu.matmul %4, %90, %cst_61 {dimension_numbers = #tpu.dot_dimension_numbers<[1], [0], [0], [1], [0, 0, 1, 1], [], []>} : vector<32x32xbf16>, vector<32x256xbf16>, vector<32x256xf32> -> vector<32x256xf32>
    %92 = vector.extract_strided_slice %91 {offsets = [0, 0], sizes = [32, 128], strides = [1, 1]} : vector<32x256xf32> to vector<32x128xf32>
    %93 = arith.truncf %92 : vector<32x128xf32> to vector<32x128xbf16>
    %94 = vector.extract_strided_slice %91 {offsets = [0, 128], sizes = [32, 128], strides = [1, 1]} : vector<32x256xf32> to vector<32x128xf32>
    %95 = arith.truncf %94 : vector<32x128xf32> to vector<32x128xbf16>
    %c2_62 = arith.constant 2 : index
    %c0_63 = arith.constant 0 : index
    %c0_64 = arith.constant 0 : index
    %96 = vector.load %arg10[%c2_62, %c0_63, %c0_64] : memref<4x32x128xbf16, #tpu.memory_space<vmem>>, vector<1x32x128xbf16>
    %97 = vector.shape_cast %96 : vector<1x32x128xbf16> to vector<32x128xbf16>
    %cst_65 = arith.constant dense<0.000000e+00> : vector<32x32xf32>
    %98 = tpu.matmul %97, %93, %cst_65 {dimension_numbers = #tpu.dot_dimension_numbers<[1], [1], [0], [0], [0, 0, 1, 0], [], []>} : vector<32x128xbf16>, vector<32x128xbf16>, vector<32x32xf32> -> vector<32x32xf32>
    %c2_66 = arith.constant 2 : index
    %c0_67 = arith.constant 0 : index
    %c0_68 = arith.constant 0 : index
    %99 = vector.load %arg11[%c2_66, %c0_67, %c0_68] : memref<4x32x1xf32, #tpu.memory_space<vmem>>, vector<1x32x1xf32>
    %100 = vector.shape_cast %99 : vector<1x32x1xf32> to vector<32x1xf32>
    %cst_69 = arith.constant dense<0xFF800000> : vector<32xf32>
    %101 = vector.multi_reduction <maximumf>, %98, %cst_69 [1] : vector<32x32xf32> to vector<32xf32>
    %102 = vector.shape_cast %101 : vector<32xf32> to vector<32x1xf32>
    %103 = arith.maximumf %100, %102 : vector<32x1xf32>
    %104 = arith.subf %100, %103 : vector<32x1xf32>
    %105 = math.exp %104 : vector<32x1xf32>
    %106 = vector.broadcast %103 : vector<32x1xf32> to vector<32x32xf32>
    %107 = arith.subf %98, %106 : vector<32x32xf32>
    %108 = math.exp %107 : vector<32x32xf32>
    %c2_70 = arith.constant 2 : index
    %c0_71 = arith.constant 0 : index
    %c0_72 = arith.constant 0 : index
    %109 = vector.load %arg12[%c2_70, %c0_71, %c0_72] : memref<4x32x1xf32, #tpu.memory_space<vmem>>, vector<1x32x1xf32>
    %110 = vector.shape_cast %109 : vector<1x32x1xf32> to vector<32x1xf32>
    %111 = arith.mulf %105, %110 : vector<32x1xf32>
    %cst_73 = arith.constant dense<0.000000e+00> : vector<32xf32>
    %112 = vector.multi_reduction <add>, %108, %cst_73 [1] : vector<32x32xf32> to vector<32xf32>
    %113 = vector.shape_cast %112 : vector<32xf32> to vector<32x1xf32>
    %114 = arith.addf %111, %113 : vector<32x1xf32>
    %c2_74 = arith.constant 2 : index
    %c0_75 = arith.constant 0 : index
    %c0_76 = arith.constant 0 : index
    %115 = vector.load %arg12[%c2_74, %c0_75, %c0_76] : memref<4x32x1xf32, #tpu.memory_space<vmem>>, vector<1x32x1xf32>
    %116 = vector.shape_cast %115 : vector<1x32x1xf32> to vector<32x1xf32>
    %117 = vector.shape_cast %114 : vector<32x1xf32> to vector<1x32x1xf32>
    tpu.vector_store %arg12[%c2_74, %c0_75, %c0_76], %117 {strides = array<i32>} : memref<4x32x1xf32, #tpu.memory_space<vmem>>, vector<1x32x1xf32>,
    %c2_77 = arith.constant 2 : index
    %c0_78 = arith.constant 0 : index
    %c0_79 = arith.constant 0 : index
    %118 = vector.load %arg13[%c2_77, %c0_78, %c0_79] : memref<4x32x128xf32, #tpu.memory_space<vmem>>, vector<1x32x128xf32>
    %119 = vector.shape_cast %118 : vector<1x32x128xf32> to vector<32x128xf32>
    %120 = vector.broadcast %105 : vector<32x1xf32> to vector<32x128xf32>
    %121 = arith.mulf %120, %119 : vector<32x128xf32>
    %122 = arith.truncf %108 : vector<32x32xf32> to vector<32x32xbf16>
    %cst_80 = arith.constant dense<0.000000e+00> : vector<32x128xf32>
    %123 = tpu.matmul %122, %95, %cst_80 {dimension_numbers = #tpu.dot_dimension_numbers<[1], [0], [0], [1], [0, 0, 1, 1], [], []>} : vector<32x32xbf16>, vector<32x128xbf16>, vector<32x128xf32> -> vector<32x128xf32>
    %124 = arith.addf %121, %123 : vector<32x128xf32>
    %c2_81 = arith.constant 2 : index
    %c0_82 = arith.constant 0 : index
    %c0_83 = arith.constant 0 : index
    %125 = vector.load %arg13[%c2_81, %c0_82, %c0_83] : memref<4x32x128xf32, #tpu.memory_space<vmem>>, vector<1x32x128xf32>
    %126 = vector.shape_cast %125 : vector<1x32x128xf32> to vector<32x128xf32>
    %127 = vector.shape_cast %124 : vector<32x128xf32> to vector<1x32x128xf32>
    tpu.vector_store %arg13[%c2_81, %c0_82, %c0_83], %127 {strides = array<i32>} : memref<4x32x128xf32, #tpu.memory_space<vmem>>, vector<1x32x128xf32>,
    %c2_84 = arith.constant 2 : index
    %c0_85 = arith.constant 0 : index
    %c0_86 = arith.constant 0 : index
    %128 = vector.load %arg11[%c2_84, %c0_85, %c0_86] : memref<4x32x1xf32, #tpu.memory_space<vmem>>, vector<1x32x1xf32>
    %129 = vector.shape_cast %128 : vector<1x32x1xf32> to vector<32x1xf32>
    %130 = vector.shape_cast %103 : vector<32x1xf32> to vector<1x32x1xf32>
    tpu.vector_store %arg11[%c2_84, %c0_85, %c0_86], %130 {strides = array<i32>} : memref<4x32x1xf32, #tpu.memory_space<vmem>>, vector<1x32x1xf32>,
    %c3 = arith.constant 3 : index
    %c0_87 = arith.constant 0 : index
    %c0_88 = arith.constant 0 : index
    %131 = vector.load %arg6[%c3, %c0_87, %c0_88] : memref<4x32x256xbf16, #tpu.memory_space<vmem>>, vector<1x32x256xbf16>
    %132 = vector.shape_cast %131 : vector<1x32x256xbf16> to vector<32x256xbf16>
    %cst_89 = arith.constant dense<0.000000e+00> : vector<32x256xf32>
    %133 = tpu.matmul %4, %132, %cst_89 {dimension_numbers = #tpu.dot_dimension_numbers<[1], [0], [0], [1], [0, 0, 1, 1], [], []>} : vector<32x32xbf16>, vector<32x256xbf16>, vector<32x256xf32> -> vector<32x256xf32>
    %134 = vector.extract_strided_slice %133 {offsets = [0, 0], sizes = [32, 128], strides = [1, 1]} : vector<32x256xf32> to vector<32x128xf32>
    %135 = arith.truncf %134 : vector<32x128xf32> to vector<32x128xbf16>
    %136 = vector.extract_strided_slice %133 {offsets = [0, 128], sizes = [32, 128], strides = [1, 1]} : vector<32x256xf32> to vector<32x128xf32>
    %137 = arith.truncf %136 : vector<32x128xf32> to vector<32x128xbf16>
    %c3_90 = arith.constant 3 : index
    %c0_91 = arith.constant 0 : index
    %c0_92 = arith.constant 0 : index
    %138 = vector.load %arg10[%c3_90, %c0_91, %c0_92] : memref<4x32x128xbf16, #tpu.memory_space<vmem>>, vector<1x32x128xbf16>
    %139 = vector.shape_cast %138 : vector<1x32x128xbf16> to vector<32x128xbf16>
    %cst_93 = arith.constant dense<0.000000e+00> : vector<32x32xf32>
    %140 = tpu.matmul %139, %135, %cst_93 {dimension_numbers = #tpu.dot_dimension_numbers<[1], [1], [0], [0], [0, 0, 1, 0], [], []>} : vector<32x128xbf16>, vector<32x128xbf16>, vector<32x32xf32> -> vector<32x32xf32>
    %c3_94 = arith.constant 3 : index
    %c0_95 = arith.constant 0 : index
    %c0_96 = arith.constant 0 : index
    %141 = vector.load %arg11[%c3_94, %c0_95, %c0_96] : memref<4x32x1xf32, #tpu.memory_space<vmem>>, vector<1x32x1xf32>
    %142 = vector.shape_cast %141 : vector<1x32x1xf32> to vector<32x1xf32>
    %cst_97 = arith.constant dense<0xFF800000> : vector<32xf32>
    %143 = vector.multi_reduction <maximumf>, %140, %cst_97 [1] : vector<32x32xf32> to vector<32xf32>
    %144 = vector.shape_cast %143 : vector<32xf32> to vector<32x1xf32>
    %145 = arith.maximumf %142, %144 : vector<32x1xf32>
    %146 = arith.subf %142, %145 : vector<32x1xf32>
    %147 = math.exp %146 : vector<32x1xf32>
    %148 = vector.broadcast %145 : vector<32x1xf32> to vector<32x32xf32>
    %149 = arith.subf %140, %148 : vector<32x32xf32>
    %150 = math.exp %149 : vector<32x32xf32>
    %c3_98 = arith.constant 3 : index
    %c0_99 = arith.constant 0 : index
    %c0_100 = arith.constant 0 : index
    %151 = vector.load %arg12[%c3_98, %c0_99, %c0_100] : memref<4x32x1xf32, #tpu.memory_space<vmem>>, vector<1x32x1xf32>
    %152 = vector.shape_cast %151 : vector<1x32x1xf32> to vector<32x1xf32>
    %153 = arith.mulf %147, %152 : vector<32x1xf32>
    %cst_101 = arith.constant dense<0.000000e+00> : vector<32xf32>
    %154 = vector.multi_reduction <add>, %150, %cst_101 [1] : vector<32x32xf32> to vector<32xf32>
    %155 = vector.shape_cast %154 : vector<32xf32> to vector<32x1xf32>
    %156 = arith.addf %153, %155 : vector<32x1xf32>
    %c3_102 = arith.constant 3 : index
    %c0_103 = arith.constant 0 : index
    %c0_104 = arith.constant 0 : index
    %157 = vector.load %arg12[%c3_102, %c0_103, %c0_104] : memref<4x32x1xf32, #tpu.memory_space<vmem>>, vector<1x32x1xf32>
    %158 = vector.shape_cast %157 : vector<1x32x1xf32> to vector<32x1xf32>
    %159 = vector.shape_cast %156 : vector<32x1xf32> to vector<1x32x1xf32>
    tpu.vector_store %arg12[%c3_102, %c0_103, %c0_104], %159 {strides = array<i32>} : memref<4x32x1xf32, #tpu.memory_space<vmem>>, vector<1x32x1xf32>,
    %c3_105 = arith.constant 3 : index
    %c0_106 = arith.constant 0 : index
    %c0_107 = arith.constant 0 : index
    %160 = vector.load %arg13[%c3_105, %c0_106, %c0_107] : memref<4x32x128xf32, #tpu.memory_space<vmem>>, vector<1x32x128xf32>
    %161 = vector.shape_cast %160 : vector<1x32x128xf32> to vector<32x128xf32>
    %162 = vector.broadcast %147 : vector<32x1xf32> to vector<32x128xf32>
    %163 = arith.mulf %162, %161 : vector<32x128xf32>
    %164 = arith.truncf %150 : vector<32x32xf32> to vector<32x32xbf16>
    %cst_108 = arith.constant dense<0.000000e+00> : vector<32x128xf32>
    %165 = tpu.matmul %164, %137, %cst_108 {dimension_numbers = #tpu.dot_dimension_numbers<[1], [0], [0], [1], [0, 0, 1, 1], [], []>} : vector<32x32xbf16>, vector<32x128xbf16>, vector<32x128xf32> -> vector<32x128xf32>
    %166 = arith.addf %163, %165 : vector<32x128xf32>
    %c3_109 = arith.constant 3 : index
    %c0_110 = arith.constant 0 : index
    %c0_111 = arith.constant 0 : index
    %167 = vector.load %arg13[%c3_109, %c0_110, %c0_111] : memref<4x32x128xf32, #tpu.memory_space<vmem>>, vector<1x32x128xf32>
    %168 = vector.shape_cast %167 : vector<1x32x128xf32> to vector<32x128xf32>
    %169 = vector.shape_cast %166 : vector<32x128xf32> to vector<1x32x128xf32>
    tpu.vector_store %arg13[%c3_109, %c0_110, %c0_111], %169 {strides = array<i32>} : memref<4x32x128xf32, #tpu.memory_space<vmem>>, vector<1x32x128xf32>,
    %c3_112 = arith.constant 3 : index
    %c0_113 = arith.constant 0 : index
    %c0_114 = arith.constant 0 : index
    %170 = vector.load %arg11[%c3_112, %c0_113, %c0_114] : memref<4x32x1xf32, #tpu.memory_space<vmem>>, vector<1x32x1xf32>
    %171 = vector.shape_cast %170 : vector<1x32x1xf32> to vector<32x1xf32>
    %172 = vector.shape_cast %145 : vector<32x1xf32> to vector<1x32x1xf32>
    tpu.vector_store %arg11[%c3_112, %c0_113, %c0_114], %172 {strides = array<i32>} : memref<4x32x1xf32, #tpu.memory_space<vmem>>, vector<1x32x1xf32>,
    %c1_i32 = arith.constant 1 : i32
    %173 = arith.cmpi eq, %arg2, %c1_i32 : i32
    %174 = arith.extui %173 : i1 to i32
    %c0_i32_115 = arith.constant 0 : i32
    %175 = arith.cmpi ne, %174, %c0_i32_115 : i32
    scf.if %175 {
      %cst_116 = arith.constant 0.000000e+00 : f32
      %176 = vector.broadcast %cst_116 : f32 to vector<32x32xf32>
      %c0_117 = arith.constant 0 : index
      %c0_118 = arith.constant 0 : index
      %c0_119 = arith.constant 0 : index
      %177 = vector.load %arg12[%c0_117, %c0_118, %c0_119] : memref<4x32x1xf32, #tpu.memory_space<vmem>>, vector<1x32x1xf32>
      %178 = vector.shape_cast %177 : vector<1x32x1xf32> to vector<32x1xf32>
      %179 = tpu.reciprocal %178 {approx = true} : vector<32x1xf32> -> vector<32x1xf32>
      %c0_120 = arith.constant 0 : index
      %c0_121 = arith.constant 0 : index
      %c0_122 = arith.constant 0 : index
      %180 = vector.load %arg13[%c0_120, %c0_121, %c0_122] : memref<4x32x128xf32, #tpu.memory_space<vmem>>, vector<1x32x128xf32>
      %181 = vector.shape_cast %180 : vector<1x32x128xf32> to vector<32x128xf32>
      %182 = vector.broadcast %179 : vector<32x1xf32> to vector<32x128xf32>
      %183 = arith.mulf %181, %182 : vector<32x128xf32>
      %184 = arith.truncf %183 : vector<32x128xf32> to vector<32x128xbf16>
      %c0_123 = arith.constant 0 : index
      %c0_124 = arith.constant 0 : index
      %c0_125 = arith.constant 0 : index
      %185 = vector.load %arg7[%c0_123, %c0_124, %c0_125] : memref<4x128x32xbf16, #tpu.memory_space<vmem>>, vector<1x128x32xbf16>
      %186 = vector.shape_cast %185 : vector<1x128x32xbf16> to vector<128x32xbf16>
      %cst_126 = arith.constant dense<0.000000e+00> : vector<32x32xf32>
      %187 = tpu.matmul %184, %186, %cst_126 {dimension_numbers = #tpu.dot_dimension_numbers<[1], [0], [0], [1], [0, 0, 1, 1], [], []>} : vector<32x128xbf16>, vector<128x32xbf16>, vector<32x32xf32> -> vector<32x32xf32>
      %188 = arith.addf %176, %187 : vector<32x32xf32>
      %c1_127 = arith.constant 1 : index
      %c0_128 = arith.constant 0 : index
      %c0_129 = arith.constant 0 : index
      %189 = vector.load %arg12[%c1_127, %c0_128, %c0_129] : memref<4x32x1xf32, #tpu.memory_space<vmem>>, vector<1x32x1xf32>
      %190 = vector.shape_cast %189 : vector<1x32x1xf32> to vector<32x1xf32>
      %191 = tpu.reciprocal %190 {approx = true} : vector<32x1xf32> -> vector<32x1xf32>
      %c1_130 = arith.constant 1 : index
      %c0_131 = arith.constant 0 : index
      %c0_132 = arith.constant 0 : index
      %192 = vector.load %arg13[%c1_130, %c0_131, %c0_132] : memref<4x32x128xf32, #tpu.memory_space<vmem>>, vector<1x32x128xf32>
      %193 = vector.shape_cast %192 : vector<1x32x128xf32> to vector<32x128xf32>
      %194 = vector.broadcast %191 : vector<32x1xf32> to vector<32x128xf32>
      %195 = arith.mulf %193, %194 : vector<32x128xf32>
      %196 = arith.truncf %195 : vector<32x128xf32> to vector<32x128xbf16>
      %c1_133 = arith.constant 1 : index
      %c0_134 = arith.constant 0 : index
      %c0_135 = arith.constant 0 : index
      %197 = vector.load %arg7[%c1_133, %c0_134, %c0_135] : memref<4x128x32xbf16, #tpu.memory_space<vmem>>, vector<1x128x32xbf16>
      %198 = vector.shape_cast %197 : vector<1x128x32xbf16> to vector<128x32xbf16>
      %cst_136 = arith.constant dense<0.000000e+00> : vector<32x32xf32>
      %199 = tpu.matmul %196, %198, %cst_136 {dimension_numbers = #tpu.dot_dimension_numbers<[1], [0], [0], [1], [0, 0, 1, 1], [], []>} : vector<32x128xbf16>, vector<128x32xbf16>, vector<32x32xf32> -> vector<32x32xf32>
      %200 = arith.addf %188, %199 : vector<32x32xf32>
      %c2_137 = arith.constant 2 : index
      %c0_138 = arith.constant 0 : index
      %c0_139 = arith.constant 0 : index
      %201 = vector.load %arg12[%c2_137, %c0_138, %c0_139] : memref<4x32x1xf32, #tpu.memory_space<vmem>>, vector<1x32x1xf32>
      %202 = vector.shape_cast %201 : vector<1x32x1xf32> to vector<32x1xf32>
      %203 = tpu.reciprocal %202 {approx = true} : vector<32x1xf32> -> vector<32x1xf32>
      %c2_140 = arith.constant 2 : index
      %c0_141 = arith.constant 0 : index
      %c0_142 = arith.constant 0 : index
      %204 = vector.load %arg13[%c2_140, %c0_141, %c0_142] : memref<4x32x128xf32, #tpu.memory_space<vmem>>, vector<1x32x128xf32>
      %205 = vector.shape_cast %204 : vector<1x32x128xf32> to vector<32x128xf32>
      %206 = vector.broadcast %203 : vector<32x1xf32> to vector<32x128xf32>
      %207 = arith.mulf %205, %206 : vector<32x128xf32>
      %208 = arith.truncf %207 : vector<32x128xf32> to vector<32x128xbf16>
      %c2_143 = arith.constant 2 : index
      %c0_144 = arith.constant 0 : index
      %c0_145 = arith.constant 0 : index
      %209 = vector.load %arg7[%c2_143, %c0_144, %c0_145] : memref<4x128x32xbf16, #tpu.memory_space<vmem>>, vector<1x128x32xbf16>
      %210 = vector.shape_cast %209 : vector<1x128x32xbf16> to vector<128x32xbf16>
      %cst_146 = arith.constant dense<0.000000e+00> : vector<32x32xf32>
      %211 = tpu.matmul %208, %210, %cst_146 {dimension_numbers = #tpu.dot_dimension_numbers<[1], [0], [0], [1], [0, 0, 1, 1], [], []>} : vector<32x128xbf16>, vector<128x32xbf16>, vector<32x32xf32> -> vector<32x32xf32>
      %212 = arith.addf %200, %211 : vector<32x32xf32>
      %c3_147 = arith.constant 3 : index
      %c0_148 = arith.constant 0 : index
      %c0_149 = arith.constant 0 : index
      %213 = vector.load %arg12[%c3_147, %c0_148, %c0_149] : memref<4x32x1xf32, #tpu.memory_space<vmem>>, vector<1x32x1xf32>
      %214 = vector.shape_cast %213 : vector<1x32x1xf32> to vector<32x1xf32>
      %215 = tpu.reciprocal %214 {approx = true} : vector<32x1xf32> -> vector<32x1xf32>
      %c3_150 = arith.constant 3 : index
      %c0_151 = arith.constant 0 : index
      %c0_152 = arith.constant 0 : index
      %216 = vector.load %arg13[%c3_150, %c0_151, %c0_152] : memref<4x32x128xf32, #tpu.memory_space<vmem>>, vector<1x32x128xf32>
      %217 = vector.shape_cast %216 : vector<1x32x128xf32> to vector<32x128xf32>
      %218 = vector.broadcast %215 : vector<32x1xf32> to vector<32x128xf32>
      %219 = arith.mulf %217, %218 : vector<32x128xf32>
      %220 = arith.truncf %219 : vector<32x128xf32> to vector<32x128xbf16>
      %c3_153 = arith.constant 3 : index
      %c0_154 = arith.constant 0 : index
      %c0_155 = arith.constant 0 : index
      %221 = vector.load %arg7[%c3_153, %c0_154, %c0_155] : memref<4x128x32xbf16, #tpu.memory_space<vmem>>, vector<1x128x32xbf16>
      %222 = vector.shape_cast %221 : vector<1x128x32xbf16> to vector<128x32xbf16>
      %cst_156 = arith.constant dense<0.000000e+00> : vector<32x32xf32>
      %223 = tpu.matmul %220, %222, %cst_156 {dimension_numbers = #tpu.dot_dimension_numbers<[1], [0], [0], [1], [0, 0, 1, 1], [], []>} : vector<32x128xbf16>, vector<128x32xbf16>, vector<32x32xf32> -> vector<32x32xf32>
      %224 = arith.addf %212, %223 : vector<32x32xf32>
      %c0_157 = arith.constant 0 : index
      %c0_158 = arith.constant 0 : index
      %225 = vector.load %arg8[%c0_157, %c0_158] : memref<1x32xf32, #tpu.memory_space<vmem>>, vector<1x32xf32>
      %226 = vector.broadcast %225 : vector<1x32xf32> to vector<32x32xf32>
      %227 = arith.addf %224, %226 : vector<32x32xf32>
      %c0_159 = arith.constant 0 : index
      %c0_160 = arith.constant 0 : index
      %c0_161 = arith.constant 0 : index
      %228 = vector.load %arg9[%c0_159, %c0_160, %c0_161] : memref<1x32x32xf32, #tpu.memory_space<vmem>>, vector<1x32x32xf32>
      %229 = vector.shape_cast %228 : vector<1x32x32xf32> to vector<32x32xf32>
      %230 = vector.shape_cast %227 : vector<32x32xf32> to vector<1x32x32xf32>
      tpu.vector_store %arg9[%c0_159, %c0_160, %c0_161], %230 {strides = array<i32>} : memref<1x32x32xf32, #tpu.memory_space<vmem>>, vector<1x32x32xf32>,
    } else {
    }
    return
  }
  func.func @transform_0(%arg0: i32, %arg1: i32, %arg2: i32) -> (i32, i32, i32) {
    %c0_i32 = arith.constant 0 : i32
    %c0_i32_0 = arith.constant 0 : i32
    return %arg0, %arg1, %c0_i32 : i32, i32, i32
  }
  func.func @transform_1(%arg0: i32, %arg1: i32, %arg2: i32) -> (i32, i32, i32) {
    %c0_i32 = arith.constant 0 : i32
    %c0_i32_0 = arith.constant 0 : i32
    return %arg0, %arg2, %c0_i32 : i32, i32, i32
  }
  func.func @transform_2(%arg0: i32, %arg1: i32, %arg2: i32) -> (i32, i32, i32) {
    %c0_i32 = arith.constant 0 : i32
    %c0_i32_0 = arith.constant 0 : i32
    %c0_i32_1 = arith.constant 0 : i32
    %c0_i32_2 = arith.constant 0 : i32
    return %c0_i32, %c0_i32_0, %c0_i32_1 : i32, i32, i32
  }
  func.func @transform_3(%arg0: i32, %arg1: i32, %arg2: i32) -> (i32, i32, i32) {
    %c0_i32 = arith.constant 0 : i32
    %c0_i32_0 = arith.constant 0 : i32
    %c0_i32_1 = arith.constant 0 : i32
    %c0_i32_2 = arith.constant 0 : i32
    return %c0_i32, %c0_i32_0, %c0_i32_1 : i32, i32, i32
  }
  func.func @transform_4(%arg0: i32, %arg1: i32, %arg2: i32) -> (i32, i32, i32) {
    %c0_i32 = arith.constant 0 : i32
    %c0_i32_0 = arith.constant 0 : i32
    %c0_i32_1 = arith.constant 0 : i32
    %c0_i32_2 = arith.constant 0 : i32
    return %c0_i32, %c0_i32_0, %c0_i32_1 : i32, i32, i32
  }
  func.func @transform_5(%arg0: i32, %arg1: i32, %arg2: i32) -> (i32, i32) {
    %c0_i32 = arith.constant 0 : i32
    %c0_i32_0 = arith.constant 0 : i32
    %c0_i32_1 = arith.constant 0 : i32
    return %c0_i32, %c0_i32_0 : i32, i32
  }
  func.func @transform_6(%arg0: i32, %arg1: i32, %arg2: i32) -> (i32, i32, i32) {
    %c0_i32 = arith.constant 0 : i32
    %c0_i32_0 = arith.constant 0 : i32
    return %arg0, %arg1, %c0_i32 : i32, i32, i32
  }
}

</mosaic_0001>

<llo_original>
// kernel: tpu_custom_call.1
$region0: #{tpu_custom_call.1}
  #allocation0 [shape = 'u32[]', space=smem, size = 0x4, offset = 0x4, fixed_abs, tag = 'smem constant byte address 0x4 - core index']
  #allocation1 [shape = 'u32[144,128]{1,0:T(1,128)}', space=vmem, size = 0x12000, scoped, tag = 'internal scratch']
  #allocation2 [shape = 'bf16[4,32,128]{2,1,0:T(8,128)(2,1)}', space=vmem, size = 0x8000, scoped, tag = 'scratch operand']
  #allocation3 [shape = 'f32[4,32,1]{2,1,0:T(8,128)}', space=vmem, size = 0x10000, scoped, tag = 'scratch operand']
  #allocation4 [shape = 'f32[4,32,1]{2,1,0:T(8,128)}', space=vmem, size = 0x10000, scoped, tag = 'scratch operand']
  #allocation5 [shape = 'f32[4,32,128]{2,1,0:T(8,128)}', space=vmem, size = 0x10000, scoped, tag = 'scratch operand']
  %s0 = inlined_call_operand.vmem [shape: bf16[2,64,32], index: 0, kind: input, shape index: {}]
  %s1 = inlined_call_operand.vmem [shape: bf16[2,64,32], index: 1, kind: input, shape index: {}]
  %s2 = inlined_call_operand.vmem [shape: bf16[4,32,128], index: 2, kind: input, shape index: {}]
  %s3 = inlined_call_operand.vmem [shape: bf16[4,32,256], index: 3, kind: input, shape index: {}]
  %s4 = inlined_call_operand.vmem [shape: bf16[4,128,32], index: 4, kind: input, shape index: {}]
  %s5 = inlined_call_operand.vmem [shape: f32[1,32], index: 5, kind: input, shape index: {}]
  %s6 = inlined_call_operand.vmem [shape: f32[2,64,32], index: 6, kind: output, shape index: {}]
  %s7 = sld [smem:[#allocation0]]
  $region65: #{tpu_custom_call.1} parent=0
    _
  %s9 = ssub.s32 1, %s7
  %s10 = scalar_select 0, %s9, %s7
  loop: start=0, step=1, limit=10
  $region2: #{tpu_custom_call.1} parent=0 // loop_pre_header
    _
  $region3: #{tpu_custom_call.1} parent=0 // loop_header
    %s12 = sphi 0, %s16
    %p13 = scmp.ge.s32.totalorder %s12, 10
    %s19 = sphi 0, %s38
    %s20 = sphi 0, %s34
    %s21 = sphi 0, %s30
    %s22 = sphi 0, %s19
    %s23 = sphi 0, %s20
    %s24 = sphi 0, %s21
    %s25 = sphi 0, %s22
    %s26 = sphi 0, %s23
    %s27 = sphi 0, %s24
    %s43 = sphi 0, %s45
    %s46 = sphi 0, %s43
    %s47 = sphi 0, %s46
    %s63 = sphi 0, %s47
    %s71 = sphi 0, %s73
    %s74 = sphi 0, %s71
    %s75 = sphi 0, %s74
    %s91 = sphi 0, %s75
    %s95 = sphi 0, %s95
    %s97 = sphi 0, %s95
    %s98 = sphi 0, %s97
    %s112 = sphi 0, %s98
    %s116 = sphi 0, %s116
    %s118 = sphi 0, %s116
    %s119 = sphi 0, %s118
    %s133 = sphi 0, %s119
    %s137 = sphi 0, %s137
    %s139 = sphi 0, %s137
    %s140 = sphi 0, %s139
    %s154 = sphi 0, %s140
    %s158 = sphi 0, %s158
    %s160 = sphi 0, %s158
    %s161 = sphi 0, %s160
    %s175 = sphi 0, %s161
    %s183 = sphi 0, %s185
    %s186 = sphi 0, %s183
    %s187 = sphi 0, %s186
    %s203 = sphi 0, %s187
  $region4: #{tpu_custom_call.1} parent=0 // loop_header_branch
    %15 = sbr.rel (%p13) target = $region8
  $region5: #{tpu_custom_call.1} parent=0 // loop_body
    %s17 = ssub.s32 %s12, 1
    %s18 = ssub.s32 %s12, 2
    %s28 = sadd.s32 1, %s21
    %p29 = scmp.ge.s32.totalorder %s28, 2
    %s30 = scalar_select %p29, 0, %s28
    %s31 = sadd.s32 1, %s20
    %s32 = scalar_select %p29, %s31, %s20
    %p33 = scmp.ge.s32.totalorder %s32, 2
    %s34 = scalar_select %p33, 0, %s32
    %s35 = sadd.s32 1, %s19
    %s36 = scalar_select %p33, %s35, %s19
    %p37 = scmp.ge.s32.totalorder %s36, 2
    %s38 = scalar_select %p37, 0, %s36
    %s39 = ssub.s32 %s19, %s38
    %s40 = ssub.s32 %s20, %s34
    %s41 = sor.u32 %s39, %s40
    %p42 = scmp.eq.s32.totalorder %s41, 0
    %s44 = sadd.s32 %s43, 1
    %s45 = scalar_select %p42, %s43, %s44
    %p48 = pneg %p42
    %p49 = scmp.eq.s32.totalorder %s12, 7
    %p50 = por %p48, %p49
    %p51 = scmp.ne.s32.totalorder %s43, %s46
    %p52 = scmp.eq.s32.totalorder %s12, 0
    %p53 = por %p51, %p52
    %p54 = scmp.ne.s32.totalorder %s43, %s46
    %p55 = scmp.eq.s32.totalorder %s17, 7
    %p56 = por %p54, %p55
    %p57 = scmp.ne.s32.totalorder %s46, %s47
    %p58 = scmp.eq.s32.totalorder %s17, 0
    %p59 = por %p57, %p58
    %p60 = scmp.ne.s32.totalorder %s46, %s47
    %p61 = scmp.eq.s32.totalorder %s18, 7
    %p62 = por %p60, %p61
    %p64 = scmp.ne.s32.totalorder %s47, %s63
    %p65 = scmp.eq.s32.totalorder %s18, 0
    %p66 = por %p64, %p65
    %s67 = ssub.s32 %s19, %s38
    %s68 = ssub.s32 %s21, %s30
    %s69 = sor.u32 %s67, %s68
    %p70 = scmp.eq.s32.totalorder %s69, 0
    %s72 = sadd.s32 %s71, 1
    %s73 = scalar_select %p70, %s71, %s72
    %p76 = pneg %p70
    %p77 = scmp.eq.s32.totalorder %s12, 7
    %p78 = por %p76, %p77
    %p79 = scmp.ne.s32.totalorder %s71, %s74
    %p80 = scmp.eq.s32.totalorder %s12, 0
    %p81 = por %p79, %p80
    %p82 = scmp.ne.s32.totalorder %s71, %s74
    %p83 = scmp.eq.s32.totalorder %s17, 7
    %p84 = por %p82, %p83
    %p85 = scmp.ne.s32.totalorder %s74, %s75
    %p86 = scmp.eq.s32.totalorder %s17, 0
    %p87 = por %p85, %p86
    %p88 = scmp.ne.s32.totalorder %s74, %s75
    %p89 = scmp.eq.s32.totalorder %s18, 7
    %p90 = por %p88, %p89
    %p92 = scmp.ne.s32.totalorder %s75, %s91
    %p93 = scmp.eq.s32.totalorder %s18, 0
    %p94 = por %p92, %p93
    %s96 = sadd.s32 %s95, 1
    %p99 = scmp.eq.s32.totalorder %s12, 7
    %p100 = scmp.ne.s32.totalorder %s95, %s97
    %p101 = scmp.eq.s32.totalorder %s12, 0
    %p102 = por %p100, %p101
    %p103 = scmp.ne.s32.totalorder %s95, %s97
    %p104 = scmp.eq.s32.totalorder %s17, 7
    %p105 = por %p103, %p104
    %p106 = scmp.ne.s32.totalorder %s97, %s98
    %p107 = scmp.eq.s32.totalorder %s17, 0
    %p108 = por %p106, %p107
    %p109 = scmp.ne.s32.totalorder %s97, %s98
    %p110 = scmp.eq.s32.totalorder %s18, 7
    %p111 = por %p109, %p110
    %p113 = scmp.ne.s32.totalorder %s98, %s112
    %p114 = scmp.eq.s32.totalorder %s18, 0
    %p115 = por %p113, %p114
    %s117 = sadd.s32 %s116, 1
    %p120 = scmp.eq.s32.totalorder %s12, 7
    %p121 = scmp.ne.s32.totalorder %s116, %s118
    %p122 = scmp.eq.s32.totalorder %s12, 0
    %p123 = por %p121, %p122
    %p124 = scmp.ne.s32.totalorder %s116, %s118
    %p125 = scmp.eq.s32.totalorder %s17, 7
    %p126 = por %p124, %p125
    %p127 = scmp.ne.s32.totalorder %s118, %s119
    %p128 = scmp.eq.s32.totalorder %s17, 0
    %p129 = por %p127, %p128
    %p130 = scmp.ne.s32.totalorder %s118, %s119
    %p131 = scmp.eq.s32.totalorder %s18, 7
    %p132 = por %p130, %p131
    %p134 = scmp.ne.s32.totalorder %s119, %s133
    %p135 = scmp.eq.s32.totalorder %s18, 0
    %p136 = por %p134, %p135
    %s138 = sadd.s32 %s137, 1
    %p141 = scmp.eq.s32.totalorder %s12, 7
    %p142 = scmp.ne.s32.totalorder %s137, %s139
    %p143 = scmp.eq.s32.totalorder %s12, 0
    %p144 = por %p142, %p143
    %p145 = scmp.ne.s32.totalorder %s137, %s139
    %p146 = scmp.eq.s32.totalorder %s17, 7
    %p147 = por %p145, %p146
    %p148 = scmp.ne.s32.totalorder %s139, %s140
    %p149 = scmp.eq.s32.totalorder %s17, 0
    %p150 = por %p148, %p149
    %p151 = scmp.ne.s32.totalorder %s139, %s140
    %p152 = scmp.eq.s32.totalorder %s18, 7
    %p153 = por %p151, %p152
    %p155 = scmp.ne.s32.totalorder %s140, %s154
    %p156 = scmp.eq.s32.totalorder %s18, 0
    %p157 = por %p155, %p156
    %s159 = sadd.s32 %s158, 1
    %p162 = scmp.eq.s32.totalorder %s12, 7
    %p163 = scmp.ne.s32.totalorder %s158, %s160
    %p164 = scmp.eq.s32.totalorder %s12, 0
    %p165 = por %p163, %p164
    %p166 = scmp.ne.s32.totalorder %s158, %s160
    %p167 = scmp.eq.s32.totalorder %s17, 7
    %p168 = por %p166, %p167
    %p169 = scmp.ne.s32.totalorder %s160, %s161
    %p170 = scmp.eq.s32.totalorder %s17, 0
    %p171 = por %p169, %p170
    %p172 = scmp.ne.s32.totalorder %s160, %s161
    %p173 = scmp.eq.s32.totalorder %s18, 7
    %p174 = por %p172, %p173
    %p176 = scmp.ne.s32.totalorder %s161, %s175
    %p177 = scmp.eq.s32.totalorder %s18, 0
    %p178 = por %p176, %p177
    %s179 = ssub.s32 %s19, %s38
    %s180 = ssub.s32 %s20, %s34
    %s181 = sor.u32 %s179, %s180
    %p182 = scmp.eq.s32.totalorder %s181, 0
    %s184 = sadd.s32 %s183, 1
    %s185 = scalar_select %p182, %s183, %s184
    %p188 = pneg %p182
    %p189 = scmp.eq.s32.totalorder %s12, 7
    %p190 = por %p188, %p189
    %p191 = scmp.ne.s32.totalorder %s183, %s186
    %p192 = scmp.eq.s32.totalorder %s12, 0
    %p193 = por %p191, %p192
    %p194 = scmp.ne.s32.totalorder %s183, %s186
    %p195 = scmp.eq.s32.totalorder %s17, 7
    %p196 = por %p194, %p195
    %p197 = scmp.ne.s32.totalorder %s186, %s187
    %p198 = scmp.eq.s32.totalorder %s17, 0
    %p199 = por %p197, %p198
    %p200 = scmp.ne.s32.totalorder %s186, %s187
    %p201 = scmp.eq.s32.totalorder %s18, 7
    %p202 = por %p200, %p201
    %p204 = scmp.ne.s32.totalorder %s187, %s203
    %p205 = scmp.eq.s32.totalorder %s18, 0
    %p206 = por %p204, %p205
    %p207 = scmp.le.s32.totalorder 1, %s12
    %p208 = scmp.lt.s32.totalorder %s12, 9
    %p209 = pnand %p207, %p208
    %p210 = pneg %p209
    // Predicated region
    $region9: #{tpu_custom_call.1} parent=5 // pred_check
      _
    $region10: #{tpu_custom_call.1} parent=5 // pred_check_branch
      %212 = sbr.rel (%p209) target = $region12
    $region11: #{tpu_custom_call.1} parent=5 // pred_region
      %s213 = ssub.s32 %s12, 1
      // Predicated region
      $region13: #{tpu_custom_call.1} parent=11 // pred_check
        %p214 = pneg %p108
      $region14: #{tpu_custom_call.1} parent=11 // pred_check_branch
        %216 = sbr.rel (%p214) target = $region16
      $region15: #{tpu_custom_call.1} parent=11 // pred_region
        _
      $region16: #{tpu_custom_call.1} parent=11 // pred_fallthru
        _
      // Predicated region
      $region17: #{tpu_custom_call.1} parent=11 // pred_check
        %p217 = pneg %p129
      $region18: #{tpu_custom_call.1} parent=11 // pred_check_branch
        %219 = sbr.rel (%p217) target = $region20
      $region19: #{tpu_custom_call.1} parent=11 // pred_region
        _
      $region20: #{tpu_custom_call.1} parent=11 // pred_fallthru
        _
      // Predicated region
      $region21: #{tpu_custom_call.1} parent=11 // pred_check
        %p220 = pneg %p150
      $region22: #{tpu_custom_call.1} parent=11 // pred_check_branch
        %222 = sbr.rel (%p220) target = $region24
      $region23: #{tpu_custom_call.1} parent=11 // pred_region
        _
      $region24: #{tpu_custom_call.1} parent=11 // pred_fallthru
        _
      // Predicated region
      $region25: #{tpu_custom_call.1} parent=11 // pred_check
        %p223 = pneg %p171
      $region26: #{tpu_custom_call.1} parent=11 // pred_check_branch
        %225 = sbr.rel (%p223) target = $region28
      $region27: #{tpu_custom_call.1} parent=11 // pred_region
        _
      $region28: #{tpu_custom_call.1} parent=11 // pred_fallthru
        _
    $region12: #{tpu_custom_call.1} parent=5 // pred_fallthru
      _
    %p226 = scmp.lt.s32.totalorder %s12, 8
    // Predicated region
    $region29: #{tpu_custom_call.1} parent=5 // pred_check
      %p227 = pneg %p226
    $region30: #{tpu_custom_call.1} parent=5 // pred_check_branch
      %229 = sbr.rel (%p227) target = $region32
    $region31: #{tpu_custom_call.1} parent=5 // pred_region
      // Predicated region
      $region33: #{tpu_custom_call.1} parent=31 // pred_check
        %p230 = pneg %p53
      $region34: #{tpu_custom_call.1} parent=31 // pred_check_branch
        %232 = sbr.rel (%p230) target = $region36
      $region35: #{tpu_custom_call.1} parent=31 // pred_region
        %s233 = smul.u32 4, %s20
        %p234 = scmp.lt.s32.totalorder %s19, 1
        %s235 = scalar_select %p234, %s19, 1
        %p236 = scmp.lt.s32.totalorder %s233, 7
        %s237 = scalar_select %p236, %s233, 7
        %s238 = smul.addr %s235, 8
        %s239 = sadd.s32 %s237, %s238
        %s240 = smul.addr %s239, 4
        %s241 = scalar_lea.vmem %s0, %s240
        %s242 = smul.u32 4, %s20
      $region36: #{tpu_custom_call.1} parent=31 // pred_fallthru
        _
      // Predicated region
      $region37: #{tpu_custom_call.1} parent=31 // pred_check
        %p243 = pneg %p81
      $region38: #{tpu_custom_call.1} parent=31 // pred_check_branch
        %245 = sbr.rel (%p243) target = $region40
      $region39: #{tpu_custom_call.1} parent=31 // pred_region
        %s246 = smul.u32 4, %s21
        %p247 = scmp.lt.s32.totalorder %s19, 1
        %s248 = scalar_select %p247, %s19, 1
        %p249 = scmp.lt.s32.totalorder %s246, 7
        %s250 = scalar_select %p249, %s246, 7
        %s251 = smul.addr %s248, 8
        %s252 = sadd.s32 %s250, %s251
        %s253 = smul.addr %s252, 4
        %s254 = scalar_lea.vmem %s1, %s253
        %s255 = smul.u32 4, %s21
      $region40: #{tpu_custom_call.1} parent=31 // pred_fallthru
        _
    $region32: #{tpu_custom_call.1} parent=5 // pred_fallthru
      _
    %p256 = scmp.le.s32.totalorder 1, %s12
    %p257 = scmp.lt.s32.totalorder %s12, 9
    %p258 = pnand %p256, %p257
    %p259 = pneg %p258
    // Predicated region
    $region41: #{tpu_custom_call.1} parent=5 // pred_check
      _
    $region42: #{tpu_custom_call.1} parent=5 // pred_check_branch
      %261 = sbr.rel (%p258) target = $region44
    $region43: #{tpu_custom_call.1} parent=5 // pred_region
      %s262 = ssub.s32 %s12, 1
      %s263 = smul.u32 4, %s23
      %p264 = scmp.lt.s32.totalorder %s22, 1
      %s265 = scalar_select %p264, %s22, 1
      %p266 = scmp.lt.s32.totalorder %s263, 7
      %s267 = scalar_select %p266, %s263, 7
      %s268 = smul.addr %s265, 8
      %s269 = sadd.s32 %s267, %s268
      %s270 = smul.addr %s269, 4
      %s271 = scalar_lea.vmem %s0, %s270
      %p272 = pneg %p59
      %p273 = pneg %p56
      %s274 = smul.u32 4, %s24
      %p275 = scmp.lt.s32.totalorder %s22, 1
      %s276 = scalar_select %p275, %s22, 1
      %p277 = scmp.lt.s32.totalorder %s274, 7
      %s278 = scalar_select %p277, %s274, 7
      %s279 = smul.addr %s276, 8
      %s280 = sadd.s32 %s278, %s279
      %s281 = smul.addr %s280, 4
      %s282 = scalar_lea.vmem %s1, %s281
      %p283 = pneg %p87
      %p284 = pneg %p84
      %p285 = pneg %p108
      %p286 = pneg %p105
      %p287 = pneg %p129
      %p288 = pneg %p126
      %p289 = pneg %p150
      %p290 = pneg %p147
      %p291 = pneg %p171
      %p292 = pneg %p168
      %p293 = pneg %p199
      %p294 = pneg %p196
      %s295 = smul.u32 4, %s23
      %p296 = scmp.lt.s32.totalorder %s22, 1
      %s297 = scalar_select %p296, %s22, 1
      %p298 = scmp.lt.s32.totalorder %s295, 7
      %s299 = scalar_select %p298, %s295, 7
      %s300 = smul.addr %s297, 8
      %s301 = sadd.s32 %s299, %s300
      %s302 = smul.addr %s301, 8
      %s303 = scalar_lea.vmem %s6, %s302
      %s304 = smul.u32 4, %s23
      %p305 = scmp.lt.s32.totalorder %s22, 1
      %s306 = scalar_select %p305, %s22, 1
      %p307 = scmp.lt.s32.totalorder %s304, 7
      %s308 = scalar_select %p307, %s304, 7
      %s309 = smul.addr %s306, 8
      %s310 = sadd.s32 %s308, %s309
      %s311 = smul.addr %s310, 4
      %s312 = scalar_lea.vmem %s0, %s311
      %s313 = smul.u32 4, %s23
      %s314 = smul.u32 4, %s24
      %p315 = scmp.lt.s32.totalorder %s22, 1
      %s316 = scalar_select %p315, %s22, 1
      %p317 = scmp.lt.s32.totalorder %s314, 7
      %s318 = scalar_select %p317, %s314, 7
      %s319 = smul.addr %s316, 8
      %s320 = sadd.s32 %s318, %s319
      %s321 = smul.addr %s320, 4
      %s322 = scalar_lea.vmem %s1, %s321
      %s323 = smul.u32 4, %s24
      %s324 = smul.u32 4, %s23
      %p325 = scmp.lt.s32.totalorder %s22, 1
      %s326 = scalar_select %p325, %s22, 1
      %p327 = scmp.lt.s32.totalorder %s324, 7
      %s328 = scalar_select %p327, %s324, 7
      %s329 = smul.addr %s326, 8
      %s330 = sadd.s32 %s328, %s329
      %s331 = smul.addr %s330, 8
      %s332 = scalar_lea.vmem %s6, %s331
      %s333 = smul.u32 4, %s23
      %p335 = scmp.eq.s32.totalorder %s24, 0
      // Predicated region
      $region45: #{tpu_custom_call.1} parent=43 // pred_check
        %p336 = pneg %p335
      $region46: #{tpu_custom_call.1} parent=43 // pred_check_branch
        %338 = sbr.rel (%p336) target = $region48
      $region47: #{tpu_custom_call.1} parent=43 // pred_region
        %v339 = vld [vmem:[%s312] sm:$0xf]
        %v340 = vld [vmem:[%s312 + $0x4] sm:$0xf]
        %v341 = vld [vmem:[%s312 + $0x8] sm:$0xf]
        %v342 = vld [vmem:[%s312 + $0xc] sm:$0xf]
        %v343 = vld [vmem:[%s2] sm:$0xf]
        %v344 = vld [vmem:[%s2 + $0x4] sm:$0xf]
        %v345 = vld [vmem:[%s2 + $0x8] sm:$0xf]
        %v346 = vld [vmem:[%s2 + $0xc] sm:$0xf]
        %v351 = vunpack.c.l.b16 %v339
        %v352 = vunpack.c.l.b16 %v340
        %v353 = vunpack.c.l.b16 %v341
        %v354 = vunpack.c.l.b16 %v342
        %v355 = vpack.c.b16 %v352, %v351
        %v356 = vpack.c.b16 %v354, %v353
        %v361 = vunpack.c.l.b16 %v343
        %v362 = vunpack.c.l.b16 %v344
        %v363 = vunpack.c.l.b16 %v345
        %v364 = vunpack.c.l.b16 %v346
        %v365 = vpack.c.b16 %v362, %v361
        %v366 = vpack.c.b16 %v364, %v363
        %vm369 = vcmask 261120
        %v371 = vsel %vm369, %v355, 0
        %v374 = vsel %vm369, %v356, 0
        %376 = vmatprep.subr.bf16.mxu0 0
        %377 = vmatpush1.bf16.msra.mxu0 0
        %378 = vmatprep.subr.bf16.mxu0 0
        %379 = vmatpush1.bf16.msra.mxu0 0
        %380 = vmatprep.subr.bf16.mxu0 0
        %381 = vmatpush1.bf16.msra.mxu0 0
        %382 = vmatprep.subr.bf16.mxu0 0
        %383 = vmatpush1.bf16.msra.mxu0 0
        %384 = vmatprep.subr.bf16.mxu0 0
        %385 = vmatpush1.bf16.msra.mxu0 0
        %386 = vmatprep.subr.bf16.mxu0 0
        %387 = vmatpush1.bf16.msra.mxu0 0
        %388 = vmatprep.subr.bf16.mxu0 0
        %389 = vmatpush1.bf16.msra.mxu0 %v366
        %390 = vmatprep.subr.bf16.mxu0 0
        %391 = vmatpush1.bf16.msra.mxu0 %v365
        %392 = vmatprep.subr.bf16.mxu0 0
        %393 = vmatpush2.bf16.msra.mxu0 0
        %394 = vmatprep.subr.bf16.mxu0 0
        %395 = vmatpush2.bf16.msra.mxu0 0
        %396 = vmatprep.subr.bf16.mxu0 0
        %397 = vmatpush2.bf16.msra.mxu0 0
        %398 = vmatprep.subr.bf16.mxu0 0
        %399 = vmatpush2.bf16.msra.mxu0 0
        %400 = vmatprep.subr.bf16.mxu0 0
        %401 = vmatpush2.bf16.msra.mxu0 0
        %402 = vmatprep.subr.bf16.mxu0 0
        %403 = vmatpush2.bf16.msra.mxu0 0
        %404 = vmatprep.subr.bf16.mxu0 0
        %405 = vmatpush2.bf16.msra.mxu0 0
        %406 = vmatprep.subr.bf16.mxu0 0
        %407 = vmatpush2.bf16.msra.mxu0 0
        %408 = vmatprep.mubr.bf16.mxu0 0
        %409 = vmatmul.mubr.bf16.gmra.mxu0 %v371
        %v410 = vpop.f32.mrf.mxu0
        %v411 = vadd.f32 0.0, %v410
        %v412 = vpop.f32.mrf.mxu0
        %v413 = vpop.f32.mrf.mxu0
        %v414 = vadd.f32 0.0, %v413
        %v415 = vpop.f32.mrf.mxu0
        %416 = vmatprep.mubr.bf16.mxu0 0
        %417 = vmatmul.mubr.bf16.gmra.mxu0 %v374
        %v418 = vpop.f32.mrf.mxu0
        %v419 = vadd.f32 0.0, %v418
        %v420 = vpop.f32.mrf.mxu0
        %v421 = vpop.f32.mrf.mxu0
        %v422 = vadd.f32 0.0, %v421
        %v423 = vpop.f32.mrf.mxu0
        %424 = vdwg.mxu0
        %v425 = vpack.c.bf16 %v414, %v411
        %v426 = vpack.c.bf16 %v422, %v419
        %v429 = vunpack.c.l.b16 %v425
        %v430 = vunpack.c.h.b16 %v425
        %v431 = vunpack.c.l.b16 %v426
        %v432 = vunpack.c.h.b16 %v426
        %v433 = vpack.c.b16 %v429, %v429
        %v434 = vpack.c.b16 %v430, %v430
        %v435 = vpack.c.b16 %v431, %v431
        %v436 = vpack.c.b16 %v432, %v432
        %441 = vst [vmem:[#allocation2] sm:$0xf] %v433
        %442 = vst [vmem:[#allocation2 + $0x4] sm:$0xf] %v434
        %443 = vst [vmem:[#allocation2 + $0x8] sm:$0xf] %v435
        %444 = vst [vmem:[#allocation2 + $0xc] sm:$0xf] %v436
        %s445 = scalar_lea.vmem %s2, 16
        %v446 = vld [vmem:[%s445] sm:$0xf]
        %v447 = vld [vmem:[%s445 + $0x4] sm:$0xf]
        %v448 = vld [vmem:[%s445 + $0x8] sm:$0xf]
        %v449 = vld [vmem:[%s445 + $0xc] sm:$0xf]
        %v454 = vunpack.c.l.b16 %v446
        %v455 = vunpack.c.l.b16 %v447
        %v456 = vunpack.c.l.b16 %v448
        %v457 = vunpack.c.l.b16 %v449
        %v458 = vpack.c.b16 %v455, %v454
        %v459 = vpack.c.b16 %v457, %v456
        %462 = vmatprep.subr.bf16.mxu0 0
        %463 = vmatpush1.bf16.msra.mxu0 0
        %464 = vmatprep.subr.bf16.mxu0 0
        %465 = vmatpush1.bf16.msra.mxu0 0
        %466 = vmatprep.subr.bf16.mxu0 0
        %467 = vmatpush1.bf16.msra.mxu0 0
        %468 = vmatprep.subr.bf16.mxu0 0
        %469 = vmatpush1.bf16.msra.mxu0 0
        %470 = vmatprep.subr.bf16.mxu0 0
        %471 = vmatpush1.bf16.msra.mxu0 0
        %472 = vmatprep.subr.bf16.mxu0 0
        %473 = vmatpush1.bf16.msra.mxu0 0
        %474 = vmatprep.subr.bf16.mxu0 0
        %475 = vmatpush1.bf16.msra.mxu0 %v459
        %476 = vmatprep.subr.bf16.mxu0 0
        %477 = vmatpush1.bf16.msra.mxu0 %v458
        %478 = vmatprep.subr.bf16.mxu0 0
        %479 = vmatpush2.bf16.msra.mxu0 0
        %480 = vmatprep.subr.bf16.mxu0 0
        %481 = vmatpush2.bf16.msra.mxu0 0
        %482 = vmatprep.subr.bf16.mxu0 0
        %483 = vmatpush2.bf16.msra.mxu0 0
        %484 = vmatprep.subr.bf16.mxu0 0
        %485 = vmatpush2.bf16.msra.mxu0 0
        %486 = vmatprep.subr.bf16.mxu0 0
        %487 = vmatpush2.bf16.msra.mxu0 0
        %488 = vmatprep.subr.bf16.mxu0 0
        %489 = vmatpush2.bf16.msra.mxu0 0
        %490 = vmatprep.subr.bf16.mxu0 0
        %491 = vmatpush2.bf16.msra.mxu0 0
        %492 = vmatprep.subr.bf16.mxu0 0
        %493 = vmatpush2.bf16.msra.mxu0 0
        %494 = vmatprep.mubr.bf16.mxu0 0
        %495 = vmatmul.mubr.bf16.gmra.mxu0 %v371
        %v496 = vpop.f32.mrf.mxu0
        %v497 = vadd.f32 0.0, %v496
        %v498 = vpop.f32.mrf.mxu0
        %v499 = vpop.f32.mrf.mxu0
        %v500 = vadd.f32 0.0, %v499
        %v501 = vpop.f32.mrf.mxu0
        %502 = vmatprep.mubr.bf16.mxu0 0
        %503 = vmatmul.mubr.bf16.gmra.mxu0 %v374
        %v504 = vpop.f32.mrf.mxu0
        %v505 = vadd.f32 0.0, %v504
        %v506 = vpop.f32.mrf.mxu0
        %v507 = vpop.f32.mrf.mxu0
        %v508 = vadd.f32 0.0, %v507
        %v509 = vpop.f32.mrf.mxu0
        %510 = vdwg.mxu0
        %v511 = vpack.c.bf16 %v500, %v497
        %v512 = vpack.c.bf16 %v508, %v505
        %v515 = vunpack.c.l.b16 %v511
        %v516 = vunpack.c.h.b16 %v511
        %v517 = vunpack.c.l.b16 %v512
        %v518 = vunpack.c.h.b16 %v512
        %v519 = vpack.c.b16 %v515, %v515
        %v520 = vpack.c.b16 %v516, %v516
        %v521 = vpack.c.b16 %v517, %v517
        %v522 = vpack.c.b16 %v518, %v518
        %s527 = scalar_lea.vmem [#allocation2], 16
        %528 = vst [vmem:[%s527] sm:$0xf] %v519
        %529 = vst [vmem:[%s527 + $0x4] sm:$0xf] %v520
        %530 = vst [vmem:[%s527 + $0x8] sm:$0xf] %v521
        %531 = vst [vmem:[%s527 + $0xc] sm:$0xf] %v522
        %s532 = scalar_lea.vmem %s2, 32
        %v533 = vld [vmem:[%s532] sm:$0xf]
        %v534 = vld [vmem:[%s532 + $0x4] sm:$0xf]
        %v535 = vld [vmem:[%s532 + $0x8] sm:$0xf]
        %v536 = vld [vmem:[%s532 + $0xc] sm:$0xf]
        %v541 = vunpack.c.l.b16 %v533
        %v542 = vunpack.c.l.b16 %v534
        %v543 = vunpack.c.l.b16 %v535
        %v544 = vunpack.c.l.b16 %v536
        %v545 = vpack.c.b16 %v542, %v541
        %v546 = vpack.c.b16 %v544, %v543
        %549 = vmatprep.subr.bf16.mxu0 0
        %550 = vmatpush1.bf16.msra.mxu0 0
        %551 = vmatprep.subr.bf16.mxu0 0
        %552 = vmatpush1.bf16.msra.mxu0 0
        %553 = vmatprep.subr.bf16.mxu0 0
        %554 = vmatpush1.bf16.msra.mxu0 0
        %555 = vmatprep.subr.bf16.mxu0 0
        %556 = vmatpush1.bf16.msra.mxu0 0
        %557 = vmatprep.subr.bf16.mxu0 0
        %558 = vmatpush1.bf16.msra.mxu0 0
        %559 = vmatprep.subr.bf16.mxu0 0
        %560 = vmatpush1.bf16.msra.mxu0 0
        %561 = vmatprep.subr.bf16.mxu0 0
        %562 = vmatpush1.bf16.msra.mxu0 %v546
        %563 = vmatprep.subr.bf16.mxu0 0
        %564 = vmatpush1.bf16.msra.mxu0 %v545
        %565 = vmatprep.subr.bf16.mxu0 0
        %566 = vmatpush2.bf16.msra.mxu0 0
        %567 = vmatprep.subr.bf16.mxu0 0
        %568 = vmatpush2.bf16.msra.mxu0 0
        %569 = vmatprep.subr.bf16.mxu0 0
        %570 = vmatpush2.bf16.msra.mxu0 0
        %571 = vmatprep.subr.bf16.mxu0 0
        %572 = vmatpush2.bf16.msra.mxu0 0
        %573 = vmatprep.subr.bf16.mxu0 0
        %574 = vmatpush2.bf16.msra.mxu0 0
        %575 = vmatprep.subr.bf16.mxu0 0
        %576 = vmatpush2.bf16.msra.mxu0 0
        %577 = vmatprep.subr.bf16.mxu0 0
        %578 = vmatpush2.bf16.msra.mxu0 0
        %579 = vmatprep.subr.bf16.mxu0 0
        %580 = vmatpush2.bf16.msra.mxu0 0
        %581 = vmatprep.mubr.bf16.mxu0 0
        %582 = vmatmul.mubr.bf16.gmra.mxu0 %v371
        %v583 = vpop.f32.mrf.mxu0
        %v584 = vadd.f32 0.0, %v583
        %v585 = vpop.f32.mrf.mxu0
        %v586 = vpop.f32.mrf.mxu0
        %v587 = vadd.f32 0.0, %v586
        %v588 = vpop.f32.mrf.mxu0
        %589 = vmatprep.mubr.bf16.mxu0 0
        %590 = vmatmul.mubr.bf16.gmra.mxu0 %v374
        %v591 = vpop.f32.mrf.mxu0
        %v592 = vadd.f32 0.0, %v591
        %v593 = vpop.f32.mrf.mxu0
        %v594 = vpop.f32.mrf.mxu0
        %v595 = vadd.f32 0.0, %v594
        %v596 = vpop.f32.mrf.mxu0
        %597 = vdwg.mxu0
        %v598 = vpack.c.bf16 %v587, %v584
        %v599 = vpack.c.bf16 %v595, %v592
        %v602 = vunpack.c.l.b16 %v598
        %v603 = vunpack.c.h.b16 %v598
        %v604 = vunpack.c.l.b16 %v599
        %v605 = vunpack.c.h.b16 %v599
        %v606 = vpack.c.b16 %v602, %v602
        %v607 = vpack.c.b16 %v603, %v603
        %v608 = vpack.c.b16 %v604, %v604
        %v609 = vpack.c.b16 %v605, %v605
        %s614 = scalar_lea.vmem [#allocation2], 32
        %615 = vst [vmem:[%s614] sm:$0xf] %v606
        %616 = vst [vmem:[%s614 + $0x4] sm:$0xf] %v607
        %617 = vst [vmem:[%s614 + $0x8] sm:$0xf] %v608
        %618 = vst [vmem:[%s614 + $0xc] sm:$0xf] %v609
        %s619 = scalar_lea.vmem %s2, 48
        %v620 = vld [vmem:[%s619] sm:$0xf]
        %v621 = vld [vmem:[%s619 + $0x4] sm:$0xf]
        %v622 = vld [vmem:[%s619 + $0x8] sm:$0xf]
        %v623 = vld [vmem:[%s619 + $0xc] sm:$0xf]
        %v628 = vunpack.c.l.b16 %v620
        %v629 = vunpack.c.l.b16 %v621
        %v630 = vunpack.c.l.b16 %v622
        %v631 = vunpack.c.l.b16 %v623
        %v632 = vpack.c.b16 %v629, %v628
        %v633 = vpack.c.b16 %v631, %v630
        %636 = vmatprep.subr.bf16.mxu0 0
        %637 = vmatpush1.bf16.msra.mxu0 0
        %638 = vmatprep.subr.bf16.mxu0 0
        %639 = vmatpush1.bf16.msra.mxu0 0
        %640 = vmatprep.subr.bf16.mxu0 0
        %641 = vmatpush1.bf16.msra.mxu0 0
        %642 = vmatprep.subr.bf16.mxu0 0
        %643 = vmatpush1.bf16.msra.mxu0 0
        %644 = vmatprep.subr.bf16.mxu0 0
        %645 = vmatpush1.bf16.msra.mxu0 0
        %646 = vmatprep.subr.bf16.mxu0 0
        %647 = vmatpush1.bf16.msra.mxu0 0
        %648 = vmatprep.subr.bf16.mxu0 0
        %649 = vmatpush1.bf16.msra.mxu0 %v633
        %650 = vmatprep.subr.bf16.mxu0 0
        %651 = vmatpush1.bf16.msra.mxu0 %v632
        %652 = vmatprep.subr.bf16.mxu0 0
        %653 = vmatpush2.bf16.msra.mxu0 0
        %654 = vmatprep.subr.bf16.mxu0 0
        %655 = vmatpush2.bf16.msra.mxu0 0
        %656 = vmatprep.subr.bf16.mxu0 0
        %657 = vmatpush2.bf16.msra.mxu0 0
        %658 = vmatprep.subr.bf16.mxu0 0
        %659 = vmatpush2.bf16.msra.mxu0 0
        %660 = vmatprep.subr.bf16.mxu0 0
        %661 = vmatpush2.bf16.msra.mxu0 0
        %662 = vmatprep.subr.bf16.mxu0 0
        %663 = vmatpush2.bf16.msra.mxu0 0
        %664 = vmatprep.subr.bf16.mxu0 0
        %665 = vmatpush2.bf16.msra.mxu0 0
        %666 = vmatprep.subr.bf16.mxu0 0
        %667 = vmatpush2.bf16.msra.mxu0 0
        %668 = vmatprep.mubr.bf16.mxu0 0
        %669 = vmatmul.mubr.bf16.gmra.mxu0 %v371
        %v670 = vpop.f32.mrf.mxu0
        %v671 = vadd.f32 0.0, %v670
        %v672 = vpop.f32.mrf.mxu0
        %v673 = vpop.f32.mrf.mxu0
        %v674 = vadd.f32 0.0, %v673
        %v675 = vpop.f32.mrf.mxu0
        %676 = vmatprep.mubr.bf16.mxu0 0
        %677 = vmatmul.mubr.bf16.gmra.mxu0 %v374
        %v678 = vpop.f32.mrf.mxu0
        %v679 = vadd.f32 0.0, %v678
        %v680 = vpop.f32.mrf.mxu0
        %v681 = vpop.f32.mrf.mxu0
        %v682 = vadd.f32 0.0, %v681
        %v683 = vpop.f32.mrf.mxu0
        %684 = vdwg.mxu0
        %v685 = vpack.c.bf16 %v674, %v671
        %v686 = vpack.c.bf16 %v682, %v679
        %v689 = vunpack.c.l.b16 %v685
        %v690 = vunpack.c.h.b16 %v685
        %v691 = vunpack.c.l.b16 %v686
        %v692 = vunpack.c.h.b16 %v686
        %v693 = vpack.c.b16 %v689, %v689
        %v694 = vpack.c.b16 %v690, %v690
        %v695 = vpack.c.b16 %v691, %v691
        %v696 = vpack.c.b16 %v692, %v692
        %s701 = scalar_lea.vmem [#allocation2], 48
        %702 = vst [vmem:[%s701] sm:$0xf] %v693
        %703 = vst [vmem:[%s701 + $0x4] sm:$0xf] %v694
        %704 = vst [vmem:[%s701 + $0x8] sm:$0xf] %v695
        %705 = vst [vmem:[%s701 + $0xc] sm:$0xf] %v696
        %vm706 = vcmask 7168
        %707 = vst.msk [vmem:[#allocation3] sm:$0xff] %vm706, -inf
        %708 = vst.msk [vmem:[#allocation3 + $0x8] sm:$0xff] %vm706, -inf
        %709 = vst.msk [vmem:[#allocation3 + $0x10] sm:$0xff] %vm706, -inf
        %710 = vst.msk [vmem:[#allocation3 + $0x18] sm:$0xff] %vm706, -inf
        %711 = vst.msk [vmem:[#allocation3 + $0x20] sm:$0xff] %vm706, -inf
        %712 = vst.msk [vmem:[#allocation3 + $0x28] sm:$0xff] %vm706, -inf
        %713 = vst.msk [vmem:[#allocation3 + $0x30] sm:$0xff] %vm706, -inf
        %714 = vst.msk [vmem:[#allocation3 + $0x38] sm:$0xff] %vm706, -inf
        %715 = vst.msk [vmem:[#allocation3 + $0x40] sm:$0xff] %vm706, -inf
        %716 = vst.msk [vmem:[#allocation3 + $0x48] sm:$0xff] %vm706, -inf
        %717 = vst.msk [vmem:[#allocation3 + $0x50] sm:$0xff] %vm706, -inf
        %718 = vst.msk [vmem:[#allocation3 + $0x58] sm:$0xff] %vm706, -inf
        %719 = vst.msk [vmem:[#allocation3 + $0x60] sm:$0xff] %vm706, -inf
        %720 = vst.msk [vmem:[#allocation3 + $0x68] sm:$0xff] %vm706, -inf
        %721 = vst.msk [vmem:[#allocation3 + $0x70] sm:$0xff] %vm706, -inf
        %722 = vst.msk [vmem:[#allocation3 + $0x78] sm:$0xff] %vm706, -inf
        %723 = vst.msk [vmem:[#allocation4] sm:$0xff] %vm706, 0.0
        %724 = vst.msk [vmem:[#allocation4 + $0x8] sm:$0xff] %vm706, 0.0
        %725 = vst.msk [vmem:[#allocation4 + $0x10] sm:$0xff] %vm706, 0.0
        %726 = vst.msk [vmem:[#allocation4 + $0x18] sm:$0xff] %vm706, 0.0
        %727 = vst.msk [vmem:[#allocation4 + $0x20] sm:$0xff] %vm706, 0.0
        %728 = vst.msk [vmem:[#allocation4 + $0x28] sm:$0xff] %vm706, 0.0
        %729 = vst.msk [vmem:[#allocation4 + $0x30] sm:$0xff] %vm706, 0.0
        %730 = vst.msk [vmem:[#allocation4 + $0x38] sm:$0xff] %vm706, 0.0
        %731 = vst.msk [vmem:[#allocation4 + $0x40] sm:$0xff] %vm706, 0.0
        %732 = vst.msk [vmem:[#allocation4 + $0x48] sm:$0xff] %vm706, 0.0
        %733 = vst.msk [vmem:[#allocation4 + $0x50] sm:$0xff] %vm706, 0.0
        %734 = vst.msk [vmem:[#allocation4 + $0x58] sm:$0xff] %vm706, 0.0
        %735 = vst.msk [vmem:[#allocation4 + $0x60] sm:$0xff] %vm706, 0.0
        %736 = vst.msk [vmem:[#allocation4 + $0x68] sm:$0xff] %vm706, 0.0
        %737 = vst.msk [vmem:[#allocation4 + $0x70] sm:$0xff] %vm706, 0.0
        %738 = vst.msk [vmem:[#allocation4 + $0x78] sm:$0xff] %vm706, 0.0
        %739 = vst [vmem:[#allocation5] sm:$0xff] 0.0
        %740 = vst [vmem:[#allocation5 + $0x8] sm:$0xff] 0.0
        %741 = vst [vmem:[#allocation5 + $0x10] sm:$0xff] 0.0
        %742 = vst [vmem:[#allocation5 + $0x18] sm:$0xff] 0.0
        %743 = vst [vmem:[#allocation5 + $0x20] sm:$0xff] 0.0
        %744 = vst [vmem:[#allocation5 + $0x28] sm:$0xff] 0.0
        %745 = vst [vmem:[#allocation5 + $0x30] sm:$0xff] 0.0
        %746 = vst [vmem:[#allocation5 + $0x38] sm:$0xff] 0.0
        %747 = vst [vmem:[#allocation5 + $0x40] sm:$0xff] 0.0
        %748 = vst [vmem:[#allocation5 + $0x48] sm:$0xff] 0.0
        %749 = vst [vmem:[#allocation5 + $0x50] sm:$0xff] 0.0
        %750 = vst [vmem:[#allocation5 + $0x58] sm:$0xff] 0.0
        %751 = vst [vmem:[#allocation5 + $0x60] sm:$0xff] 0.0
        %752 = vst [vmem:[#allocation5 + $0x68] sm:$0xff] 0.0
        %753 = vst [vmem:[#allocation5 + $0x70] sm:$0xff] 0.0
        %754 = vst [vmem:[#allocation5 + $0x78] sm:$0xff] 0.0
      $region48: #{tpu_custom_call.1} parent=43 // pred_fallthru
        _
      %v755 = vld [vmem:[%s322] sm:$0xf]
      %v756 = vld [vmem:[%s322 + $0x4] sm:$0xf]
      %v757 = vld [vmem:[%s322 + $0x8] sm:$0xf]
      %v758 = vld [vmem:[%s322 + $0xc] sm:$0xf]
      %v759 = vld [vmem:[%s3] sm:$0xff]
      %v760 = vld [vmem:[%s3 + $0x8] sm:$0xff]
      %v761 = vld [vmem:[%s3 + $0x10] sm:$0xff]
      %v762 = vld [vmem:[%s3 + $0x18] sm:$0xff]
      %v767 = vunpack.c.l.b16 %v755
      %v768 = vunpack.c.l.b16 %v756
      %v769 = vunpack.c.l.b16 %v757
      %v770 = vunpack.c.l.b16 %v758
      %v771 = vpack.c.b16 %v768, %v767
      %v772 = vpack.c.b16 %v770, %v769
      %v777 = vunpack.c.l.b16 %v759
      %v778 = vunpack.c.h.b16 %v759
      %v779 = vunpack.c.l.b16 %v760
      %v780 = vunpack.c.h.b16 %v760
      %v781 = vunpack.c.l.b16 %v761
      %v782 = vunpack.c.h.b16 %v761
      %v783 = vunpack.c.l.b16 %v762
      %v784 = vunpack.c.h.b16 %v762
      %v785 = vpack.c.b16 %v779, %v777
      %v786 = vpack.c.b16 %v780, %v778
      %v787 = vpack.c.b16 %v783, %v781
      %v788 = vpack.c.b16 %v784, %v782
      %vm793 = vcmask 261120
      %v795 = vsel %vm793, %v771, 0
      %v798 = vsel %vm793, %v772, 0
      %800 = vmatprep.subr.bf16.mxu0 0
      %801 = vmatpush1.bf16.msra.mxu0 0
      %802 = vmatprep.subr.bf16.mxu0 0
      %803 = vmatpush1.bf16.msra.mxu0 0
      %804 = vmatprep.subr.bf16.mxu0 0
      %805 = vmatpush1.bf16.msra.mxu0 0
      %806 = vmatprep.subr.bf16.mxu0 0
      %807 = vmatpush1.bf16.msra.mxu0 0
      %808 = vmatprep.subr.bf16.mxu0 0
      %809 = vmatpush1.bf16.msra.mxu0 0
      %810 = vmatprep.subr.bf16.mxu0 0
      %811 = vmatpush1.bf16.msra.mxu0 0
      %812 = vmatprep.subr.bf16.mxu0 %v788
      %813 = vmatpush1.bf16.msra.mxu0 %v787
      %814 = vmatprep.subr.bf16.mxu0 %v786
      %815 = vmatpush1.bf16.msra.mxu0 %v785
      %816 = vmatprep.subr.bf16.mxu0 0
      %817 = vmatpush2.bf16.msra.mxu0 0
      %818 = vmatprep.subr.bf16.mxu0 0
      %819 = vmatpush2.bf16.msra.mxu0 0
      %820 = vmatprep.subr.bf16.mxu0 0
      %821 = vmatpush2.bf16.msra.mxu0 0
      %822 = vmatprep.subr.bf16.mxu0 0
      %823 = vmatpush2.bf16.msra.mxu0 0
      %824 = vmatprep.subr.bf16.mxu0 0
      %825 = vmatpush2.bf16.msra.mxu0 0
      %826 = vmatprep.subr.bf16.mxu0 0
      %827 = vmatpush2.bf16.msra.mxu0 0
      %828 = vmatprep.subr.bf16.mxu0 0
      %829 = vmatpush2.bf16.msra.mxu0 0
      %830 = vmatprep.subr.bf16.mxu0 0
      %831 = vmatpush2.bf16.msra.mxu0 0
      %832 = vmatprep.mubr.bf16.mxu0 0
      %833 = vmatmul.mubr.bf16.gmra.mxu0 %v795
      %v834 = vpop.f32.mrf.mxu0
      %v835 = vadd.f32 0.0, %v834
      %v836 = vpop.f32.mrf.mxu0
      %v837 = vadd.f32 0.0, %v836
      %v838 = vpop.f32.mrf.mxu0
      %v839 = vadd.f32 0.0, %v838
      %v840 = vpop.f32.mrf.mxu0
      %v841 = vadd.f32 0.0, %v840
      %842 = vmatprep.mubr.bf16.mxu0 0
      %843 = vmatmul.mubr.bf16.gmra.mxu0 %v798
      %v844 = vpop.f32.mrf.mxu0
      %v845 = vadd.f32 0.0, %v844
      %v846 = vpop.f32.mrf.mxu0
      %v847 = vadd.f32 0.0, %v846
      %v848 = vpop.f32.mrf.mxu0
      %v849 = vadd.f32 0.0, %v848
      %v850 = vpop.f32.mrf.mxu0
      %v851 = vadd.f32 0.0, %v850
      %852 = vdwg.mxu0
      %v853 = vpack.c.bf16 %v839, %v835
      %v854 = vpack.c.bf16 %v849, %v845
      %v855 = vpack.c.bf16 %v841, %v837
      %v856 = vpack.c.bf16 %v851, %v847
      %v857 = vld [vmem:[#allocation2] sm:$0xf]
      %v858 = vld [vmem:[#allocation2 + $0x4] sm:$0xf]
      %v859 = vld [vmem:[#allocation2 + $0x8] sm:$0xf]
      %v860 = vld [vmem:[#allocation2 + $0xc] sm:$0xf]
      %v865 = vunpack.c.l.b16 %v857
      %v866 = vunpack.c.l.b16 %v858
      %v867 = vunpack.c.l.b16 %v859
      %v868 = vunpack.c.l.b16 %v860
      %v869 = vpack.c.b16 %v866, %v865
      %v870 = vpack.c.b16 %v868, %v867
      %873 = vmatprep.subr.bf16.mxu0 0
      %874 = vmatpush1.bf16.xpose.msra.mxu0 0
      %875 = vmatprep.subr.bf16.mxu0 0
      %876 = vmatpush1.bf16.xpose.msra.mxu0 0
      %877 = vmatprep.subr.bf16.mxu0 0
      %878 = vmatpush1.bf16.xpose.msra.mxu0 0
      %879 = vmatprep.subr.bf16.mxu0 0
      %880 = vmatpush1.bf16.xpose.msra.mxu0 0
      %881 = vmatprep.subr.bf16.mxu0 0
      %882 = vmatpush1.bf16.xpose.msra.mxu0 0
      %883 = vmatprep.subr.bf16.mxu0 0
      %884 = vmatpush1.bf16.xpose.msra.mxu0 0
      %885 = vmatprep.subr.bf16.mxu0 0
      %886 = vmatpush1.bf16.xpose.msra.mxu0 %v854
      %887 = vmatprep.subr.bf16.mxu0 0
      %888 = vmatpush1.bf16.xpose.msra.mxu0 %v853
      %889 = vmatprep.subr.bf16.mxu0 0
      %890 = vmatpush2.bf16.xpose.msra.mxu0 0
      %891 = vmatprep.subr.bf16.mxu0 0
      %892 = vmatpush2.bf16.xpose.msra.mxu0 0
      %893 = vmatprep.subr.bf16.mxu0 0
      %894 = vmatpush2.bf16.xpose.msra.mxu0 0
      %895 = vmatprep.subr.bf16.mxu0 0
      %896 = vmatpush2.bf16.xpose.msra.mxu0 0
      %897 = vmatprep.subr.bf16.mxu0 0
      %898 = vmatpush2.bf16.xpose.msra.mxu0 0
      %899 = vmatprep.subr.bf16.mxu0 0
      %900 = vmatpush2.bf16.xpose.msra.mxu0 0
      %901 = vmatprep.subr.bf16.mxu0 0
      %902 = vmatpush2.bf16.xpose.msra.mxu0 0
      %903 = vmatprep.subr.bf16.mxu0 0
      %904 = vmatpush2.bf16.xpose.msra.mxu0 0
      %905 = vmatprep.mubr.bf16.mxu0 0
      %906 = vmatmul.mubr.bf16.gmra.mxu0 %v869
      %v907 = vpop.f32.mrf.mxu0
      %v908 = vadd.f32 0.0, %v907
      %v909 = vpop.f32.mrf.mxu0
      %v910 = vpop.f32.mrf.mxu0
      %v911 = vadd.f32 0.0, %v910
      %v912 = vpop.f32.mrf.mxu0
      %913 = vmatprep.mubr.bf16.mxu0 0
      %914 = vmatmul.mubr.bf16.gmra.mxu0 %v870
      %v915 = vpop.f32.mrf.mxu0
      %v916 = vadd.f32 0.0, %v915
      %v917 = vpop.f32.mrf.mxu0
      %v918 = vpop.f32.mrf.mxu0
      %v919 = vadd.f32 0.0, %v918
      %v920 = vpop.f32.mrf.mxu0
      %921 = vdwg.mxu0
      %v922 = vld [vmem:[#allocation3] sm:$0xff]
      %v923 = vld [vmem:[#allocation3 + $0x8] sm:$0xff]
      %v924 = vld [vmem:[#allocation3 + $0x10] sm:$0xff]
      %v925 = vld [vmem:[#allocation3 + $0x18] sm:$0xff]
      %v926 = vsel %vm793, %v908, -inf
      %927 = vmax.xlane.f32.xlu0 %v926
      %v928 = vpop.xlane.xlu0 %927
      %v929 = vsel %vm793, %v911, -inf
      %930 = vmax.xlane.f32.xlu0 %v929
      %v931 = vpop.xlane.xlu0 %930
      %v932 = vsel %vm793, %v916, -inf
      %933 = vmax.xlane.f32.xlu0 %v932
      %v934 = vpop.xlane.xlu0 %933
      %v935 = vsel %vm793, %v919, -inf
      %936 = vmax.xlane.f32.xlu0 %v935
      %v937 = vpop.xlane.xlu0 %936
      %v938 = vmax.f32 %v922, %v928
      %v939 = vmax.f32 %v923, %v931
      %v940 = vmax.f32 %v924, %v934
      %v941 = vmax.f32 %v925, %v937
      %v942 = vsub.f32 %v922, %v938
      %v943 = vsub.f32 %v923, %v939
      %v944 = vsub.f32 %v924, %v940
      %v945 = vsub.f32 %v925, %v941
      %v946 = vmul.f32 %v942, 1.442695
      %v947 = vpow.pop %v946
      %v948 = vmul.f32 %v943, 1.442695
      %v949 = vpow.pop %v948
      %v950 = vmul.f32 %v944, 1.442695
      %v951 = vpow.pop %v950
      %v952 = vmul.f32 %v945, 1.442695
      %v953 = vpow.pop %v952
      %955 = vset.pattern.permute.xlu0 0
      %956 = vperm.xlu0 %955, %v938
      %v957 = vpop.permute.xlu0 %956
      %960 = vset.pattern.permute.xlu0 0
      %961 = vperm.xlu0 %960, %v939
      %v962 = vpop.permute.xlu0 %961
      %965 = vset.pattern.permute.xlu0 0
      %966 = vperm.xlu0 %965, %v940
      %v967 = vpop.permute.xlu0 %966
      %970 = vset.pattern.permute.xlu0 0
      %971 = vperm.xlu0 %970, %v941
      %v972 = vpop.permute.xlu0 %971
      %v974 = vsub.f32 %v908, %v957
      %v975 = vsub.f32 %v911, %v962
      %v976 = vsub.f32 %v916, %v967
      %v977 = vsub.f32 %v919, %v972
      %v978 = vmul.f32 %v974, 1.442695
      %v979 = vpow.pop %v978
      %v980 = vmul.f32 %v975, 1.442695
      %v981 = vpow.pop %v980
      %v982 = vmul.f32 %v976, 1.442695
      %v983 = vpow.pop %v982
      %v984 = vmul.f32 %v977, 1.442695
      %v985 = vpow.pop %v984
      %v986 = vld [vmem:[#allocation4] sm:$0xff]
      %v987 = vld [vmem:[#allocation4 + $0x8] sm:$0xff]
      %v988 = vld [vmem:[#allocation4 + $0x10] sm:$0xff]
      %v989 = vld [vmem:[#allocation4 + $0x18] sm:$0xff]
      %v990 = vmul.f32 %v947, %v986
      %v991 = vmul.f32 %v949, %v987
      %v992 = vmul.f32 %v951, %v988
      %v993 = vmul.f32 %v953, %v989
      %v994 = vsel %vm793, %v979, 0.0
      %995 = vadd.xlane.f32.xlu0 %v994
      %v996 = vpop.xlane.xlu0 %995
      %v997 = vsel %vm793, %v981, 0.0
      %998 = vadd.xlane.f32.xlu0 %v997
      %v999 = vpop.xlane.xlu0 %998
      %v1000 = vsel %vm793, %v983, 0.0
      %1001 = vadd.xlane.f32.xlu0 %v1000
      %v1002 = vpop.xlane.xlu0 %1001
      %v1003 = vsel %vm793, %v985, 0.0
      %1004 = vadd.xlane.f32.xlu0 %v1003
      %v1005 = vpop.xlane.xlu0 %1004
      %v1006 = vadd.f32 %v990, %v996
      %v1007 = vadd.f32 %v991, %v999
      %v1008 = vadd.f32 %v992, %v1002
      %v1009 = vadd.f32 %v993, %v1005
      %vm1010 = vcmask 7168
      %1011 = vst.msk [vmem:[#allocation4] sm:$0xff] %vm1010, %v1006
      %1012 = vst.msk [vmem:[#allocation4 + $0x8] sm:$0xff] %vm1010, %v1007
      %1013 = vst.msk [vmem:[#allocation4 + $0x10] sm:$0xff] %vm1010, %v1008
      %1014 = vst.msk [vmem:[#allocation4 + $0x18] sm:$0xff] %vm1010, %v1009
      %v1015 = vld [vmem:[#allocation5] sm:$0xff]
      %v1016 = vld [vmem:[#allocation5 + $0x8] sm:$0xff]
      %v1017 = vld [vmem:[#allocation5 + $0x10] sm:$0xff]
      %v1018 = vld [vmem:[#allocation5 + $0x18] sm:$0xff]
      %1020 = vset.pattern.permute.xlu0 0
      %1021 = vperm.xlu0 %1020, %v947
      %v1022 = vpop.permute.xlu0 %1021
      %1025 = vset.pattern.permute.xlu0 0
      %1026 = vperm.xlu0 %1025, %v949
      %v1027 = vpop.permute.xlu0 %1026
      %1030 = vset.pattern.permute.xlu0 0
      %1031 = vperm.xlu0 %1030, %v951
      %v1032 = vpop.permute.xlu0 %1031
      %1035 = vset.pattern.permute.xlu0 0
      %1036 = vperm.xlu0 %1035, %v953
      %v1037 = vpop.permute.xlu0 %1036
      %v1039 = vmul.f32 %v1022, %v1015
      %v1040 = vmul.f32 %v1027, %v1016
      %v1041 = vmul.f32 %v1032, %v1017
      %v1042 = vmul.f32 %v1037, %v1018
      %v1043 = vpack.c.bf16 %v981, %v979
      %v1044 = vpack.c.bf16 %v985, %v983
      %v1046 = vsel %vm793, %v1043, 0
      %v1049 = vsel %vm793, %v1044, 0
      %1051 = vmatprep.subr.bf16.mxu0 0
      %1052 = vmatpush1.bf16.msra.mxu0 0
      %1053 = vmatprep.subr.bf16.mxu0 0
      %1054 = vmatpush1.bf16.msra.mxu0 0
      %1055 = vmatprep.subr.bf16.mxu0 0
      %1056 = vmatpush1.bf16.msra.mxu0 0
      %1057 = vmatprep.subr.bf16.mxu0 0
      %1058 = vmatpush1.bf16.msra.mxu0 0
      %1059 = vmatprep.subr.bf16.mxu0 0
      %1060 = vmatpush1.bf16.msra.mxu0 0
      %1061 = vmatprep.subr.bf16.mxu0 0
      %1062 = vmatpush1.bf16.msra.mxu0 0
      %1063 = vmatprep.subr.bf16.mxu0 0
      %1064 = vmatpush1.bf16.msra.mxu0 %v856
      %1065 = vmatprep.subr.bf16.mxu0 0
      %1066 = vmatpush1.bf16.msra.mxu0 %v855
      %1067 = vmatprep.subr.bf16.mxu0 0
      %1068 = vmatpush2.bf16.msra.mxu0 0
      %1069 = vmatprep.subr.bf16.mxu0 0
      %1070 = vmatpush2.bf16.msra.mxu0 0
      %1071 = vmatprep.subr.bf16.mxu0 0
      %1072 = vmatpush2.bf16.msra.mxu0 0
      %1073 = vmatprep.subr.bf16.mxu0 0
      %1074 = vmatpush2.bf16.msra.mxu0 0
      %1075 = vmatprep.subr.bf16.mxu0 0
      %1076 = vmatpush2.bf16.msra.mxu0 0
      %1077 = vmatprep.subr.bf16.mxu0 0
      %1078 = vmatpush2.bf16.msra.mxu0 0
      %1079 = vmatprep.subr.bf16.mxu0 0
      %1080 = vmatpush2.bf16.msra.mxu0 0
      %1081 = vmatprep.subr.bf16.mxu0 0
      %1082 = vmatpush2.bf16.msra.mxu0 0
      %1083 = vmatprep.mubr.bf16.mxu0 0
      %1084 = vmatmul.mubr.bf16.gmra.mxu0 %v1046
      %v1085 = vpop.f32.mrf.mxu0
      %v1086 = vadd.f32 0.0, %v1085
      %v1087 = vpop.f32.mrf.mxu0
      %v1088 = vpop.f32.mrf.mxu0
      %v1089 = vadd.f32 0.0, %v1088
      %v1090 = vpop.f32.mrf.mxu0
      %1091 = vmatprep.mubr.bf16.mxu0 0
      %1092 = vmatmul.mubr.bf16.gmra.mxu0 %v1049
      %v1093 = vpop.f32.mrf.mxu0
      %v1094 = vadd.f32 0.0, %v1093
      %v1095 = vpop.f32.mrf.mxu0
      %v1096 = vpop.f32.mrf.mxu0
      %v1097 = vadd.f32 0.0, %v1096
      %v1098 = vpop.f32.mrf.mxu0
      %1099 = vdwg.mxu0
      %v1100 = vadd.f32 %v1039, %v1086
      %v1101 = vadd.f32 %v1040, %v1089
      %v1102 = vadd.f32 %v1041, %v1094
      %v1103 = vadd.f32 %v1042, %v1097
      %1104 = vst [vmem:[#allocation5] sm:$0xff] %v1100
      %1105 = vst [vmem:[#allocation5 + $0x8] sm:$0xff] %v1101
      %1106 = vst [vmem:[#allocation5 + $0x10] sm:$0xff] %v1102
      %1107 = vst [vmem:[#allocation5 + $0x18] sm:$0xff] %v1103
      %1108 = vst.msk [vmem:[#allocation3] sm:$0xff] %vm1010, %v938
      %1109 = vst.msk [vmem:[#allocation3 + $0x8] sm:$0xff] %vm1010, %v939
      %1110 = vst.msk [vmem:[#allocation3 + $0x10] sm:$0xff] %vm1010, %v940
      %1111 = vst.msk [vmem:[#allocation3 + $0x18] sm:$0xff] %vm1010, %v941
      %s1112 = scalar_lea.vmem %s3, 32
      %v1113 = vld [vmem:[%s1112] sm:$0xff]
      %v1114 = vld [vmem:[%s1112 + $0x8] sm:$0xff]
      %v1115 = vld [vmem:[%s1112 + $0x10] sm:$0xff]
      %v1116 = vld [vmem:[%s1112 + $0x18] sm:$0xff]
      %v1121 = vunpack.c.l.b16 %v1113
      %v1122 = vunpack.c.h.b16 %v1113
      %v1123 = vunpack.c.l.b16 %v1114
      %v1124 = vunpack.c.h.b16 %v1114
      %v1125 = vunpack.c.l.b16 %v1115
      %v1126 = vunpack.c.h.b16 %v1115
      %v1127 = vunpack.c.l.b16 %v1116
      %v1128 = vunpack.c.h.b16 %v1116
      %v1129 = vpack.c.b16 %v1123, %v1121
      %v1130 = vpack.c.b16 %v1124, %v1122
      %v1131 = vpack.c.b16 %v1127, %v1125
      %v1132 = vpack.c.b16 %v1128, %v1126
      %1137 = vmatprep.subr.bf16.mxu0 0
      %1138 = vmatpush1.bf16.msra.mxu0 0
      %1139 = vmatprep.subr.bf16.mxu0 0
      %1140 = vmatpush1.bf16.msra.mxu0 0
      %1141 = vmatprep.subr.bf16.mxu0 0
      %1142 = vmatpush1.bf16.msra.mxu0 0
      %1143 = vmatprep.subr.bf16.mxu0 0
      %1144 = vmatpush1.bf16.msra.mxu0 0
      %1145 = vmatprep.subr.bf16.mxu0 0
      %1146 = vmatpush1.bf16.msra.mxu0 0
      %1147 = vmatprep.subr.bf16.mxu0 0
      %1148 = vmatpush1.bf16.msra.mxu0 0
      %1149 = vmatprep.subr.bf16.mxu0 %v1132
      %1150 = vmatpush1.bf16.msra.mxu0 %v1131
      %1151 = vmatprep.subr.bf16.mxu0 %v1130
      %1152 = vmatpush1.bf16.msra.mxu0 %v1129
      %1153 = vmatprep.subr.bf16.mxu0 0
      %1154 = vmatpush2.bf16.msra.mxu0 0
      %1155 = vmatprep.subr.bf16.mxu0 0
      %1156 = vmatpush2.bf16.msra.mxu0 0
      %1157 = vmatprep.subr.bf16.mxu0 0
      %1158 = vmatpush2.bf16.msra.mxu0 0
      %1159 = vmatprep.subr.bf16.mxu0 0
      %1160 = vmatpush2.bf16.msra.mxu0 0
      %1161 = vmatprep.subr.bf16.mxu0 0
      %1162 = vmatpush2.bf16.msra.mxu0 0
      %1163 = vmatprep.subr.bf16.mxu0 0
      %1164 = vmatpush2.bf16.msra.mxu0 0
      %1165 = vmatprep.subr.bf16.mxu0 0
      %1166 = vmatpush2.bf16.msra.mxu0 0
      %1167 = vmatprep.subr.bf16.mxu0 0
      %1168 = vmatpush2.bf16.msra.mxu0 0
      %1169 = vmatprep.mubr.bf16.mxu0 0
      %1170 = vmatmul.mubr.bf16.gmra.mxu0 %v795
      %v1171 = vpop.f32.mrf.mxu0
      %v1172 = vadd.f32 0.0, %v1171
      %v1173 = vpop.f32.mrf.mxu0
      %v1174 = vadd.f32 0.0, %v1173
      %v1175 = vpop.f32.mrf.mxu0
      %v1176 = vadd.f32 0.0, %v1175
      %v1177 = vpop.f32.mrf.mxu0
      %v1178 = vadd.f32 0.0, %v1177
      %1179 = vmatprep.mubr.bf16.mxu0 0
      %1180 = vmatmul.mubr.bf16.gmra.mxu0 %v798
      %v1181 = vpop.f32.mrf.mxu0
      %v1182 = vadd.f32 0.0, %v1181
      %v1183 = vpop.f32.mrf.mxu0
      %v1184 = vadd.f32 0.0, %v1183
      %v1185 = vpop.f32.mrf.mxu0
      %v1186 = vadd.f32 0.0, %v1185
      %v1187 = vpop.f32.mrf.mxu0
      %v1188 = vadd.f32 0.0, %v1187
      %1189 = vdwg.mxu0
      %v1190 = vpack.c.bf16 %v1176, %v1172
      %v1191 = vpack.c.bf16 %v1186, %v1182
      %v1192 = vpack.c.bf16 %v1178, %v1174
      %v1193 = vpack.c.bf16 %v1188, %v1184
      %s1194 = scalar_lea.vmem [#allocation2], 16
      %v1195 = vld [vmem:[%s1194] sm:$0xf]
      %v1196 = vld [vmem:[%s1194 + $0x4] sm:$0xf]
      %v1197 = vld [vmem:[%s1194 + $0x8] sm:$0xf]
      %v1198 = vld [vmem:[%s1194 + $0xc] sm:$0xf]
      %v1203 = vunpack.c.l.b16 %v1195
      %v1204 = vunpack.c.l.b16 %v1196
      %v1205 = vunpack.c.l.b16 %v1197
      %v1206 = vunpack.c.l.b16 %v1198
      %v1207 = vpack.c.b16 %v1204, %v1203
      %v1208 = vpack.c.b16 %v1206, %v1205
      %1211 = vmatprep.subr.bf16.mxu0 0
      %1212 = vmatpush1.bf16.xpose.msra.mxu0 0
      %1213 = vmatprep.subr.bf16.mxu0 0
      %1214 = vmatpush1.bf16.xpose.msra.mxu0 0
      %1215 = vmatprep.subr.bf16.mxu0 0
      %1216 = vmatpush1.bf16.xpose.msra.mxu0 0
      %1217 = vmatprep.subr.bf16.mxu0 0
      %1218 = vmatpush1.bf16.xpose.msra.mxu0 0
      %1219 = vmatprep.subr.bf16.mxu0 0
      %1220 = vmatpush1.bf16.xpose.msra.mxu0 0
      %1221 = vmatprep.subr.bf16.mxu0 0
      %1222 = vmatpush1.bf16.xpose.msra.mxu0 0
      %1223 = vmatprep.subr.bf16.mxu0 0
      %1224 = vmatpush1.bf16.xpose.msra.mxu0 %v1191
      %1225 = vmatprep.subr.bf16.mxu0 0
      %1226 = vmatpush1.bf16.xpose.msra.mxu0 %v1190
      %1227 = vmatprep.subr.bf16.mxu0 0
      %1228 = vmatpush2.bf16.xpose.msra.mxu0 0
      %1229 = vmatprep.subr.bf16.mxu0 0
      %1230 = vmatpush2.bf16.xpose.msra.mxu0 0
      %1231 = vmatprep.subr.bf16.mxu0 0
      %1232 = vmatpush2.bf16.xpose.msra.mxu0 0
      %1233 = vmatprep.subr.bf16.mxu0 0
      %1234 = vmatpush2.bf16.xpose.msra.mxu0 0
      %1235 = vmatprep.subr.bf16.mxu0 0
      %1236 = vmatpush2.bf16.xpose.msra.mxu0 0
      %1237 = vmatprep.subr.bf16.mxu0 0
      %1238 = vmatpush2.bf16.xpose.msra.mxu0 0
      %1239 = vmatprep.subr.bf16.mxu0 0
      %1240 = vmatpush2.bf16.xpose.msra.mxu0 0
      %1241 = vmatprep.subr.bf16.mxu0 0
      %1242 = vmatpush2.bf16.xpose.msra.mxu0 0
      %1243 = vmatprep.mubr.bf16.mxu0 0
      %1244 = vmatmul.mubr.bf16.gmra.mxu0 %v1207
      %v1245 = vpop.f32.mrf.mxu0
      %v1246 = vadd.f32 0.0, %v1245
      %v1247 = vpop.f32.mrf.mxu0
      %v1248 = vpop.f32.mrf.mxu0
      %v1249 = vadd.f32 0.0, %v1248
      %v1250 = vpop.f32.mrf.mxu0
      %1251 = vmatprep.mubr.bf16.mxu0 0
      %1252 = vmatmul.mubr.bf16.gmra.mxu0 %v1208
      %v1253 = vpop.f32.mrf.mxu0
      %v1254 = vadd.f32 0.0, %v1253
      %v1255 = vpop.f32.mrf.mxu0
      %v1256 = vpop.f32.mrf.mxu0
      %v1257 = vadd.f32 0.0, %v1256
      %v1258 = vpop.f32.mrf.mxu0
      %1259 = vdwg.mxu0
      %s1260 = scalar_lea.vmem [#allocation3], 32
      %v1261 = vld [vmem:[%s1260] sm:$0xff]
      %v1262 = vld [vmem:[%s1260 + $0x8] sm:$0xff]
      %v1263 = vld [vmem:[%s1260 + $0x10] sm:$0xff]
      %v1264 = vld [vmem:[%s1260 + $0x18] sm:$0xff]
      %v1265 = vsel %vm793, %v1246, -inf
      %1266 = vmax.xlane.f32.xlu0 %v1265
      %v1267 = vpop.xlane.xlu0 %1266
      %v1268 = vsel %vm793, %v1249, -inf
      %1269 = vmax.xlane.f32.xlu0 %v1268
      %v1270 = vpop.xlane.xlu0 %1269
      %v1271 = vsel %vm793, %v1254, -inf
      %1272 = vmax.xlane.f32.xlu0 %v1271
      %v1273 = vpop.xlane.xlu0 %1272
      %v1274 = vsel %vm793, %v1257, -inf
      %1275 = vmax.xlane.f32.xlu0 %v1274
      %v1276 = vpop.xlane.xlu0 %1275
      %v1277 = vmax.f32 %v1261, %v1267
      %v1278 = vmax.f32 %v1262, %v1270
      %v1279 = vmax.f32 %v1263, %v1273
      %v1280 = vmax.f32 %v1264, %v1276
      %v1281 = vsub.f32 %v1261, %v1277
      %v1282 = vsub.f32 %v1262, %v1278
      %v1283 = vsub.f32 %v1263, %v1279
      %v1284 = vsub.f32 %v1264, %v1280
      %v1285 = vmul.f32 %v1281, 1.442695
      %v1286 = vpow.pop %v1285
      %v1287 = vmul.f32 %v1282, 1.442695
      %v1288 = vpow.pop %v1287
      %v1289 = vmul.f32 %v1283, 1.442695
      %v1290 = vpow.pop %v1289
      %v1291 = vmul.f32 %v1284, 1.442695
      %v1292 = vpow.pop %v1291
      %1294 = vset.pattern.permute.xlu0 0
      %1295 = vperm.xlu0 %1294, %v1277
      %v1296 = vpop.permute.xlu0 %1295
      %1299 = vset.pattern.permute.xlu0 0
      %1300 = vperm.xlu0 %1299, %v1278
      %v1301 = vpop.permute.xlu0 %1300
      %1304 = vset.pattern.permute.xlu0 0
      %1305 = vperm.xlu0 %1304, %v1279
      %v1306 = vpop.permute.xlu0 %1305
      %1309 = vset.pattern.permute.xlu0 0
      %1310 = vperm.xlu0 %1309, %v1280
      %v1311 = vpop.permute.xlu0 %1310
      %v1313 = vsub.f32 %v1246, %v1296
      %v1314 = vsub.f32 %v1249, %v1301
      %v1315 = vsub.f32 %v1254, %v1306
      %v1316 = vsub.f32 %v1257, %v1311
      %v1317 = vmul.f32 %v1313, 1.442695
      %v1318 = vpow.pop %v1317
      %v1319 = vmul.f32 %v1314, 1.442695
      %v1320 = vpow.pop %v1319
      %v1321 = vmul.f32 %v1315, 1.442695
      %v1322 = vpow.pop %v1321
      %v1323 = vmul.f32 %v1316, 1.442695
      %v1324 = vpow.pop %v1323
      %s1325 = scalar_lea.vmem [#allocation4], 32
      %v1326 = vld [vmem:[%s1325] sm:$0xff]
      %v1327 = vld [vmem:[%s1325 + $0x8] sm:$0xff]
      %v1328 = vld [vmem:[%s1325 + $0x10] sm:$0xff]
      %v1329 = vld [vmem:[%s1325 + $0x18] sm:$0xff]
      %v1330 = vmul.f32 %v1286, %v1326
      %v1331 = vmul.f32 %v1288, %v1327
      %v1332 = vmul.f32 %v1290, %v1328
      %v1333 = vmul.f32 %v1292, %v1329
      %v1334 = vsel %vm793, %v1318, 0.0
      %1335 = vadd.xlane.f32.xlu0 %v1334
      %v1336 = vpop.xlane.xlu0 %1335
      %v1337 = vsel %vm793, %v1320, 0.0
      %1338 = vadd.xlane.f32.xlu0 %v1337
      %v1339 = vpop.xlane.xlu0 %1338
      %v1340 = vsel %vm793, %v1322, 0.0
      %1341 = vadd.xlane.f32.xlu0 %v1340
      %v1342 = vpop.xlane.xlu0 %1341
      %v1343 = vsel %vm793, %v1324, 0.0
      %1344 = vadd.xlane.f32.xlu0 %v1343
      %v1345 = vpop.xlane.xlu0 %1344
      %v1346 = vadd.f32 %v1330, %v1336
      %v1347 = vadd.f32 %v1331, %v1339
      %v1348 = vadd.f32 %v1332, %v1342
      %v1349 = vadd.f32 %v1333, %v1345
      %1350 = vst.msk [vmem:[%s1325] sm:$0xff] %vm1010, %v1346
      %1351 = vst.msk [vmem:[%s1325 + $0x8] sm:$0xff] %vm1010, %v1347
      %1352 = vst.msk [vmem:[%s1325 + $0x10] sm:$0xff] %vm1010, %v1348
      %1353 = vst.msk [vmem:[%s1325 + $0x18] sm:$0xff] %vm1010, %v1349
      %s1354 = scalar_lea.vmem [#allocation5], 32
      %v1355 = vld [vmem:[%s1354] sm:$0xff]
      %v1356 = vld [vmem:[%s1354 + $0x8] sm:$0xff]
      %v1357 = vld [vmem:[%s1354 + $0x10] sm:$0xff]
      %v1358 = vld [vmem:[%s1354 + $0x18] sm:$0xff]
      %1360 = vset.pattern.permute.xlu0 0
      %1361 = vperm.xlu0 %1360, %v1286
      %v1362 = vpop.permute.xlu0 %1361
      %1365 = vset.pattern.permute.xlu0 0
      %1366 = vperm.xlu0 %1365, %v1288
      %v1367 = vpop.permute.xlu0 %1366
      %1370 = vset.pattern.permute.xlu0 0
      %1371 = vperm.xlu0 %1370, %v1290
      %v1372 = vpop.permute.xlu0 %1371
      %1375 = vset.pattern.permute.xlu0 0
      %1376 = vperm.xlu0 %1375, %v1292
      %v1377 = vpop.permute.xlu0 %1376
      %v1379 = vmul.f32 %v1362, %v1355
      %v1380 = vmul.f32 %v1367, %v1356
      %v1381 = vmul.f32 %v1372, %v1357
      %v1382 = vmul.f32 %v1377, %v1358
      %v1383 = vpack.c.bf16 %v1320, %v1318
      %v1384 = vpack.c.bf16 %v1324, %v1322
      %v1386 = vsel %vm793, %v1383, 0
      %v1389 = vsel %vm793, %v1384, 0
      %1391 = vmatprep.subr.bf16.mxu0 0
      %1392 = vmatpush1.bf16.msra.mxu0 0
      %1393 = vmatprep.subr.bf16.mxu0 0
      %1394 = vmatpush1.bf16.msra.mxu0 0
      %1395 = vmatprep.subr.bf16.mxu0 0
      %1396 = vmatpush1.bf16.msra.mxu0 0
      %1397 = vmatprep.subr.bf16.mxu0 0
      %1398 = vmatpush1.bf16.msra.mxu0 0
      %1399 = vmatprep.subr.bf16.mxu0 0
      %1400 = vmatpush1.bf16.msra.mxu0 0
      %1401 = vmatprep.subr.bf16.mxu0 0
      %1402 = vmatpush1.bf16.msra.mxu0 0
      %1403 = vmatprep.subr.bf16.mxu0 0
      %1404 = vmatpush1.bf16.msra.mxu0 %v1193
      %1405 = vmatprep.subr.bf16.mxu0 0
      %1406 = vmatpush1.bf16.msra.mxu0 %v1192
      %1407 = vmatprep.subr.bf16.mxu0 0
      %1408 = vmatpush2.bf16.msra.mxu0 0
      %1409 = vmatprep.subr.bf16.mxu0 0
      %1410 = vmatpush2.bf16.msra.mxu0 0
      %1411 = vmatprep.subr.bf16.mxu0 0
      %1412 = vmatpush2.bf16.msra.mxu0 0
      %1413 = vmatprep.subr.bf16.mxu0 0
      %1414 = vmatpush2.bf16.msra.mxu0 0
      %1415 = vmatprep.subr.bf16.mxu0 0
      %1416 = vmatpush2.bf16.msra.mxu0 0
      %1417 = vmatprep.subr.bf16.mxu0 0
      %1418 = vmatpush2.bf16.msra.mxu0 0
      %1419 = vmatprep.subr.bf16.mxu0 0
      %1420 = vmatpush2.bf16.msra.mxu0 0
      %1421 = vmatprep.subr.bf16.mxu0 0
      %1422 = vmatpush2.bf16.msra.mxu0 0
      %1423 = vmatprep.mubr.bf16.mxu0 0
      %1424 = vmatmul.mubr.bf16.gmra.mxu0 %v1386
      %v1425 = vpop.f32.mrf.mxu0
      %v1426 = vadd.f32 0.0, %v1425
      %v1427 = vpop.f32.mrf.mxu0
      %v1428 = vpop.f32.mrf.mxu0
      %v1429 = vadd.f32 0.0, %v1428
      %v1430 = vpop.f32.mrf.mxu0
      %1431 = vmatprep.mubr.bf16.mxu0 0
      %1432 = vmatmul.mubr.bf16.gmra.mxu0 %v1389
      %v1433 = vpop.f32.mrf.mxu0
      %v1434 = vadd.f32 0.0, %v1433
      %v1435 = vpop.f32.mrf.mxu0
      %v1436 = vpop.f32.mrf.mxu0
      %v1437 = vadd.f32 0.0, %v1436
      %v1438 = vpop.f32.mrf.mxu0
      %1439 = vdwg.mxu0
      %v1440 = vadd.f32 %v1379, %v1426
      %v1441 = vadd.f32 %v1380, %v1429
      %v1442 = vadd.f32 %v1381, %v1434
      %v1443 = vadd.f32 %v1382, %v1437
      %1444 = vst [vmem:[%s1354] sm:$0xff] %v1440
      %1445 = vst [vmem:[%s1354 + $0x8] sm:$0xff] %v1441
      %1446 = vst [vmem:[%s1354 + $0x10] sm:$0xff] %v1442
      %1447 = vst [vmem:[%s1354 + $0x18] sm:$0xff] %v1443
      %1448 = vst.msk [vmem:[%s1260] sm:$0xff] %vm1010, %v1277
      %1449 = vst.msk [vmem:[%s1260 + $0x8] sm:$0xff] %vm1010, %v1278
      %1450 = vst.msk [vmem:[%s1260 + $0x10] sm:$0xff] %vm1010, %v1279
      %1451 = vst.msk [vmem:[%s1260 + $0x18] sm:$0xff] %vm1010, %v1280
      %s1452 = scalar_lea.vmem %s3, 64
      %v1453 = vld [vmem:[%s1452] sm:$0xff]
      %v1454 = vld [vmem:[%s1452 + $0x8] sm:$0xff]
      %v1455 = vld [vmem:[%s1452 + $0x10] sm:$0xff]
      %v1456 = vld [vmem:[%s1452 + $0x18] sm:$0xff]
      %v1461 = vunpack.c.l.b16 %v1453
      %v1462 = vunpack.c.h.b16 %v1453
      %v1463 = vunpack.c.l.b16 %v1454
      %v1464 = vunpack.c.h.b16 %v1454
      %v1465 = vunpack.c.l.b16 %v1455
      %v1466 = vunpack.c.h.b16 %v1455
      %v1467 = vunpack.c.l.b16 %v1456
      %v1468 = vunpack.c.h.b16 %v1456
      %v1469 = vpack.c.b16 %v1463, %v1461
      %v1470 = vpack.c.b16 %v1464, %v1462
      %v1471 = vpack.c.b16 %v1467, %v1465
      %v1472 = vpack.c.b16 %v1468, %v1466
      %1477 = vmatprep.subr.bf16.mxu0 0
      %1478 = vmatpush1.bf16.msra.mxu0 0
      %1479 = vmatprep.subr.bf16.mxu0 0
      %1480 = vmatpush1.bf16.msra.mxu0 0
      %1481 = vmatprep.subr.bf16.mxu0 0
      %1482 = vmatpush1.bf16.msra.mxu0 0
      %1483 = vmatprep.subr.bf16.mxu0 0
      %1484 = vmatpush1.bf16.msra.mxu0 0
      %1485 = vmatprep.subr.bf16.mxu0 0
      %1486 = vmatpush1.bf16.msra.mxu0 0
      %1487 = vmatprep.subr.bf16.mxu0 0
      %1488 = vmatpush1.bf16.msra.mxu0 0
      %1489 = vmatprep.subr.bf16.mxu0 %v1472
      %1490 = vmatpush1.bf16.msra.mxu0 %v1471
      %1491 = vmatprep.subr.bf16.mxu0 %v1470
      %1492 = vmatpush1.bf16.msra.mxu0 %v1469
      %1493 = vmatprep.subr.bf16.mxu0 0
      %1494 = vmatpush2.bf16.msra.mxu0 0
      %1495 = vmatprep.subr.bf16.mxu0 0
      %1496 = vmatpush2.bf16.msra.mxu0 0
      %1497 = vmatprep.subr.bf16.mxu0 0
      %1498 = vmatpush2.bf16.msra.mxu0 0
      %1499 = vmatprep.subr.bf16.mxu0 0
      %1500 = vmatpush2.bf16.msra.mxu0 0
      %1501 = vmatprep.subr.bf16.mxu0 0
      %1502 = vmatpush2.bf16.msra.mxu0 0
      %1503 = vmatprep.subr.bf16.mxu0 0
      %1504 = vmatpush2.bf16.msra.mxu0 0
      %1505 = vmatprep.subr.bf16.mxu0 0
      %1506 = vmatpush2.bf16.msra.mxu0 0
      %1507 = vmatprep.subr.bf16.mxu0 0
      %1508 = vmatpush2.bf16.msra.mxu0 0
      %1509 = vmatprep.mubr.bf16.mxu0 0
      %1510 = vmatmul.mubr.bf16.gmra.mxu0 %v795
      %v1511 = vpop.f32.mrf.mxu0
      %v1512 = vadd.f32 0.0, %v1511
      %v1513 = vpop.f32.mrf.mxu0
      %v1514 = vadd.f32 0.0, %v1513
      %v1515 = vpop.f32.mrf.mxu0
      %v1516 = vadd.f32 0.0, %v1515
      %v1517 = vpop.f32.mrf.mxu0
      %v1518 = vadd.f32 0.0, %v1517
      %1519 = vmatprep.mubr.bf16.mxu0 0
      %1520 = vmatmul.mubr.bf16.gmra.mxu0 %v798
      %v1521 = vpop.f32.mrf.mxu0
      %v1522 = vadd.f32 0.0, %v1521
      %v1523 = vpop.f32.mrf.mxu0
      %v1524 = vadd.f32 0.0, %v1523
      %v1525 = vpop.f32.mrf.mxu0
      %v1526 = vadd.f32 0.0, %v1525
      %v1527 = vpop.f32.mrf.mxu0
      %v1528 = vadd.f32 0.0, %v1527
      %1529 = vdwg.mxu0
      %v1530 = vpack.c.bf16 %v1516, %v1512
      %v1531 = vpack.c.bf16 %v1526, %v1522
      %v1532 = vpack.c.bf16 %v1518, %v1514
      %v1533 = vpack.c.bf16 %v1528, %v1524
      %s1534 = scalar_lea.vmem [#allocation2], 32
      %v1535 = vld [vmem:[%s1534] sm:$0xf]
      %v1536 = vld [vmem:[%s1534 + $0x4] sm:$0xf]
      %v1537 = vld [vmem:[%s1534 + $0x8] sm:$0xf]
      %v1538 = vld [vmem:[%s1534 + $0xc] sm:$0xf]
      %v1543 = vunpack.c.l.b16 %v1535
      %v1544 = vunpack.c.l.b16 %v1536
      %v1545 = vunpack.c.l.b16 %v1537
      %v1546 = vunpack.c.l.b16 %v1538
      %v1547 = vpack.c.b16 %v1544, %v1543
      %v1548 = vpack.c.b16 %v1546, %v1545
      %1551 = vmatprep.subr.bf16.mxu0 0
      %1552 = vmatpush1.bf16.xpose.msra.mxu0 0
      %1553 = vmatprep.subr.bf16.mxu0 0
      %1554 = vmatpush1.bf16.xpose.msra.mxu0 0
      %1555 = vmatprep.subr.bf16.mxu0 0
      %1556 = vmatpush1.bf16.xpose.msra.mxu0 0
      %1557 = vmatprep.subr.bf16.mxu0 0
      %1558 = vmatpush1.bf16.xpose.msra.mxu0 0
      %1559 = vmatprep.subr.bf16.mxu0 0
      %1560 = vmatpush1.bf16.xpose.msra.mxu0 0
      %1561 = vmatprep.subr.bf16.mxu0 0
      %1562 = vmatpush1.bf16.xpose.msra.mxu0 0
      %1563 = vmatprep.subr.bf16.mxu0 0
      %1564 = vmatpush1.bf16.xpose.msra.mxu0 %v1531
      %1565 = vmatprep.subr.bf16.mxu0 0
      %1566 = vmatpush1.bf16.xpose.msra.mxu0 %v1530
      %1567 = vmatprep.subr.bf16.mxu0 0
      %1568 = vmatpush2.bf16.xpose.msra.mxu0 0
      %1569 = vmatprep.subr.bf16.mxu0 0
      %1570 = vmatpush2.bf16.xpose.msra.mxu0 0
      %1571 = vmatprep.subr.bf16.mxu0 0
      %1572 = vmatpush2.bf16.xpose.msra.mxu0 0
      %1573 = vmatprep.subr.bf16.mxu0 0
      %1574 = vmatpush2.bf16.xpose.msra.mxu0 0
      %1575 = vmatprep.subr.bf16.mxu0 0
      %1576 = vmatpush2.bf16.xpose.msra.mxu0 0
      %1577 = vmatprep.subr.bf16.mxu0 0
      %1578 = vmatpush2.bf16.xpose.msra.mxu0 0
      %1579 = vmatprep.subr.bf16.mxu0 0
      %1580 = vmatpush2.bf16.xpose.msra.mxu0 0
      %1581 = vmatprep.subr.bf16.mxu0 0
      %1582 = vmatpush2.bf16.xpose.msra.mxu0 0
      %1583 = vmatprep.mubr.bf16.mxu0 0
      %1584 = vmatmul.mubr.bf16.gmra.mxu0 %v1547
      %v1585 = vpop.f32.mrf.mxu0
      %v1586 = vadd.f32 0.0, %v1585
      %v1587 = vpop.f32.mrf.mxu0
      %v1588 = vpop.f32.mrf.mxu0
      %v1589 = vadd.f32 0.0, %v1588
      %v1590 = vpop.f32.mrf.mxu0
      %1591 = vmatprep.mubr.bf16.mxu0 0
      %1592 = vmatmul.mubr.bf16.gmra.mxu0 %v1548
      %v1593 = vpop.f32.mrf.mxu0
      %v1594 = vadd.f32 0.0, %v1593
      %v1595 = vpop.f32.mrf.mxu0
      %v1596 = vpop.f32.mrf.mxu0
      %v1597 = vadd.f32 0.0, %v1596
      %v1598 = vpop.f32.mrf.mxu0
      %1599 = vdwg.mxu0
      %s1600 = scalar_lea.vmem [#allocation3], 64
      %v1601 = vld [vmem:[%s1600] sm:$0xff]
      %v1602 = vld [vmem:[%s1600 + $0x8] sm:$0xff]
      %v1603 = vld [vmem:[%s1600 + $0x10] sm:$0xff]
      %v1604 = vld [vmem:[%s1600 + $0x18] sm:$0xff]
      %v1605 = vsel %vm793, %v1586, -inf
      %1606 = vmax.xlane.f32.xlu0 %v1605
      %v1607 = vpop.xlane.xlu0 %1606
      %v1608 = vsel %vm793, %v1589, -inf
      %1609 = vmax.xlane.f32.xlu0 %v1608
      %v1610 = vpop.xlane.xlu0 %1609
      %v1611 = vsel %vm793, %v1594, -inf
      %1612 = vmax.xlane.f32.xlu0 %v1611
      %v1613 = vpop.xlane.xlu0 %1612
      %v1614 = vsel %vm793, %v1597, -inf
      %1615 = vmax.xlane.f32.xlu0 %v1614
      %v1616 = vpop.xlane.xlu0 %1615
      %v1617 = vmax.f32 %v1601, %v1607
      %v1618 = vmax.f32 %v1602, %v1610
      %v1619 = vmax.f32 %v1603, %v1613
      %v1620 = vmax.f32 %v1604, %v1616
      %v1621 = vsub.f32 %v1601, %v1617
      %v1622 = vsub.f32 %v1602, %v1618
      %v1623 = vsub.f32 %v1603, %v1619
      %v1624 = vsub.f32 %v1604, %v1620
      %v1625 = vmul.f32 %v1621, 1.442695
      %v1626 = vpow.pop %v1625
      %v1627 = vmul.f32 %v1622, 1.442695
      %v1628 = vpow.pop %v1627
      %v1629 = vmul.f32 %v1623, 1.442695
      %v1630 = vpow.pop %v1629
      %v1631 = vmul.f32 %v1624, 1.442695
      %v1632 = vpow.pop %v1631
      %1634 = vset.pattern.permute.xlu0 0
      %1635 = vperm.xlu0 %1634, %v1617
      %v1636 = vpop.permute.xlu0 %1635
      %1639 = vset.pattern.permute.xlu0 0
      %1640 = vperm.xlu0 %1639, %v1618
      %v1641 = vpop.permute.xlu0 %1640
      %1644 = vset.pattern.permute.xlu0 0
      %1645 = vperm.xlu0 %1644, %v1619
      %v1646 = vpop.permute.xlu0 %1645
      %1649 = vset.pattern.permute.xlu0 0
      %1650 = vperm.xlu0 %1649, %v1620
      %v1651 = vpop.permute.xlu0 %1650
      %v1653 = vsub.f32 %v1586, %v1636
      %v1654 = vsub.f32 %v1589, %v1641
      %v1655 = vsub.f32 %v1594, %v1646
      %v1656 = vsub.f32 %v1597, %v1651
      %v1657 = vmul.f32 %v1653, 1.442695
      %v1658 = vpow.pop %v1657
      %v1659 = vmul.f32 %v1654, 1.442695
      %v1660 = vpow.pop %v1659
      %v1661 = vmul.f32 %v1655, 1.442695
      %v1662 = vpow.pop %v1661
      %v1663 = vmul.f32 %v1656, 1.442695
      %v1664 = vpow.pop %v1663
      %s1665 = scalar_lea.vmem [#allocation4], 64
      %v1666 = vld [vmem:[%s1665] sm:$0xff]
      %v1667 = vld [vmem:[%s1665 + $0x8] sm:$0xff]
      %v1668 = vld [vmem:[%s1665 + $0x10] sm:$0xff]
      %v1669 = vld [vmem:[%s1665 + $0x18] sm:$0xff]
      %v1670 = vmul.f32 %v1626, %v1666
      %v1671 = vmul.f32 %v1628, %v1667
      %v1672 = vmul.f32 %v1630, %v1668
      %v1673 = vmul.f32 %v1632, %v1669
      %v1674 = vsel %vm793, %v1658, 0.0
      %1675 = vadd.xlane.f32.xlu0 %v1674
      %v1676 = vpop.xlane.xlu0 %1675
      %v1677 = vsel %vm793, %v1660, 0.0
      %1678 = vadd.xlane.f32.xlu0 %v1677
      %v1679 = vpop.xlane.xlu0 %1678
      %v1680 = vsel %vm793, %v1662, 0.0
      %1681 = vadd.xlane.f32.xlu0 %v1680
      %v1682 = vpop.xlane.xlu0 %1681
      %v1683 = vsel %vm793, %v1664, 0.0
      %1684 = vadd.xlane.f32.xlu0 %v1683
      %v1685 = vpop.xlane.xlu0 %1684
      %v1686 = vadd.f32 %v1670, %v1676
      %v1687 = vadd.f32 %v1671, %v1679
      %v1688 = vadd.f32 %v1672, %v1682
      %v1689 = vadd.f32 %v1673, %v1685
      %1690 = vst.msk [vmem:[%s1665] sm:$0xff] %vm1010, %v1686
      %1691 = vst.msk [vmem:[%s1665 + $0x8] sm:$0xff] %vm1010, %v1687
      %1692 = vst.msk [vmem:[%s1665 + $0x10] sm:$0xff] %vm1010, %v1688
      %1693 = vst.msk [vmem:[%s1665 + $0x18] sm:$0xff] %vm1010, %v1689
      %s1694 = scalar_lea.vmem [#allocation5], 64
      %v1695 = vld [vmem:[%s1694] sm:$0xff]
      %v1696 = vld [vmem:[%s1694 + $0x8] sm:$0xff]
      %v1697 = vld [vmem:[%s1694 + $0x10] sm:$0xff]
      %v1698 = vld [vmem:[%s1694 + $0x18] sm:$0xff]
      %1700 = vset.pattern.permute.xlu0 0
      %1701 = vperm.xlu0 %1700, %v1626
      %v1702 = vpop.permute.xlu0 %1701
      %1705 = vset.pattern.permute.xlu0 0
      %1706 = vperm.xlu0 %1705, %v1628
      %v1707 = vpop.permute.xlu0 %1706
      %1710 = vset.pattern.permute.xlu0 0
      %1711 = vperm.xlu0 %1710, %v1630
      %v1712 = vpop.permute.xlu0 %1711
      %1715 = vset.pattern.permute.xlu0 0
      %1716 = vperm.xlu0 %1715, %v1632
      %v1717 = vpop.permute.xlu0 %1716
      %v1719 = vmul.f32 %v1702, %v1695
      %v1720 = vmul.f32 %v1707, %v1696
      %v1721 = vmul.f32 %v1712, %v1697
      %v1722 = vmul.f32 %v1717, %v1698
      %v1723 = vpack.c.bf16 %v1660, %v1658
      %v1724 = vpack.c.bf16 %v1664, %v1662
      %v1726 = vsel %vm793, %v1723, 0
      %v1729 = vsel %vm793, %v1724, 0
      %1731 = vmatprep.subr.bf16.mxu0 0
      %1732 = vmatpush1.bf16.msra.mxu0 0
      %1733 = vmatprep.subr.bf16.mxu0 0
      %1734 = vmatpush1.bf16.msra.mxu0 0
      %1735 = vmatprep.subr.bf16.mxu0 0
      %1736 = vmatpush1.bf16.msra.mxu0 0
      %1737 = vmatprep.subr.bf16.mxu0 0
      %1738 = vmatpush1.bf16.msra.mxu0 0
      %1739 = vmatprep.subr.bf16.mxu0 0
      %1740 = vmatpush1.bf16.msra.mxu0 0
      %1741 = vmatprep.subr.bf16.mxu0 0
      %1742 = vmatpush1.bf16.msra.mxu0 0
      %1743 = vmatprep.subr.bf16.mxu0 0
      %1744 = vmatpush1.bf16.msra.mxu0 %v1533
      %1745 = vmatprep.subr.bf16.mxu0 0
      %1746 = vmatpush1.bf16.msra.mxu0 %v1532
      %1747 = vmatprep.subr.bf16.mxu0 0
      %1748 = vmatpush2.bf16.msra.mxu0 0
      %1749 = vmatprep.subr.bf16.mxu0 0
      %1750 = vmatpush2.bf16.msra.mxu0 0
      %1751 = vmatprep.subr.bf16.mxu0 0
      %1752 = vmatpush2.bf16.msra.mxu0 0
      %1753 = vmatprep.subr.bf16.mxu0 0
      %1754 = vmatpush2.bf16.msra.mxu0 0
      %1755 = vmatprep.subr.bf16.mxu0 0
      %1756 = vmatpush2.bf16.msra.mxu0 0
      %1757 = vmatprep.subr.bf16.mxu0 0
      %1758 = vmatpush2.bf16.msra.mxu0 0
      %1759 = vmatprep.subr.bf16.mxu0 0
      %1760 = vmatpush2.bf16.msra.mxu0 0
      %1761 = vmatprep.subr.bf16.mxu0 0
      %1762 = vmatpush2.bf16.msra.mxu0 0
      %1763 = vmatprep.mubr.bf16.mxu0 0
      %1764 = vmatmul.mubr.bf16.gmra.mxu0 %v1726
      %v1765 = vpop.f32.mrf.mxu0
      %v1766 = vadd.f32 0.0, %v1765
      %v1767 = vpop.f32.mrf.mxu0
      %v1768 = vpop.f32.mrf.mxu0
      %v1769 = vadd.f32 0.0, %v1768
      %v1770 = vpop.f32.mrf.mxu0
      %1771 = vmatprep.mubr.bf16.mxu0 0
      %1772 = vmatmul.mubr.bf16.gmra.mxu0 %v1729
      %v1773 = vpop.f32.mrf.mxu0
      %v1774 = vadd.f32 0.0, %v1773
      %v1775 = vpop.f32.mrf.mxu0
      %v1776 = vpop.f32.mrf.mxu0
      %v1777 = vadd.f32 0.0, %v1776
      %v1778 = vpop.f32.mrf.mxu0
      %1779 = vdwg.mxu0
      %v1780 = vadd.f32 %v1719, %v1766
      %v1781 = vadd.f32 %v1720, %v1769
      %v1782 = vadd.f32 %v1721, %v1774
      %v1783 = vadd.f32 %v1722, %v1777
      %1784 = vst [vmem:[%s1694] sm:$0xff] %v1780
      %1785 = vst [vmem:[%s1694 + $0x8] sm:$0xff] %v1781
      %1786 = vst [vmem:[%s1694 + $0x10] sm:$0xff] %v1782
      %1787 = vst [vmem:[%s1694 + $0x18] sm:$0xff] %v1783
      %1788 = vst.msk [vmem:[%s1600] sm:$0xff] %vm1010, %v1617
      %1789 = vst.msk [vmem:[%s1600 + $0x8] sm:$0xff] %vm1010, %v1618
      %1790 = vst.msk [vmem:[%s1600 + $0x10] sm:$0xff] %vm1010, %v1619
      %1791 = vst.msk [vmem:[%s1600 + $0x18] sm:$0xff] %vm1010, %v1620
      %s1792 = scalar_lea.vmem %s3, 96
      %v1793 = vld [vmem:[%s1792] sm:$0xff]
      %v1794 = vld [vmem:[%s1792 + $0x8] sm:$0xff]
      %v1795 = vld [vmem:[%s1792 + $0x10] sm:$0xff]
      %v1796 = vld [vmem:[%s1792 + $0x18] sm:$0xff]
      %v1801 = vunpack.c.l.b16 %v1793
      %v1802 = vunpack.c.h.b16 %v1793
      %v1803 = vunpack.c.l.b16 %v1794
      %v1804 = vunpack.c.h.b16 %v1794
      %v1805 = vunpack.c.l.b16 %v1795
      %v1806 = vunpack.c.h.b16 %v1795
      %v1807 = vunpack.c.l.b16 %v1796
      %v1808 = vunpack.c.h.b16 %v1796
      %v1809 = vpack.c.b16 %v1803, %v1801
      %v1810 = vpack.c.b16 %v1804, %v1802
      %v1811 = vpack.c.b16 %v1807, %v1805
      %v1812 = vpack.c.b16 %v1808, %v1806
      %1817 = vmatprep.subr.bf16.mxu0 0
      %1818 = vmatpush1.bf16.msra.mxu0 0
      %1819 = vmatprep.subr.bf16.mxu0 0
      %1820 = vmatpush1.bf16.msra.mxu0 0
      %1821 = vmatprep.subr.bf16.mxu0 0
      %1822 = vmatpush1.bf16.msra.mxu0 0
      %1823 = vmatprep.subr.bf16.mxu0 0
      %1824 = vmatpush1.bf16.msra.mxu0 0
      %1825 = vmatprep.subr.bf16.mxu0 0
      %1826 = vmatpush1.bf16.msra.mxu0 0
      %1827 = vmatprep.subr.bf16.mxu0 0
      %1828 = vmatpush1.bf16.msra.mxu0 0
      %1829 = vmatprep.subr.bf16.mxu0 %v1812
      %1830 = vmatpush1.bf16.msra.mxu0 %v1811
      %1831 = vmatprep.subr.bf16.mxu0 %v1810
      %1832 = vmatpush1.bf16.msra.mxu0 %v1809
      %1833 = vmatprep.subr.bf16.mxu0 0
      %1834 = vmatpush2.bf16.msra.mxu0 0
      %1835 = vmatprep.subr.bf16.mxu0 0
      %1836 = vmatpush2.bf16.msra.mxu0 0
      %1837 = vmatprep.subr.bf16.mxu0 0
      %1838 = vmatpush2.bf16.msra.mxu0 0
      %1839 = vmatprep.subr.bf16.mxu0 0
      %1840 = vmatpush2.bf16.msra.mxu0 0
      %1841 = vmatprep.subr.bf16.mxu0 0
      %1842 = vmatpush2.bf16.msra.mxu0 0
      %1843 = vmatprep.subr.bf16.mxu0 0
      %1844 = vmatpush2.bf16.msra.mxu0 0
      %1845 = vmatprep.subr.bf16.mxu0 0
      %1846 = vmatpush2.bf16.msra.mxu0 0
      %1847 = vmatprep.subr.bf16.mxu0 0
      %1848 = vmatpush2.bf16.msra.mxu0 0
      %1849 = vmatprep.mubr.bf16.mxu0 0
      %1850 = vmatmul.mubr.bf16.gmra.mxu0 %v795
      %v1851 = vpop.f32.mrf.mxu0
      %v1852 = vadd.f32 0.0, %v1851
      %v1853 = vpop.f32.mrf.mxu0
      %v1854 = vadd.f32 0.0, %v1853
      %v1855 = vpop.f32.mrf.mxu0
      %v1856 = vadd.f32 0.0, %v1855
      %v1857 = vpop.f32.mrf.mxu0
      %v1858 = vadd.f32 0.0, %v1857
      %1859 = vmatprep.mubr.bf16.mxu0 0
      %1860 = vmatmul.mubr.bf16.gmra.mxu0 %v798
      %v1861 = vpop.f32.mrf.mxu0
      %v1862 = vadd.f32 0.0, %v1861
      %v1863 = vpop.f32.mrf.mxu0
      %v1864 = vadd.f32 0.0, %v1863
      %v1865 = vpop.f32.mrf.mxu0
      %v1866 = vadd.f32 0.0, %v1865
      %v1867 = vpop.f32.mrf.mxu0
      %v1868 = vadd.f32 0.0, %v1867
      %1869 = vdwg.mxu0
      %v1870 = vpack.c.bf16 %v1856, %v1852
      %v1871 = vpack.c.bf16 %v1866, %v1862
      %v1872 = vpack.c.bf16 %v1858, %v1854
      %v1873 = vpack.c.bf16 %v1868, %v1864
      %s1874 = scalar_lea.vmem [#allocation2], 48
      %v1875 = vld [vmem:[%s1874] sm:$0xf]
      %v1876 = vld [vmem:[%s1874 + $0x4] sm:$0xf]
      %v1877 = vld [vmem:[%s1874 + $0x8] sm:$0xf]
      %v1878 = vld [vmem:[%s1874 + $0xc] sm:$0xf]
      %v1883 = vunpack.c.l.b16 %v1875
      %v1884 = vunpack.c.l.b16 %v1876
      %v1885 = vunpack.c.l.b16 %v1877
      %v1886 = vunpack.c.l.b16 %v1878
      %v1887 = vpack.c.b16 %v1884, %v1883
      %v1888 = vpack.c.b16 %v1886, %v1885
      %1891 = vmatprep.subr.bf16.mxu0 0
      %1892 = vmatpush1.bf16.xpose.msra.mxu0 0
      %1893 = vmatprep.subr.bf16.mxu0 0
      %1894 = vmatpush1.bf16.xpose.msra.mxu0 0
      %1895 = vmatprep.subr.bf16.mxu0 0
      %1896 = vmatpush1.bf16.xpose.msra.mxu0 0
      %1897 = vmatprep.subr.bf16.mxu0 0
      %1898 = vmatpush1.bf16.xpose.msra.mxu0 0
      %1899 = vmatprep.subr.bf16.mxu0 0
      %1900 = vmatpush1.bf16.xpose.msra.mxu0 0
      %1901 = vmatprep.subr.bf16.mxu0 0
      %1902 = vmatpush1.bf16.xpose.msra.mxu0 0
      %1903 = vmatprep.subr.bf16.mxu0 0
      %1904 = vmatpush1.bf16.xpose.msra.mxu0 %v1871
      %1905 = vmatprep.subr.bf16.mxu0 0
      %1906 = vmatpush1.bf16.xpose.msra.mxu0 %v1870
      %1907 = vmatprep.subr.bf16.mxu0 0
      %1908 = vmatpush2.bf16.xpose.msra.mxu0 0
      %1909 = vmatprep.subr.bf16.mxu0 0
      %1910 = vmatpush2.bf16.xpose.msra.mxu0 0
      %1911 = vmatprep.subr.bf16.mxu0 0
      %1912 = vmatpush2.bf16.xpose.msra.mxu0 0
      %1913 = vmatprep.subr.bf16.mxu0 0
      %1914 = vmatpush2.bf16.xpose.msra.mxu0 0
      %1915 = vmatprep.subr.bf16.mxu0 0
      %1916 = vmatpush2.bf16.xpose.msra.mxu0 0
      %1917 = vmatprep.subr.bf16.mxu0 0
      %1918 = vmatpush2.bf16.xpose.msra.mxu0 0
      %1919 = vmatprep.subr.bf16.mxu0 0
      %1920 = vmatpush2.bf16.xpose.msra.mxu0 0
      %1921 = vmatprep.subr.bf16.mxu0 0
      %1922 = vmatpush2.bf16.xpose.msra.mxu0 0
      %1923 = vmatprep.mubr.bf16.mxu0 0
      %1924 = vmatmul.mubr.bf16.gmra.mxu0 %v1887
      %v1925 = vpop.f32.mrf.mxu0
      %v1926 = vadd.f32 0.0, %v1925
      %v1927 = vpop.f32.mrf.mxu0
      %v1928 = vpop.f32.mrf.mxu0
      %v1929 = vadd.f32 0.0, %v1928
      %v1930 = vpop.f32.mrf.mxu0
      %1931 = vmatprep.mubr.bf16.mxu0 0
      %1932 = vmatmul.mubr.bf16.gmra.mxu0 %v1888
      %v1933 = vpop.f32.mrf.mxu0
      %v1934 = vadd.f32 0.0, %v1933
      %v1935 = vpop.f32.mrf.mxu0
      %v1936 = vpop.f32.mrf.mxu0
      %v1937 = vadd.f32 0.0, %v1936
      %v1938 = vpop.f32.mrf.mxu0
      %1939 = vdwg.mxu0
      %s1940 = scalar_lea.vmem [#allocation3], 96
      %v1941 = vld [vmem:[%s1940] sm:$0xff]
      %v1942 = vld [vmem:[%s1940 + $0x8] sm:$0xff]
      %v1943 = vld [vmem:[%s1940 + $0x10] sm:$0xff]
      %v1944 = vld [vmem:[%s1940 + $0x18] sm:$0xff]
      %v1945 = vsel %vm793, %v1926, -inf
      %1946 = vmax.xlane.f32.xlu0 %v1945
      %v1947 = vpop.xlane.xlu0 %1946
      %v1948 = vsel %vm793, %v1929, -inf
      %1949 = vmax.xlane.f32.xlu0 %v1948
      %v1950 = vpop.xlane.xlu0 %1949
      %v1951 = vsel %vm793, %v1934, -inf
      %1952 = vmax.xlane.f32.xlu0 %v1951
      %v1953 = vpop.xlane.xlu0 %1952
      %v1954 = vsel %vm793, %v1937, -inf
      %1955 = vmax.xlane.f32.xlu0 %v1954
      %v1956 = vpop.xlane.xlu0 %1955
      %v1957 = vmax.f32 %v1941, %v1947
      %v1958 = vmax.f32 %v1942, %v1950
      %v1959 = vmax.f32 %v1943, %v1953
      %v1960 = vmax.f32 %v1944, %v1956
      %v1961 = vsub.f32 %v1941, %v1957
      %v1962 = vsub.f32 %v1942, %v1958
      %v1963 = vsub.f32 %v1943, %v1959
      %v1964 = vsub.f32 %v1944, %v1960
      %v1965 = vmul.f32 %v1961, 1.442695
      %v1966 = vpow.pop %v1965
      %v1967 = vmul.f32 %v1962, 1.442695
      %v1968 = vpow.pop %v1967
      %v1969 = vmul.f32 %v1963, 1.442695
      %v1970 = vpow.pop %v1969
      %v1971 = vmul.f32 %v1964, 1.442695
      %v1972 = vpow.pop %v1971
      %1974 = vset.pattern.permute.xlu0 0
      %1975 = vperm.xlu0 %1974, %v1957
      %v1976 = vpop.permute.xlu0 %1975
      %1979 = vset.pattern.permute.xlu0 0
      %1980 = vperm.xlu0 %1979, %v1958
      %v1981 = vpop.permute.xlu0 %1980
      %1984 = vset.pattern.permute.xlu0 0
      %1985 = vperm.xlu0 %1984, %v1959
      %v1986 = vpop.permute.xlu0 %1985
      %1989 = vset.pattern.permute.xlu0 0
      %1990 = vperm.xlu0 %1989, %v1960
      %v1991 = vpop.permute.xlu0 %1990
      %v1993 = vsub.f32 %v1926, %v1976
      %v1994 = vsub.f32 %v1929, %v1981
      %v1995 = vsub.f32 %v1934, %v1986
      %v1996 = vsub.f32 %v1937, %v1991
      %v1997 = vmul.f32 %v1993, 1.442695
      %v1998 = vpow.pop %v1997
      %v1999 = vmul.f32 %v1994, 1.442695
      %v2000 = vpow.pop %v1999
      %v2001 = vmul.f32 %v1995, 1.442695
      %v2002 = vpow.pop %v2001
      %v2003 = vmul.f32 %v1996, 1.442695
      %v2004 = vpow.pop %v2003
      %s2005 = scalar_lea.vmem [#allocation4], 96
      %v2006 = vld [vmem:[%s2005] sm:$0xff]
      %v2007 = vld [vmem:[%s2005 + $0x8] sm:$0xff]
      %v2008 = vld [vmem:[%s2005 + $0x10] sm:$0xff]
      %v2009 = vld [vmem:[%s2005 + $0x18] sm:$0xff]
      %v2010 = vmul.f32 %v1966, %v2006
      %v2011 = vmul.f32 %v1968, %v2007
      %v2012 = vmul.f32 %v1970, %v2008
      %v2013 = vmul.f32 %v1972, %v2009
      %v2014 = vsel %vm793, %v1998, 0.0
      %2015 = vadd.xlane.f32.xlu0 %v2014
      %v2016 = vpop.xlane.xlu0 %2015
      %v2017 = vsel %vm793, %v2000, 0.0
      %2018 = vadd.xlane.f32.xlu0 %v2017
      %v2019 = vpop.xlane.xlu0 %2018
      %v2020 = vsel %vm793, %v2002, 0.0
      %2021 = vadd.xlane.f32.xlu0 %v2020
      %v2022 = vpop.xlane.xlu0 %2021
      %v2023 = vsel %vm793, %v2004, 0.0
      %2024 = vadd.xlane.f32.xlu0 %v2023
      %v2025 = vpop.xlane.xlu0 %2024
      %v2026 = vadd.f32 %v2010, %v2016
      %v2027 = vadd.f32 %v2011, %v2019
      %v2028 = vadd.f32 %v2012, %v2022
      %v2029 = vadd.f32 %v2013, %v2025
      %2030 = vst.msk [vmem:[%s2005] sm:$0xff] %vm1010, %v2026
      %2031 = vst.msk [vmem:[%s2005 + $0x8] sm:$0xff] %vm1010, %v2027
      %2032 = vst.msk [vmem:[%s2005 + $0x10] sm:$0xff] %vm1010, %v2028
      %2033 = vst.msk [vmem:[%s2005 + $0x18] sm:$0xff] %vm1010, %v2029
      %s2034 = scalar_lea.vmem [#allocation5], 96
      %v2035 = vld [vmem:[%s2034] sm:$0xff]
      %v2036 = vld [vmem:[%s2034 + $0x8] sm:$0xff]
      %v2037 = vld [vmem:[%s2034 + $0x10] sm:$0xff]
      %v2038 = vld [vmem:[%s2034 + $0x18] sm:$0xff]
      %2040 = vset.pattern.permute.xlu0 0
      %2041 = vperm.xlu0 %2040, %v1966
      %v2042 = vpop.permute.xlu0 %2041
      %2045 = vset.pattern.permute.xlu0 0
      %2046 = vperm.xlu0 %2045, %v1968
      %v2047 = vpop.permute.xlu0 %2046
      %2050 = vset.pattern.permute.xlu0 0
      %2051 = vperm.xlu0 %2050, %v1970
      %v2052 = vpop.permute.xlu0 %2051
      %2055 = vset.pattern.permute.xlu0 0
      %2056 = vperm.xlu0 %2055, %v1972
      %v2057 = vpop.permute.xlu0 %2056
      %v2059 = vmul.f32 %v2042, %v2035
      %v2060 = vmul.f32 %v2047, %v2036
      %v2061 = vmul.f32 %v2052, %v2037
      %v2062 = vmul.f32 %v2057, %v2038
      %v2063 = vpack.c.bf16 %v2000, %v1998
      %v2064 = vpack.c.bf16 %v2004, %v2002
      %v2066 = vsel %vm793, %v2063, 0
      %v2069 = vsel %vm793, %v2064, 0
      %2071 = vmatprep.subr.bf16.mxu0 0
      %2072 = vmatpush1.bf16.msra.mxu0 0
      %2073 = vmatprep.subr.bf16.mxu0 0
      %2074 = vmatpush1.bf16.msra.mxu0 0
      %2075 = vmatprep.subr.bf16.mxu0 0
      %2076 = vmatpush1.bf16.msra.mxu0 0
      %2077 = vmatprep.subr.bf16.mxu0 0
      %2078 = vmatpush1.bf16.msra.mxu0 0
      %2079 = vmatprep.subr.bf16.mxu0 0
      %2080 = vmatpush1.bf16.msra.mxu0 0
      %2081 = vmatprep.subr.bf16.mxu0 0
      %2082 = vmatpush1.bf16.msra.mxu0 0
      %2083 = vmatprep.subr.bf16.mxu0 0
      %2084 = vmatpush1.bf16.msra.mxu0 %v1873
      %2085 = vmatprep.subr.bf16.mxu0 0
      %2086 = vmatpush1.bf16.msra.mxu0 %v1872
      %2087 = vmatprep.subr.bf16.mxu0 0
      %2088 = vmatpush2.bf16.msra.mxu0 0
      %2089 = vmatprep.subr.bf16.mxu0 0
      %2090 = vmatpush2.bf16.msra.mxu0 0
      %2091 = vmatprep.subr.bf16.mxu0 0
      %2092 = vmatpush2.bf16.msra.mxu0 0
      %2093 = vmatprep.subr.bf16.mxu0 0
      %2094 = vmatpush2.bf16.msra.mxu0 0
      %2095 = vmatprep.subr.bf16.mxu0 0
      %2096 = vmatpush2.bf16.msra.mxu0 0
      %2097 = vmatprep.subr.bf16.mxu0 0
      %2098 = vmatpush2.bf16.msra.mxu0 0
      %2099 = vmatprep.subr.bf16.mxu0 0
      %2100 = vmatpush2.bf16.msra.mxu0 0
      %2101 = vmatprep.subr.bf16.mxu0 0
      %2102 = vmatpush2.bf16.msra.mxu0 0
      %2103 = vmatprep.mubr.bf16.mxu0 0
      %2104 = vmatmul.mubr.bf16.gmra.mxu0 %v2066
      %v2105 = vpop.f32.mrf.mxu0
      %v2106 = vadd.f32 0.0, %v2105
      %v2107 = vpop.f32.mrf.mxu0
      %v2108 = vpop.f32.mrf.mxu0
      %v2109 = vadd.f32 0.0, %v2108
      %v2110 = vpop.f32.mrf.mxu0
      %2111 = vmatprep.mubr.bf16.mxu0 0
      %2112 = vmatmul.mubr.bf16.gmra.mxu0 %v2069
      %v2113 = vpop.f32.mrf.mxu0
      %v2114 = vadd.f32 0.0, %v2113
      %v2115 = vpop.f32.mrf.mxu0
      %v2116 = vpop.f32.mrf.mxu0
      %v2117 = vadd.f32 0.0, %v2116
      %v2118 = vpop.f32.mrf.mxu0
      %2119 = vdwg.mxu0
      %v2120 = vadd.f32 %v2059, %v2106
      %v2121 = vadd.f32 %v2060, %v2109
      %v2122 = vadd.f32 %v2061, %v2114
      %v2123 = vadd.f32 %v2062, %v2117
      %2124 = vst [vmem:[%s2034] sm:$0xff] %v2120
      %2125 = vst [vmem:[%s2034 + $0x8] sm:$0xff] %v2121
      %2126 = vst [vmem:[%s2034 + $0x10] sm:$0xff] %v2122
      %2127 = vst [vmem:[%s2034 + $0x18] sm:$0xff] %v2123
      %2128 = vst.msk [vmem:[%s1940] sm:$0xff] %vm1010, %v1957
      %2129 = vst.msk [vmem:[%s1940 + $0x8] sm:$0xff] %vm1010, %v1958
      %2130 = vst.msk [vmem:[%s1940 + $0x10] sm:$0xff] %vm1010, %v1959
      %2131 = vst.msk [vmem:[%s1940 + $0x18] sm:$0xff] %vm1010, %v1960
      %p2132 = scmp.eq.s32.totalorder %s24, 1
      // Predicated region
      $region49: #{tpu_custom_call.1} parent=43 // pred_check
        %p2133 = pneg %p2132
      $region50: #{tpu_custom_call.1} parent=43 // pred_check_branch
        %2135 = sbr.rel (%p2133) target = $region52
      $region51: #{tpu_custom_call.1} parent=43 // pred_region
        %v2136 = vld [vmem:[#allocation4] sm:$0xff]
        %v2137 = vld [vmem:[#allocation4 + $0x8] sm:$0xff]
        %v2138 = vld [vmem:[#allocation4 + $0x10] sm:$0xff]
        %v2139 = vld [vmem:[#allocation4 + $0x18] sm:$0xff]
        %v2140 = vrcp.pop %v2136
        %v2141 = vrcp.pop %v2137
        %v2142 = vrcp.pop %v2138
        %v2143 = vrcp.pop %v2139
        %v2144 = vld [vmem:[#allocation5] sm:$0xff]
        %v2145 = vld [vmem:[#allocation5 + $0x8] sm:$0xff]
        %v2146 = vld [vmem:[#allocation5 + $0x10] sm:$0xff]
        %v2147 = vld [vmem:[#allocation5 + $0x18] sm:$0xff]
        %2149 = vset.pattern.permute.xlu0 0
        %2150 = vperm.xlu0 %2149, %v2140
        %v2151 = vpop.permute.xlu0 %2150
        %2154 = vset.pattern.permute.xlu0 0
        %2155 = vperm.xlu0 %2154, %v2141
        %v2156 = vpop.permute.xlu0 %2155
        %2159 = vset.pattern.permute.xlu0 0
        %2160 = vperm.xlu0 %2159, %v2142
        %v2161 = vpop.permute.xlu0 %2160
        %2164 = vset.pattern.permute.xlu0 0
        %2165 = vperm.xlu0 %2164, %v2143
        %v2166 = vpop.permute.xlu0 %2165
        %v2168 = vmul.f32 %v2144, %v2151
        %v2169 = vmul.f32 %v2145, %v2156
        %v2170 = vmul.f32 %v2146, %v2161
        %v2171 = vmul.f32 %v2147, %v2166
        %v2172 = vpack.c.bf16 %v2169, %v2168
        %v2173 = vpack.c.bf16 %v2171, %v2170
        %v2174 = vld [vmem:[%s4] sm:$0xf]
        %v2175 = vld [vmem:[%s4 + $0x4] sm:$0xf]
        %v2176 = vld [vmem:[%s4 + $0x8] sm:$0xf]
        %v2177 = vld [vmem:[%s4 + $0xc] sm:$0xf]
        %v2178 = vld [vmem:[%s4 + $0x10] sm:$0xf]
        %v2179 = vld [vmem:[%s4 + $0x14] sm:$0xf]
        %v2180 = vld [vmem:[%s4 + $0x18] sm:$0xf]
        %v2181 = vld [vmem:[%s4 + $0x1c] sm:$0xf]
        %v2182 = vld [vmem:[%s4 + $0x20] sm:$0xf]
        %v2183 = vld [vmem:[%s4 + $0x24] sm:$0xf]
        %v2184 = vld [vmem:[%s4 + $0x28] sm:$0xf]
        %v2185 = vld [vmem:[%s4 + $0x2c] sm:$0xf]
        %v2186 = vld [vmem:[%s4 + $0x30] sm:$0xf]
        %v2187 = vld [vmem:[%s4 + $0x34] sm:$0xf]
        %v2188 = vld [vmem:[%s4 + $0x38] sm:$0xf]
        %v2189 = vld [vmem:[%s4 + $0x3c] sm:$0xf]
        %v2190 = vld [vmem:[%s1325] sm:$0xff]
        %v2191 = vld [vmem:[%s1325 + $0x8] sm:$0xff]
        %v2192 = vld [vmem:[%s1325 + $0x10] sm:$0xff]
        %v2193 = vld [vmem:[%s1325 + $0x18] sm:$0xff]
        %v2194 = vrcp.pop %v2190
        %v2195 = vrcp.pop %v2191
        %v2196 = vrcp.pop %v2192
        %v2197 = vrcp.pop %v2193
        %v2198 = vld [vmem:[%s1354] sm:$0xff]
        %v2199 = vld [vmem:[%s1354 + $0x8] sm:$0xff]
        %v2200 = vld [vmem:[%s1354 + $0x10] sm:$0xff]
        %v2201 = vld [vmem:[%s1354 + $0x18] sm:$0xff]
        %2203 = vset.pattern.permute.xlu0 0
        %2204 = vperm.xlu0 %2203, %v2194
        %v2205 = vpop.permute.xlu0 %2204
        %2208 = vset.pattern.permute.xlu0 0
        %2209 = vperm.xlu0 %2208, %v2195
        %v2210 = vpop.permute.xlu0 %2209
        %2213 = vset.pattern.permute.xlu0 0
        %2214 = vperm.xlu0 %2213, %v2196
        %v2215 = vpop.permute.xlu0 %2214
        %2218 = vset.pattern.permute.xlu0 0
        %2219 = vperm.xlu0 %2218, %v2197
        %v2220 = vpop.permute.xlu0 %2219
        %v2222 = vmul.f32 %v2198, %v2205
        %v2223 = vmul.f32 %v2199, %v2210
        %v2224 = vmul.f32 %v2200, %v2215
        %v2225 = vmul.f32 %v2201, %v2220
        %v2226 = vpack.c.bf16 %v2223, %v2222
        %v2227 = vpack.c.bf16 %v2225, %v2224
        %s2228 = scalar_lea.vmem %s4, 64
        %v2229 = vld [vmem:[%s2228] sm:$0xf]
        %v2230 = vld [vmem:[%s2228 + $0x4] sm:$0xf]
        %v2231 = vld [vmem:[%s2228 + $0x8] sm:$0xf]
        %v2232 = vld [vmem:[%s2228 + $0xc] sm:$0xf]
        %v2233 = vld [vmem:[%s2228 + $0x10] sm:$0xf]
        %v2234 = vld [vmem:[%s2228 + $0x14] sm:$0xf]
        %v2235 = vld [vmem:[%s2228 + $0x18] sm:$0xf]
        %v2236 = vld [vmem:[%s2228 + $0x1c] sm:$0xf]
        %v2237 = vld [vmem:[%s2228 + $0x20] sm:$0xf]
        %v2238 = vld [vmem:[%s2228 + $0x24] sm:$0xf]
        %v2239 = vld [vmem:[%s2228 + $0x28] sm:$0xf]
        %v2240 = vld [vmem:[%s2228 + $0x2c] sm:$0xf]
        %v2241 = vld [vmem:[%s2228 + $0x30] sm:$0xf]
        %v2242 = vld [vmem:[%s2228 + $0x34] sm:$0xf]
        %v2243 = vld [vmem:[%s2228 + $0x38] sm:$0xf]
        %v2244 = vld [vmem:[%s2228 + $0x3c] sm:$0xf]
        %v2261 = vunpack.c.l.b16 %v2229
        %v2262 = vunpack.c.l.b16 %v2230
        %v2263 = vunpack.c.l.b16 %v2231
        %v2264 = vunpack.c.l.b16 %v2232
        %v2265 = vunpack.c.l.b16 %v2233
        %v2266 = vunpack.c.l.b16 %v2234
        %v2267 = vunpack.c.l.b16 %v2235
        %v2268 = vunpack.c.l.b16 %v2236
        %v2269 = vunpack.c.l.b16 %v2237
        %v2270 = vunpack.c.l.b16 %v2238
        %v2271 = vunpack.c.l.b16 %v2239
        %v2272 = vunpack.c.l.b16 %v2240
        %v2273 = vunpack.c.l.b16 %v2241
        %v2274 = vunpack.c.l.b16 %v2242
        %v2275 = vunpack.c.l.b16 %v2243
        %v2276 = vunpack.c.l.b16 %v2244
        %v2277 = vpack.c.b16 %v2262, %v2261
        %v2278 = vpack.c.b16 %v2264, %v2263
        %v2279 = vpack.c.b16 %v2266, %v2265
        %v2280 = vpack.c.b16 %v2268, %v2267
        %v2281 = vpack.c.b16 %v2270, %v2269
        %v2282 = vpack.c.b16 %v2272, %v2271
        %v2283 = vpack.c.b16 %v2274, %v2273
        %v2284 = vpack.c.b16 %v2276, %v2275
        %2293 = vmatprep.subr.bf16.mxu0 0
        %2294 = vmatpush1.bf16.msra.mxu0 %v2284
        %2295 = vmatprep.subr.bf16.mxu0 0
        %2296 = vmatpush1.bf16.msra.mxu0 %v2283
        %2297 = vmatprep.subr.bf16.mxu0 0
        %2298 = vmatpush1.bf16.msra.mxu0 %v2282
        %2299 = vmatprep.subr.bf16.mxu0 0
        %2300 = vmatpush1.bf16.msra.mxu0 %v2281
        %2301 = vmatprep.subr.bf16.mxu0 0
        %2302 = vmatpush1.bf16.msra.mxu0 %v2280
        %2303 = vmatprep.subr.bf16.mxu0 0
        %2304 = vmatpush1.bf16.msra.mxu0 %v2279
        %2305 = vmatprep.subr.bf16.mxu0 0
        %2306 = vmatpush1.bf16.msra.mxu0 %v2278
        %2307 = vmatprep.subr.bf16.mxu0 0
        %2308 = vmatpush1.bf16.msra.mxu0 %v2277
        %2309 = vmatprep.subr.bf16.mxu0 0
        %2310 = vmatpush2.bf16.msra.mxu0 0
        %2311 = vmatprep.subr.bf16.mxu0 0
        %2312 = vmatpush2.bf16.msra.mxu0 0
        %2313 = vmatprep.subr.bf16.mxu0 0
        %2314 = vmatpush2.bf16.msra.mxu0 0
        %2315 = vmatprep.subr.bf16.mxu0 0
        %2316 = vmatpush2.bf16.msra.mxu0 0
        %2317 = vmatprep.subr.bf16.mxu0 0
        %2318 = vmatpush2.bf16.msra.mxu0 0
        %2319 = vmatprep.subr.bf16.mxu0 0
        %2320 = vmatpush2.bf16.msra.mxu0 0
        %2321 = vmatprep.subr.bf16.mxu0 0
        %2322 = vmatpush2.bf16.msra.mxu0 0
        %2323 = vmatprep.subr.bf16.mxu0 0
        %2324 = vmatpush2.bf16.msra.mxu0 0
        %2325 = vmatprep.mubr.bf16.mxu0 0
        %2326 = vmatmul.mubr.bf16.gmra.mxu0 %v2226
        %v2327 = vpop.f32.mrf.mxu0
        %v2328 = vadd.f32 0.0, %v2327
        %v2329 = vpop.f32.mrf.mxu0
        %v2330 = vpop.f32.mrf.mxu0
        %v2331 = vadd.f32 0.0, %v2330
        %v2332 = vpop.f32.mrf.mxu0
        %2333 = vmatprep.mubr.bf16.mxu0 0
        %2334 = vmatmul.mubr.bf16.gmra.mxu0 %v2227
        %v2335 = vpop.f32.mrf.mxu0
        %v2336 = vadd.f32 0.0, %v2335
        %v2337 = vpop.f32.mrf.mxu0
        %v2338 = vpop.f32.mrf.mxu0
        %v2339 = vadd.f32 0.0, %v2338
        %v2340 = vpop.f32.mrf.mxu0
        %2341 = vdwg.mxu0
        %v2358 = vunpack.c.l.b16 %v2174
        %v2359 = vunpack.c.l.b16 %v2175
        %v2360 = vunpack.c.l.b16 %v2176
        %v2361 = vunpack.c.l.b16 %v2177
        %v2362 = vunpack.c.l.b16 %v2178
        %v2363 = vunpack.c.l.b16 %v2179
        %v2364 = vunpack.c.l.b16 %v2180
        %v2365 = vunpack.c.l.b16 %v2181
        %v2366 = vunpack.c.l.b16 %v2182
        %v2367 = vunpack.c.l.b16 %v2183
        %v2368 = vunpack.c.l.b16 %v2184
        %v2369 = vunpack.c.l.b16 %v2185
        %v2370 = vunpack.c.l.b16 %v2186
        %v2371 = vunpack.c.l.b16 %v2187
        %v2372 = vunpack.c.l.b16 %v2188
        %v2373 = vunpack.c.l.b16 %v2189
        %v2374 = vpack.c.b16 %v2359, %v2358
        %v2375 = vpack.c.b16 %v2361, %v2360
        %v2376 = vpack.c.b16 %v2363, %v2362
        %v2377 = vpack.c.b16 %v2365, %v2364
        %v2378 = vpack.c.b16 %v2367, %v2366
        %v2379 = vpack.c.b16 %v2369, %v2368
        %v2380 = vpack.c.b16 %v2371, %v2370
        %v2381 = vpack.c.b16 %v2373, %v2372
        %2390 = vmatprep.subr.bf16.mxu0 0
        %2391 = vmatpush1.bf16.msra.mxu0 %v2381
        %2392 = vmatprep.subr.bf16.mxu0 0
        %2393 = vmatpush1.bf16.msra.mxu0 %v2380
        %2394 = vmatprep.subr.bf16.mxu0 0
        %2395 = vmatpush1.bf16.msra.mxu0 %v2379
        %2396 = vmatprep.subr.bf16.mxu0 0
        %2397 = vmatpush1.bf16.msra.mxu0 %v2378
        %2398 = vmatprep.subr.bf16.mxu0 0
        %2399 = vmatpush1.bf16.msra.mxu0 %v2377
        %2400 = vmatprep.subr.bf16.mxu0 0
        %2401 = vmatpush1.bf16.msra.mxu0 %v2376
        %2402 = vmatprep.subr.bf16.mxu0 0
        %2403 = vmatpush1.bf16.msra.mxu0 %v2375
        %2404 = vmatprep.subr.bf16.mxu0 0
        %2405 = vmatpush1.bf16.msra.mxu0 %v2374
        %2406 = vmatprep.subr.bf16.mxu0 0
        %2407 = vmatpush2.bf16.msra.mxu0 0
        %2408 = vmatprep.subr.bf16.mxu0 0
        %2409 = vmatpush2.bf16.msra.mxu0 0
        %2410 = vmatprep.subr.bf16.mxu0 0
        %2411 = vmatpush2.bf16.msra.mxu0 0
        %2412 = vmatprep.subr.bf16.mxu0 0
        %2413 = vmatpush2.bf16.msra.mxu0 0
        %2414 = vmatprep.subr.bf16.mxu0 0
        %2415 = vmatpush2.bf16.msra.mxu0 0
        %2416 = vmatprep.subr.bf16.mxu0 0
        %2417 = vmatpush2.bf16.msra.mxu0 0
        %2418 = vmatprep.subr.bf16.mxu0 0
        %2419 = vmatpush2.bf16.msra.mxu0 0
        %2420 = vmatprep.subr.bf16.mxu0 0
        %2421 = vmatpush2.bf16.msra.mxu0 0
        %2422 = vmatprep.mubr.bf16.mxu0 0
        %2423 = vmatmul.mubr.bf16.gmra.mxu0 %v2172
        %v2424 = vpop.f32.mrf.mxu0
        %v2425 = vadd.f32 %v2328, %v2424
        %v2426 = vpop.f32.mrf.mxu0
        %v2427 = vpop.f32.mrf.mxu0
        %v2428 = vadd.f32 %v2331, %v2427
        %v2429 = vpop.f32.mrf.mxu0
        %2430 = vmatprep.mubr.bf16.mxu0 0
        %2431 = vmatmul.mubr.bf16.gmra.mxu0 %v2173
        %v2432 = vpop.f32.mrf.mxu0
        %v2433 = vadd.f32 %v2336, %v2432
        %v2434 = vpop.f32.mrf.mxu0
        %v2435 = vpop.f32.mrf.mxu0
        %v2436 = vadd.f32 %v2339, %v2435
        %v2437 = vpop.f32.mrf.mxu0
        %2438 = vdwg.mxu0
        %v2439 = vld [vmem:[%s1665] sm:$0xff]
        %v2440 = vld [vmem:[%s1665 + $0x8] sm:$0xff]
        %v2441 = vld [vmem:[%s1665 + $0x10] sm:$0xff]
        %v2442 = vld [vmem:[%s1665 + $0x18] sm:$0xff]
        %v2443 = vrcp.pop %v2439
        %v2444 = vrcp.pop %v2440
        %v2445 = vrcp.pop %v2441
        %v2446 = vrcp.pop %v2442
        %v2447 = vld [vmem:[%s1694] sm:$0xff]
        %v2448 = vld [vmem:[%s1694 + $0x8] sm:$0xff]
        %v2449 = vld [vmem:[%s1694 + $0x10] sm:$0xff]
        %v2450 = vld [vmem:[%s1694 + $0x18] sm:$0xff]
        %2452 = vset.pattern.permute.xlu0 0
        %2453 = vperm.xlu0 %2452, %v2443
        %v2454 = vpop.permute.xlu0 %2453
        %2457 = vset.pattern.permute.xlu0 0
        %2458 = vperm.xlu0 %2457, %v2444
        %v2459 = vpop.permute.xlu0 %2458
        %2462 = vset.pattern.permute.xlu0 0
        %2463 = vperm.xlu0 %2462, %v2445
        %v2464 = vpop.permute.xlu0 %2463
        %2467 = vset.pattern.permute.xlu0 0
        %2468 = vperm.xlu0 %2467, %v2446
        %v2469 = vpop.permute.xlu0 %2468
        %v2471 = vmul.f32 %v2447, %v2454
        %v2472 = vmul.f32 %v2448, %v2459
        %v2473 = vmul.f32 %v2449, %v2464
        %v2474 = vmul.f32 %v2450, %v2469
        %v2475 = vpack.c.bf16 %v2472, %v2471
        %v2476 = vpack.c.bf16 %v2474, %v2473
        %s2477 = scalar_lea.vmem %s4, 128
        %v2478 = vld [vmem:[%s2477] sm:$0xf]
        %v2479 = vld [vmem:[%s2477 + $0x4] sm:$0xf]
        %v2480 = vld [vmem:[%s2477 + $0x8] sm:$0xf]
        %v2481 = vld [vmem:[%s2477 + $0xc] sm:$0xf]
        %v2482 = vld [vmem:[%s2477 + $0x10] sm:$0xf]
        %v2483 = vld [vmem:[%s2477 + $0x14] sm:$0xf]
        %v2484 = vld [vmem:[%s2477 + $0x18] sm:$0xf]
        %v2485 = vld [vmem:[%s2477 + $0x1c] sm:$0xf]
        %v2486 = vld [vmem:[%s2477 + $0x20] sm:$0xf]
        %v2487 = vld [vmem:[%s2477 + $0x24] sm:$0xf]
        %v2488 = vld [vmem:[%s2477 + $0x28] sm:$0xf]
        %v2489 = vld [vmem:[%s2477 + $0x2c] sm:$0xf]
        %v2490 = vld [vmem:[%s2477 + $0x30] sm:$0xf]
        %v2491 = vld [vmem:[%s2477 + $0x34] sm:$0xf]
        %v2492 = vld [vmem:[%s2477 + $0x38] sm:$0xf]
        %v2493 = vld [vmem:[%s2477 + $0x3c] sm:$0xf]
        %v2510 = vunpack.c.l.b16 %v2478
        %v2511 = vunpack.c.l.b16 %v2479
        %v2512 = vunpack.c.l.b16 %v2480
        %v2513 = vunpack.c.l.b16 %v2481
        %v2514 = vunpack.c.l.b16 %v2482
        %v2515 = vunpack.c.l.b16 %v2483
        %v2516 = vunpack.c.l.b16 %v2484
        %v2517 = vunpack.c.l.b16 %v2485
        %v2518 = vunpack.c.l.b16 %v2486
        %v2519 = vunpack.c.l.b16 %v2487
        %v2520 = vunpack.c.l.b16 %v2488
        %v2521 = vunpack.c.l.b16 %v2489
        %v2522 = vunpack.c.l.b16 %v2490
        %v2523 = vunpack.c.l.b16 %v2491
        %v2524 = vunpack.c.l.b16 %v2492
        %v2525 = vunpack.c.l.b16 %v2493
        %v2526 = vpack.c.b16 %v2511, %v2510
        %v2527 = vpack.c.b16 %v2513, %v2512
        %v2528 = vpack.c.b16 %v2515, %v2514
        %v2529 = vpack.c.b16 %v2517, %v2516
        %v2530 = vpack.c.b16 %v2519, %v2518
        %v2531 = vpack.c.b16 %v2521, %v2520
        %v2532 = vpack.c.b16 %v2523, %v2522
        %v2533 = vpack.c.b16 %v2525, %v2524
        %2542 = vmatprep.subr.bf16.mxu0 0
        %2543 = vmatpush1.bf16.msra.mxu0 %v2533
        %2544 = vmatprep.subr.bf16.mxu0 0
        %2545 = vmatpush1.bf16.msra.mxu0 %v2532
        %2546 = vmatprep.subr.bf16.mxu0 0
        %2547 = vmatpush1.bf16.msra.mxu0 %v2531
        %2548 = vmatprep.subr.bf16.mxu0 0
        %2549 = vmatpush1.bf16.msra.mxu0 %v2530
        %2550 = vmatprep.subr.bf16.mxu0 0
        %2551 = vmatpush1.bf16.msra.mxu0 %v2529
        %2552 = vmatprep.subr.bf16.mxu0 0
        %2553 = vmatpush1.bf16.msra.mxu0 %v2528
        %2554 = vmatprep.subr.bf16.mxu0 0
        %2555 = vmatpush1.bf16.msra.mxu0 %v2527
        %2556 = vmatprep.subr.bf16.mxu0 0
        %2557 = vmatpush1.bf16.msra.mxu0 %v2526
        %2558 = vmatprep.subr.bf16.mxu0 0
        %2559 = vmatpush2.bf16.msra.mxu0 0
        %2560 = vmatprep.subr.bf16.mxu0 0
        %2561 = vmatpush2.bf16.msra.mxu0 0
        %2562 = vmatprep.subr.bf16.mxu0 0
        %2563 = vmatpush2.bf16.msra.mxu0 0
        %2564 = vmatprep.subr.bf16.mxu0 0
        %2565 = vmatpush2.bf16.msra.mxu0 0
        %2566 = vmatprep.subr.bf16.mxu0 0
        %2567 = vmatpush2.bf16.msra.mxu0 0
        %2568 = vmatprep.subr.bf16.mxu0 0
        %2569 = vmatpush2.bf16.msra.mxu0 0
        %2570 = vmatprep.subr.bf16.mxu0 0
        %2571 = vmatpush2.bf16.msra.mxu0 0
        %2572 = vmatprep.subr.bf16.mxu0 0
        %2573 = vmatpush2.bf16.msra.mxu0 0
        %2574 = vmatprep.mubr.bf16.mxu0 0
        %2575 = vmatmul.mubr.bf16.gmra.mxu0 %v2475
        %v2576 = vpop.f32.mrf.mxu0
        %v2577 = vadd.f32 0.0, %v2576
        %v2578 = vpop.f32.mrf.mxu0
        %v2579 = vpop.f32.mrf.mxu0
        %v2580 = vadd.f32 0.0, %v2579
        %v2581 = vpop.f32.mrf.mxu0
        %2582 = vmatprep.mubr.bf16.mxu0 0
        %2583 = vmatmul.mubr.bf16.gmra.mxu0 %v2476
        %v2584 = vpop.f32.mrf.mxu0
        %v2585 = vadd.f32 0.0, %v2584
        %v2586 = vpop.f32.mrf.mxu0
        %v2587 = vpop.f32.mrf.mxu0
        %v2588 = vadd.f32 0.0, %v2587
        %v2589 = vpop.f32.mrf.mxu0
        %2590 = vdwg.mxu0
        %v2591 = vadd.f32 %v2425, %v2577
        %v2592 = vadd.f32 %v2428, %v2580
        %v2593 = vadd.f32 %v2433, %v2585
        %v2594 = vadd.f32 %v2436, %v2588
        %v2595 = vld [vmem:[%s2005] sm:$0xff]
        %v2596 = vld [vmem:[%s2005 + $0x8] sm:$0xff]
        %v2597 = vld [vmem:[%s2005 + $0x10] sm:$0xff]
        %v2598 = vld [vmem:[%s2005 + $0x18] sm:$0xff]
        %v2599 = vrcp.pop %v2595
        %v2600 = vrcp.pop %v2596
        %v2601 = vrcp.pop %v2597
        %v2602 = vrcp.pop %v2598
        %v2603 = vld [vmem:[%s2034] sm:$0xff]
        %v2604 = vld [vmem:[%s2034 + $0x8] sm:$0xff]
        %v2605 = vld [vmem:[%s2034 + $0x10] sm:$0xff]
        %v2606 = vld [vmem:[%s2034 + $0x18] sm:$0xff]
        %2608 = vset.pattern.permute.xlu0 0
        %2609 = vperm.xlu0 %2608, %v2599
        %v2610 = vpop.permute.xlu0 %2609
        %2613 = vset.pattern.permute.xlu0 0
        %2614 = vperm.xlu0 %2613, %v2600
        %v2615 = vpop.permute.xlu0 %2614
        %2618 = vset.pattern.permute.xlu0 0
        %2619 = vperm.xlu0 %2618, %v2601
        %v2620 = vpop.permute.xlu0 %2619
        %2623 = vset.pattern.permute.xlu0 0
        %2624 = vperm.xlu0 %2623, %v2602
        %v2625 = vpop.permute.xlu0 %2624
        %v2627 = vmul.f32 %v2603, %v2610
        %v2628 = vmul.f32 %v2604, %v2615
        %v2629 = vmul.f32 %v2605, %v2620
        %v2630 = vmul.f32 %v2606, %v2625
        %v2631 = vpack.c.bf16 %v2628, %v2627
        %v2632 = vpack.c.bf16 %v2630, %v2629
        %s2633 = scalar_lea.vmem %s4, 192
        %v2634 = vld [vmem:[%s2633] sm:$0xf]
        %v2635 = vld [vmem:[%s2633 + $0x4] sm:$0xf]
        %v2636 = vld [vmem:[%s2633 + $0x8] sm:$0xf]
        %v2637 = vld [vmem:[%s2633 + $0xc] sm:$0xf]
        %v2638 = vld [vmem:[%s2633 + $0x10] sm:$0xf]
        %v2639 = vld [vmem:[%s2633 + $0x14] sm:$0xf]
        %v2640 = vld [vmem:[%s2633 + $0x18] sm:$0xf]
        %v2641 = vld [vmem:[%s2633 + $0x1c] sm:$0xf]
        %v2642 = vld [vmem:[%s2633 + $0x20] sm:$0xf]
        %v2643 = vld [vmem:[%s2633 + $0x24] sm:$0xf]
        %v2644 = vld [vmem:[%s2633 + $0x28] sm:$0xf]
        %v2645 = vld [vmem:[%s2633 + $0x2c] sm:$0xf]
        %v2646 = vld [vmem:[%s2633 + $0x30] sm:$0xf]
        %v2647 = vld [vmem:[%s2633 + $0x34] sm:$0xf]
        %v2648 = vld [vmem:[%s2633 + $0x38] sm:$0xf]
        %v2649 = vld [vmem:[%s2633 + $0x3c] sm:$0xf]
        %v2666 = vunpack.c.l.b16 %v2634
        %v2667 = vunpack.c.l.b16 %v2635
        %v2668 = vunpack.c.l.b16 %v2636
        %v2669 = vunpack.c.l.b16 %v2637
        %v2670 = vunpack.c.l.b16 %v2638
        %v2671 = vunpack.c.l.b16 %v2639
        %v2672 = vunpack.c.l.b16 %v2640
        %v2673 = vunpack.c.l.b16 %v2641
        %v2674 = vunpack.c.l.b16 %v2642
        %v2675 = vunpack.c.l.b16 %v2643
        %v2676 = vunpack.c.l.b16 %v2644
        %v2677 = vunpack.c.l.b16 %v2645
        %v2678 = vunpack.c.l.b16 %v2646
        %v2679 = vunpack.c.l.b16 %v2647
        %v2680 = vunpack.c.l.b16 %v2648
        %v2681 = vunpack.c.l.b16 %v2649
        %v2682 = vpack.c.b16 %v2667, %v2666
        %v2683 = vpack.c.b16 %v2669, %v2668
        %v2684 = vpack.c.b16 %v2671, %v2670
        %v2685 = vpack.c.b16 %v2673, %v2672
        %v2686 = vpack.c.b16 %v2675, %v2674
        %v2687 = vpack.c.b16 %v2677, %v2676
        %v2688 = vpack.c.b16 %v2679, %v2678
        %v2689 = vpack.c.b16 %v2681, %v2680
        %2698 = vmatprep.subr.bf16.mxu0 0
        %2699 = vmatpush1.bf16.msra.mxu0 %v2689
        %2700 = vmatprep.subr.bf16.mxu0 0
        %2701 = vmatpush1.bf16.msra.mxu0 %v2688
        %2702 = vmatprep.subr.bf16.mxu0 0
        %2703 = vmatpush1.bf16.msra.mxu0 %v2687
        %2704 = vmatprep.subr.bf16.mxu0 0
        %2705 = vmatpush1.bf16.msra.mxu0 %v2686
        %2706 = vmatprep.subr.bf16.mxu0 0
        %2707 = vmatpush1.bf16.msra.mxu0 %v2685
        %2708 = vmatprep.subr.bf16.mxu0 0
        %2709 = vmatpush1.bf16.msra.mxu0 %v2684
        %2710 = vmatprep.subr.bf16.mxu0 0
        %2711 = vmatpush1.bf16.msra.mxu0 %v2683
        %2712 = vmatprep.subr.bf16.mxu0 0
        %2713 = vmatpush1.bf16.msra.mxu0 %v2682
        %2714 = vmatprep.subr.bf16.mxu0 0
        %2715 = vmatpush2.bf16.msra.mxu0 0
        %2716 = vmatprep.subr.bf16.mxu0 0
        %2717 = vmatpush2.bf16.msra.mxu0 0
        %2718 = vmatprep.subr.bf16.mxu0 0
        %2719 = vmatpush2.bf16.msra.mxu0 0
        %2720 = vmatprep.subr.bf16.mxu0 0
        %2721 = vmatpush2.bf16.msra.mxu0 0
        %2722 = vmatprep.subr.bf16.mxu0 0
        %2723 = vmatpush2.bf16.msra.mxu0 0
        %2724 = vmatprep.subr.bf16.mxu0 0
        %2725 = vmatpush2.bf16.msra.mxu0 0
        %2726 = vmatprep.subr.bf16.mxu0 0
        %2727 = vmatpush2.bf16.msra.mxu0 0
        %2728 = vmatprep.subr.bf16.mxu0 0
        %2729 = vmatpush2.bf16.msra.mxu0 0
        %2730 = vmatprep.mubr.bf16.mxu0 0
        %2731 = vmatmul.mubr.bf16.gmra.mxu0 %v2631
        %v2732 = vpop.f32.mrf.mxu0
        %v2733 = vadd.f32 0.0, %v2732
        %v2734 = vpop.f32.mrf.mxu0
        %v2735 = vpop.f32.mrf.mxu0
        %v2736 = vadd.f32 0.0, %v2735
        %v2737 = vpop.f32.mrf.mxu0
        %2738 = vmatprep.mubr.bf16.mxu0 0
        %2739 = vmatmul.mubr.bf16.gmra.mxu0 %v2632
        %v2740 = vpop.f32.mrf.mxu0
        %v2741 = vadd.f32 0.0, %v2740
        %v2742 = vpop.f32.mrf.mxu0
        %v2743 = vpop.f32.mrf.mxu0
        %v2744 = vadd.f32 0.0, %v2743
        %v2745 = vpop.f32.mrf.mxu0
        %2746 = vdwg.mxu0
        %v2747 = vadd.f32 %v2591, %v2733
        %v2748 = vadd.f32 %v2592, %v2736
        %v2749 = vadd.f32 %v2593, %v2741
        %v2750 = vadd.f32 %v2594, %v2744
        %v2751 = vld [vmem:[%s5] sm:$0x1]
        %v2753 = vlaneseq
        %v2754 = vshrl.u32 %v2753, 7
        %v2755 = vsub.s32 0, %v2754
        %v2756 = vrot.slane %v2751, %v2755
        %v2758 = vadd.f32 %v2747, %v2756
        %v2759 = vadd.f32 %v2748, %v2756
        %v2760 = vadd.f32 %v2749, %v2756
        %v2761 = vadd.f32 %v2750, %v2756
        %2762 = vst.msk [vmem:[%s332] sm:$0xff] %vm793, %v2758
        %2763 = vst.msk [vmem:[%s332 + $0x8] sm:$0xff] %vm793, %v2759
        %2764 = vst.msk [vmem:[%s332 + $0x10] sm:$0xff] %vm793, %v2760
        %2765 = vst.msk [vmem:[%s332 + $0x18] sm:$0xff] %vm793, %v2761
      $region52: #{tpu_custom_call.1} parent=43 // pred_fallthru
        _
      %s2766 = smul.u32 4, %s23
      %p2767 = scmp.lt.s32.totalorder %s22, 1
      %s2768 = scalar_select %p2767, %s22, 1
      %p2769 = scmp.lt.s32.totalorder %s2766, 7
      %s2770 = scalar_select %p2769, %s2766, 7
      %s2771 = smul.addr %s2768, 8
      %s2772 = sadd.s32 %s2770, %s2771
      %s2773 = smul.addr %s2772, 8
      %s2774 = scalar_lea.vmem %s6, %s2773
      // Predicated region
      $region53: #{tpu_custom_call.1} parent=43 // pred_check
        %p2775 = pneg %p196
      $region54: #{tpu_custom_call.1} parent=43 // pred_check_branch
        %2777 = sbr.rel (%p2775) target = $region56
      $region55: #{tpu_custom_call.1} parent=43 // pred_region
        %s2778 = smul.u32 4, %s23
      $region56: #{tpu_custom_call.1} parent=43 // pred_fallthru
        _
    $region44: #{tpu_custom_call.1} parent=5 // pred_fallthru
      _
    %p2779 = scmp.le.s32.totalorder 2, %s12
    // Predicated region
    $region57: #{tpu_custom_call.1} parent=5 // pred_check
      %p2780 = pneg %p2779
    $region58: #{tpu_custom_call.1} parent=5 // pred_check_branch
      %2782 = sbr.rel (%p2780) target = $region60
    $region59: #{tpu_custom_call.1} parent=5 // pred_region
      %s2783 = ssub.s32 %s12, 2
      // Predicated region
      $region61: #{tpu_custom_call.1} parent=59 // pred_check
        %p2784 = pneg %p202
      $region62: #{tpu_custom_call.1} parent=59 // pred_check_branch
        %2786 = sbr.rel (%p2784) target = $region64
      $region63: #{tpu_custom_call.1} parent=59 // pred_region
        %s2787 = smul.u32 4, %s26
        %p2788 = scmp.lt.s32.totalorder %s25, 1
        %s2789 = scalar_select %p2788, %s25, 1
        %p2790 = scmp.lt.s32.totalorder %s2787, 7
        %s2791 = scalar_select %p2790, %s2787, 7
        %s2792 = smul.addr %s2789, 8
        %s2793 = sadd.s32 %s2791, %s2792
        %s2794 = smul.addr %s2793, 8
        %s2795 = scalar_lea.vmem %s6, %s2794
      $region64: #{tpu_custom_call.1} parent=59 // pred_fallthru
        _
    $region60: #{tpu_custom_call.1} parent=5 // pred_fallthru
      _
  $region6: #{tpu_custom_call.1} parent=0 // loop_footer
    %s16 = sadd.s32 1, %s12
  $region7: #{tpu_custom_call.1} parent=0 // loop_footer_branch
    %11 = sbr.rel target = $region3
  $region8: #{tpu_custom_call.1} parent=0 // loop_exit
    _

</llo_original>
